<compile_context>
chip_gen: v6e
topology: v6e:2x2x1
jax: 0.10.0
libtpu: 0.0.40
codegen_flags: <defaults>
</compile_context>

<pallas_src>
import jax
import jax.numpy as jnp
from jax.experimental import pallas as pl
from jax.experimental.pallas import tpu as pltpu


# ----------------------------------------------------------------------------
# Kernel
# ----------------------------------------------------------------------------
def _make_gru_kernel(t_total, unroll, guard_tail):
    """Serial GRU recurrence over one (batch-block, time-chunk) tile.

    g_ref  : (TC, Bb, 3*Hp) precomputed input gates
             [x W_ir + b_ir + b_hr | x W_iz + b_iz + b_hz | x W_in + b_in]
    wh_ref : (Hp, 3*Hp) concatenated [W_hr | W_hz | W_hn] (f32 or bf16)
    bhn_ref: (1, Hp) b_hn (stays inside the recurrence: it is gated by r)
    h_ref  : (Bb, Hp) output block -- resident across the time axis, carries h.
    """

    def kernel(g_ref, wh_ref, bhn_ref, h_ref):
        t_idx = pl.program_id(1)

        @pl.when(t_idx == 0)
        def _init():
            h_ref[...] = jnp.zeros_like(h_ref)

        TC, Bb, _ = g_ref.shape
        Hp = wh_ref.shape[0]

        # Hoisted loop invariants (weight tile + bias broadcast).
        wh = wh_ref[...]                                   # (Hp, 3Hp)
        bhn = jnp.broadcast_to(bhn_ref[...], (Bb, Hp))     # (Bb, Hp)
        t_base = t_idx * TC

        def step(t, h):
            g = g_ref[t]                                                  # (Bb, 3Hp)
            hh = jnp.dot(h.astype(wh.dtype), wh,
                         preferred_element_type=jnp.float32)              # (Bb, 3Hp)
            r = jax.nn.sigmoid(g[:, :Hp] + hh[:, :Hp])
            z = jax.nn.sigmoid(g[:, Hp:2 * Hp] + hh[:, Hp:2 * Hp])
            n = jnp.tanh(g[:, 2 * Hp:] + r * (hh[:, 2 * Hp:] + bhn))
            h_new = n + z * (h - n)            # == (1-z)*n + z*h, one fewer VPU op
            if guard_tail:
                # Ragged last time chunk: padded steps must not update h.
                return jnp.where(t_base + t < t_total, h_new, h)
            return h_new

        h_ref[...] = jax.lax.fori_loop(0, TC, step, h_ref[...], unroll=unroll)

    return kernel


# ----------------------------------------------------------------------------
# Tiling policy
# ----------------------------------------------------------------------------
def _round_up(n, m):
    return ((n + m - 1) // m) * m


def _num_tensorcores():
    """Best-effort megacore detection (v7x has 2 TensorCores per chip)."""
    try:
        kind = jax.devices()[0].device_kind.lower()
    except Exception:
        return 1
    return 2 if ("v7" in kind or "tpu7" in kind) else 1


def _choose_tiling(Bp, T, Hp, recurrent_dtype):
    try:
        vmem_phys = int(pltpu.get_tpu_info().vmem_capacity_bytes)
    except Exception:
        vmem_phys = 64 * 1024 * 1024
    # Working-set target: half of physical VMEM, capped (leaves headroom for
    # compiler scratch, semaphores, etc. on every generation).
    budget = min(vmem_phys // 2, 48 * 1024 * 1024)

    w_bytes = Hp * 3 * Hp * jnp.dtype(recurrent_dtype).itemsize
    fixed = 2 * w_bytes + 2 * Hp * 4          # weights (conservative x2) + b_hn

    def per_t(bb):                             # double-buffered gate stream
        return 2 * bb * 3 * Hp * 4

    def out_b(bb):                             # resident output block
        return 2 * bb * Hp * 4

    sub = Bp // 8
    tc_min = min(T, 8)

    # Maximize Bb: smallest nb (fewest serial passes over T) that fits VMEM.
    nb, Bb = sub, 8
    for nb_cand in sorted(d for d in range(1, sub + 1) if sub % d == 0):
        bb = Bp // nb_cand
        if fixed + out_b(bb) + tc_min * per_t(bb) <= budget:
            nb, Bb = nb_cand, bb
            break

    # v7x: prefer nb=2 over nb=1 once the batch is big enough so the "parallel"
    # batch axis actually shards across the two TensorCores.
    if _num_tensorcores() >= 2 and nb == 1 and sub >= 16 and sub % 2 == 0:
        nb, Bb = 2, Bp // 2

    # Time chunk: fill the remaining budget; cdiv grid handles awkward T
    # (no degenerate TC=1 for prime sequence lengths).
    remaining = budget - fixed - out_b(Bb)
    tc_cap = max(1, remaining // per_t(Bb))
    TC = int(max(1, min(T, tc_cap, 256)))
    nt = int(pl.cdiv(T, TC))
    T_pad = nt * TC

    # Unroll: serial dependence means unrolling only trims loop overhead; keep
    # it small on large tiles to avoid vreg spills.
    unroll = 4 if Bb * Hp >= 128 * 512 else 8
    unroll = max(1, min(unroll, TC))

    need = fixed + out_b(Bb) + TC * per_t(Bb) + (4 << 20)
    vmem_limit = int(min(vmem_phys, max(need, 32 * 1024 * 1024)))
    return nb, Bb, TC, nt, T_pad, unroll, vmem_limit


# ----------------------------------------------------------------------------
# Wrapper
# ----------------------------------------------------------------------------
def gru_pk_forward(x, params, *, recurrent_dtype=jnp.float32):
    """x: (batch, seq_len, input_dim) float32 (PyTorch batch_first convention)."""
    B, T, D = x.shape
    H = params["w_hr"].shape[0]

    f32 = jnp.float32
    Hp = _round_up(H, 128)     # lane-dense hidden dim
    Bp = _round_up(B, 8)       # sublane-dense batch

    def pad_cols(w):           # (in, H) -> (in, Hp)
        return jnp.pad(w.astype(f32), ((0, 0), (0, Hp - H)))

    def pad_hh(w):             # (H, H) -> (Hp, Hp)
        return jnp.pad(w.astype(f32), ((0, Hp - H), (0, Hp - H)))

    def pad_b(b):              # (1, H) -> (1, Hp)
        return jnp.pad(b.astype(f32), ((0, 0), (0, Hp - H)))

    # Fused / padded weights (gate order r, z, n -- matches torch.nn.GRU).
    w_i_cat = jnp.concatenate(
        [pad_cols(params["w_ir"]), pad_cols(params["w_iz"]), pad_cols(params["w_in"])],
        axis=1)                                                   # (D, 3Hp)
    w_h_cat = jnp.concatenate(
        [pad_hh(params["w_hr"]), pad_hh(params["w_hz"]), pad_hh(params["w_hn"])],
        axis=1).astype(recurrent_dtype)                           # (Hp, 3Hp)
    b_i_cat = jnp.concatenate(
        [pad_b(params["b_ir"] + params["b_hr"]),
         pad_b(params["b_iz"] + params["b_hz"]),
         pad_b(params["b_in"])],
        axis=1)                                                   # (1, 3Hp)
    b_hn = pad_b(params["b_hn"])                                  # (1, Hp)

    # ---- tiling policy (VMEM-budget driven, generation-aware) ----
    nb, Bb, TC, nt, T_pad, unroll, vmem_limit = _choose_tiling(
        Bp, T, Hp, recurrent_dtype)

    # Hoisted input projection: one large XLA GEMM for the whole sequence,
    # materialized batch-block-major so every streamed gate chunk is contiguous
    # in HBM. (Add precision=jax.lax.Precision.HIGHEST here and in the
    # reference if bit-tight PyTorch parity is required.)
    x_f = jnp.pad(x.astype(f32), ((0, Bp - B), (0, 0), (0, 0)))   # (Bp, T, D)
    xb = x_f.reshape(nb, Bb, T, D).transpose(0, 2, 1, 3)          # (nb, T, Bb, D)
    gates = jnp.einsum("ntbd,dg->ntbg", xb, w_i_cat) + b_i_cat    # (nb, T, Bb, 3Hp)
    if T_pad != T:
        # Time padding is safe: padded steps are masked out inside the kernel.
        gates = jnp.pad(gates, ((0, 0), (0, T_pad - T), (0, 0), (0, 0)))
    gates = gates.reshape(nb * T_pad, Bb, 3 * Hp)                 # contiguous chunks

    kernel = _make_gru_kernel(T, unroll, guard_tail=(T_pad != T))

    def run(single_buffer_weights):
        wkw = dict(pipeline_mode=pl.Buffered(1)) if single_buffer_weights else {}
        return pl.pallas_call(
            kernel,
            out_shape=jax.ShapeDtypeStruct((Bp, Hp), jnp.float32),
            grid=(nb, nt),
            in_specs=[
                # streamed, contiguous gate chunks
                pl.BlockSpec((TC, Bb, 3 * Hp), lambda b, t: (b * nt + t, 0, 0)),
                # loop-invariant fused W_h (single-buffered if supported)
                pl.BlockSpec((Hp, 3 * Hp), lambda b, t: (0, 0), **wkw),
                # loop-invariant b_hn
                pl.BlockSpec((1, Hp), lambda b, t: (0, 0), **wkw),
            ],
            # Block index constant across the time axis -> resident accumulator.
            out_specs=pl.BlockSpec((Bb, Hp), lambda b, t: (b, 0)),
            compiler_params=pltpu.CompilerParams(
                dimension_semantics=("parallel", "arbitrary"),
                vmem_limit_bytes=vmem_limit),
        )(gates, w_h_cat, b_hn)

    try:
        h_last = run(True)
    except Exception:
        # Fallback if pipeline_mode=pl.Buffered(1) is unsupported on this jax.
        h_last = run(False)

    # Lane-dense kernel output; tiny (H, O) fc stays in XLA.
    return h_last[:B, :H] @ params["w_fc"].astype(f32) + params["b_fc"].astype(f32)


# ----------------------------------------------------------------------------
# Params / reference
# ----------------------------------------------------------------------------
def init_params(key, input_dim, hidden_dim, output_dim):
    """Deterministic init mimicking PyTorch's uniform(-1/sqrt(H), 1/sqrt(H))."""
    k = 1.0 / jnp.sqrt(jnp.float32(hidden_dim))
    names_shapes = [
        ("w_ir", (input_dim, hidden_dim)), ("w_iz", (input_dim, hidden_dim)),
        ("w_in", (input_dim, hidden_dim)),
        ("w_hr", (hidden_dim, hidden_dim)), ("w_hz", (hidden_dim, hidden_dim)),
        ("w_hn", (hidden_dim, hidden_dim)),
        ("b_ir", (1, hidden_dim)), ("b_iz", (1, hidden_dim)), ("b_in", (1, hidden_dim)),
        ("b_hr", (1, hidden_dim)), ("b_hz", (1, hidden_dim)), ("b_hn", (1, hidden_dim)),
        ("w_fc", (hidden_dim, output_dim)), ("b_fc", (1, output_dim)),
    ]
    keys = jax.random.split(key, len(names_shapes))
    return {name: jax.random.uniform(kk, shape, jnp.float32, -k, k)
            for kk, (name, shape) in zip(keys, names_shapes)}


def gru_pk_reference(x, params):
    """Pure-JAX reference of the same forward pass (for correctness check)."""
    B, T, D = x.shape
    H = params["w_hr"].shape[0]
    h = jnp.zeros((B, H), jnp.float32)
    for t in range(T):
        xt = x[:, t, :]
        r = jax.nn.sigmoid(xt @ params["w_ir"] + params["b_ir"]
                           + h @ params["w_hr"] + params["b_hr"])
        z = jax.nn.sigmoid(xt @ params["w_iz"] + params["b_iz"]
                           + h @ params["w_hz"] + params["b_hz"])
        n = jnp.tanh(xt @ params["w_in"] + params["b_in"]
                     + r * (h @ params["w_hn"] + params["b_hn"]))
        h = (1.0 - z) * n + z * h
    return h @ params["w_fc"] + params["b_fc"]


if __name__ == "__main__":
    B, T, D, H, O = 2, 8, 3, 32, 1   # batch, seq_len, input_dim, hidden_dim, output_dim

    key = jax.random.PRNGKey(0)
    kx, kp = jax.random.split(key)
    x = jax.random.normal(kx, (B, T, D), jnp.float32)
    params = init_params(kp, D, H, O)

    ref = gru_pk_reference(x, params)

    # f32 recurrent weights: tight parity with the f32 reference.
    pred = gru_pk_forward(x, params)
    pred = jax.block_until_ready(pred)
    assert pred.shape == (B, O)
    assert jnp.allclose(pred, ref, atol=1e-5, rtol=1e-5), "mismatch vs pure-JAX reference"

    # bf16 recurrent weights (MXU-native fast path): looser tolerance.
    pred_bf16 = gru_pk_forward(x, params, recurrent_dtype=jnp.bfloat16)
    pred_bf16 = jax.block_until_ready(pred_bf16)
    assert pred_bf16.shape == (B, O)
    assert jnp.allclose(pred_bf16, ref, atol=5e-2, rtol=5e-2), "bf16 path mismatch"

    print("KERNEL_OK")
</pallas_src>

<mosaic_0001>
module attributes {stable_mosaic.version = 11 : i64} {
  func.func @kernel(%arg0: i32, %arg1: i32, %arg2: memref<8x8x384xf32, #tpu.memory_space<vmem>>, %arg3: memref<128x384xf32, #tpu.memory_space<vmem>>, %arg4: memref<1x128xf32, #tpu.memory_space<vmem>>, %arg5: memref<8x128xf32, #tpu.memory_space<vmem>>) attributes {dimension_semantics = [#tpu.dimension_semantics<parallel>, #tpu.dimension_semantics<arbitrary>], iteration_bounds = array<i64: 1, 1>, scalar_prefetch = 0 : i64, scratch_operands = 0 : i64, tpu.core_type = #tpu.core_type<tc>, window_params = [{transform_indices = @transform_0, window_bounds = array<i64: 8, 8, 384>}, {pipeline_mode = #tpu.pipeline_mode<synchronous>, transform_indices = @transform_1, window_bounds = array<i64: 128, 384>}, {pipeline_mode = #tpu.pipeline_mode<synchronous>, transform_indices = @transform_2, window_bounds = array<i64: 1, 128>}, {transform_indices = @transform_3, window_bounds = array<i64: 8, 128>}]} {
    %c0_i32 = arith.constant 0 : i32
    %0 = arith.cmpi eq, %arg1, %c0_i32 : i32
    %1 = arith.extui %0 : i1 to i32
    %c0_i32_0 = arith.constant 0 : i32
    %2 = arith.cmpi ne, %1, %c0_i32_0 : i32
    scf.if %2 {
      %cst_48 = arith.constant 0.000000e+00 : f32
      %241 = vector.broadcast %cst_48 : f32 to vector<8x128xf32>
      %c0_49 = arith.constant 0 : index
      %c0_50 = arith.constant 0 : index
      %242 = vector.load %arg5[%c0_49, %c0_50] : memref<8x128xf32, #tpu.memory_space<vmem>>, vector<8x128xf32>
      tpu.vector_store %arg5[%c0_49, %c0_50], %241 {strides = array<i32>} : memref<8x128xf32, #tpu.memory_space<vmem>>, vector<8x128xf32>,
    } else {
    }
    %c0 = arith.constant 0 : index
    %c0_1 = arith.constant 0 : index
    %3 = vector.load %arg3[%c0, %c0_1] : memref<128x384xf32, #tpu.memory_space<vmem>>, vector<128x384xf32>
    %c0_2 = arith.constant 0 : index
    %c0_3 = arith.constant 0 : index
    %4 = vector.load %arg4[%c0_2, %c0_3] : memref<1x128xf32, #tpu.memory_space<vmem>>, vector<1x128xf32>
    %5 = vector.shape_cast %4 : vector<1x128xf32> to vector<1x128xf32>
    %6 = vector.broadcast %5 : vector<1x128xf32> to vector<8x128xf32>
    %c0_4 = arith.constant 0 : index
    %c0_5 = arith.constant 0 : index
    %7 = vector.load %arg5[%c0_4, %c0_5] : memref<8x128xf32, #tpu.memory_space<vmem>>, vector<8x128xf32>
    %c0_i32_6 = arith.constant 0 : i32
    %8 = arith.index_cast %c0_i32_6 : i32 to index
    %c0_7 = arith.constant 0 : index
    %c0_8 = arith.constant 0 : index
    %9 = vector.load %arg2[%8, %c0_7, %c0_8] : memref<8x8x384xf32, #tpu.memory_space<vmem>>, vector<1x8x384xf32>
    %10 = vector.shape_cast %9 : vector<1x8x384xf32> to vector<8x384xf32>
    %cst = arith.constant dense<0.000000e+00> : vector<8x384xf32>
    %11 = tpu.matmul %7, %3, %cst {dimension_numbers = #tpu.dot_dimension_numbers<[1], [0], [0], [1], [0, 0, 1, 1], [], []>} : vector<8x128xf32>, vector<128x384xf32>, vector<8x384xf32> -> vector<8x384xf32>
    %12 = vector.extract_strided_slice %10 {offsets = [0, 0], sizes = [8, 128], strides = [1, 1]} : vector<8x384xf32> to vector<8x128xf32>
    %13 = vector.extract_strided_slice %11 {offsets = [0, 0], sizes = [8, 128], strides = [1, 1]} : vector<8x384xf32> to vector<8x128xf32>
    %14 = arith.addf %12, %13 : vector<8x128xf32>
    %15 = arith.negf %14 : vector<8x128xf32>
    %16 = math.exp %15 : vector<8x128xf32>
    %cst_9 = arith.constant 1.000000e+00 : f32
    %17 = vector.broadcast %cst_9 : f32 to vector<8x128xf32>
    %18 = arith.addf %17, %16 : vector<8x128xf32>
    %19 = arith.divf %17, %18 : vector<8x128xf32>
    %20 = vector.extract_strided_slice %10 {offsets = [0, 128], sizes = [8, 128], strides = [1, 1]} : vector<8x384xf32> to vector<8x128xf32>
    %21 = vector.extract_strided_slice %11 {offsets = [0, 128], sizes = [8, 128], strides = [1, 1]} : vector<8x384xf32> to vector<8x128xf32>
    %22 = arith.addf %20, %21 : vector<8x128xf32>
    %23 = arith.negf %22 : vector<8x128xf32>
    %24 = math.exp %23 : vector<8x128xf32>
    %cst_10 = arith.constant 1.000000e+00 : f32
    %25 = vector.broadcast %cst_10 : f32 to vector<8x128xf32>
    %26 = arith.addf %25, %24 : vector<8x128xf32>
    %27 = arith.divf %25, %26 : vector<8x128xf32>
    %28 = vector.extract_strided_slice %10 {offsets = [0, 256], sizes = [8, 128], strides = [1, 1]} : vector<8x384xf32> to vector<8x128xf32>
    %29 = vector.extract_strided_slice %11 {offsets = [0, 256], sizes = [8, 128], strides = [1, 1]} : vector<8x384xf32> to vector<8x128xf32>
    %30 = arith.addf %29, %6 : vector<8x128xf32>
    %31 = arith.mulf %19, %30 : vector<8x128xf32>
    %32 = arith.addf %28, %31 : vector<8x128xf32>
    %33 = math.tanh %32 : vector<8x128xf32>
    %34 = arith.subf %7, %33 : vector<8x128xf32>
    %35 = arith.mulf %27, %34 : vector<8x128xf32>
    %36 = arith.addf %33, %35 : vector<8x128xf32>
    %c1_i32 = arith.constant 1 : i32
    %37 = arith.index_cast %c1_i32 : i32 to index
    %c0_11 = arith.constant 0 : index
    %c0_12 = arith.constant 0 : index
    %38 = vector.load %arg2[%37, %c0_11, %c0_12] : memref<8x8x384xf32, #tpu.memory_space<vmem>>, vector<1x8x384xf32>
    %39 = vector.shape_cast %38 : vector<1x8x384xf32> to vector<8x384xf32>
    %cst_13 = arith.constant dense<0.000000e+00> : vector<8x384xf32>
    %40 = tpu.matmul %36, %3, %cst_13 {dimension_numbers = #tpu.dot_dimension_numbers<[1], [0], [0], [1], [0, 0, 1, 1], [], []>} : vector<8x128xf32>, vector<128x384xf32>, vector<8x384xf32> -> vector<8x384xf32>
    %41 = vector.extract_strided_slice %39 {offsets = [0, 0], sizes = [8, 128], strides = [1, 1]} : vector<8x384xf32> to vector<8x128xf32>
    %42 = vector.extract_strided_slice %40 {offsets = [0, 0], sizes = [8, 128], strides = [1, 1]} : vector<8x384xf32> to vector<8x128xf32>
    %43 = arith.addf %41, %42 : vector<8x128xf32>
    %44 = arith.negf %43 : vector<8x128xf32>
    %45 = math.exp %44 : vector<8x128xf32>
    %cst_14 = arith.constant 1.000000e+00 : f32
    %46 = vector.broadcast %cst_14 : f32 to vector<8x128xf32>
    %47 = arith.addf %46, %45 : vector<8x128xf32>
    %48 = arith.divf %46, %47 : vector<8x128xf32>
    %49 = vector.extract_strided_slice %39 {offsets = [0, 128], sizes = [8, 128], strides = [1, 1]} : vector<8x384xf32> to vector<8x128xf32>
    %50 = vector.extract_strided_slice %40 {offsets = [0, 128], sizes = [8, 128], strides = [1, 1]} : vector<8x384xf32> to vector<8x128xf32>
    %51 = arith.addf %49, %50 : vector<8x128xf32>
    %52 = arith.negf %51 : vector<8x128xf32>
    %53 = math.exp %52 : vector<8x128xf32>
    %cst_15 = arith.constant 1.000000e+00 : f32
    %54 = vector.broadcast %cst_15 : f32 to vector<8x128xf32>
    %55 = arith.addf %54, %53 : vector<8x128xf32>
    %56 = arith.divf %54, %55 : vector<8x128xf32>
    %57 = vector.extract_strided_slice %39 {offsets = [0, 256], sizes = [8, 128], strides = [1, 1]} : vector<8x384xf32> to vector<8x128xf32>
    %58 = vector.extract_strided_slice %40 {offsets = [0, 256], sizes = [8, 128], strides = [1, 1]} : vector<8x384xf32> to vector<8x128xf32>
    %59 = arith.addf %58, %6 : vector<8x128xf32>
    %60 = arith.mulf %48, %59 : vector<8x128xf32>
    %61 = arith.addf %57, %60 : vector<8x128xf32>
    %62 = math.tanh %61 : vector<8x128xf32>
    %63 = arith.subf %36, %62 : vector<8x128xf32>
    %64 = arith.mulf %56, %63 : vector<8x128xf32>
    %65 = arith.addf %62, %64 : vector<8x128xf32>
    %c2_i32 = arith.constant 2 : i32
    %66 = arith.index_cast %c2_i32 : i32 to index
    %c0_16 = arith.constant 0 : index
    %c0_17 = arith.constant 0 : index
    %67 = vector.load %arg2[%66, %c0_16, %c0_17] : memref<8x8x384xf32, #tpu.memory_space<vmem>>, vector<1x8x384xf32>
    %68 = vector.shape_cast %67 : vector<1x8x384xf32> to vector<8x384xf32>
    %cst_18 = arith.constant dense<0.000000e+00> : vector<8x384xf32>
    %69 = tpu.matmul %65, %3, %cst_18 {dimension_numbers = #tpu.dot_dimension_numbers<[1], [0], [0], [1], [0, 0, 1, 1], [], []>} : vector<8x128xf32>, vector<128x384xf32>, vector<8x384xf32> -> vector<8x384xf32>
    %70 = vector.extract_strided_slice %68 {offsets = [0, 0], sizes = [8, 128], strides = [1, 1]} : vector<8x384xf32> to vector<8x128xf32>
    %71 = vector.extract_strided_slice %69 {offsets = [0, 0], sizes = [8, 128], strides = [1, 1]} : vector<8x384xf32> to vector<8x128xf32>
    %72 = arith.addf %70, %71 : vector<8x128xf32>
    %73 = arith.negf %72 : vector<8x128xf32>
    %74 = math.exp %73 : vector<8x128xf32>
    %cst_19 = arith.constant 1.000000e+00 : f32
    %75 = vector.broadcast %cst_19 : f32 to vector<8x128xf32>
    %76 = arith.addf %75, %74 : vector<8x128xf32>
    %77 = arith.divf %75, %76 : vector<8x128xf32>
    %78 = vector.extract_strided_slice %68 {offsets = [0, 128], sizes = [8, 128], strides = [1, 1]} : vector<8x384xf32> to vector<8x128xf32>
    %79 = vector.extract_strided_slice %69 {offsets = [0, 128], sizes = [8, 128], strides = [1, 1]} : vector<8x384xf32> to vector<8x128xf32>
    %80 = arith.addf %78, %79 : vector<8x128xf32>
    %81 = arith.negf %80 : vector<8x128xf32>
    %82 = math.exp %81 : vector<8x128xf32>
    %cst_20 = arith.constant 1.000000e+00 : f32
    %83 = vector.broadcast %cst_20 : f32 to vector<8x128xf32>
    %84 = arith.addf %83, %82 : vector<8x128xf32>
    %85 = arith.divf %83, %84 : vector<8x128xf32>
    %86 = vector.extract_strided_slice %68 {offsets = [0, 256], sizes = [8, 128], strides = [1, 1]} : vector<8x384xf32> to vector<8x128xf32>
    %87 = vector.extract_strided_slice %69 {offsets = [0, 256], sizes = [8, 128], strides = [1, 1]} : vector<8x384xf32> to vector<8x128xf32>
    %88 = arith.addf %87, %6 : vector<8x128xf32>
    %89 = arith.mulf %77, %88 : vector<8x128xf32>
    %90 = arith.addf %86, %89 : vector<8x128xf32>
    %91 = math.tanh %90 : vector<8x128xf32>
    %92 = arith.subf %65, %91 : vector<8x128xf32>
    %93 = arith.mulf %85, %92 : vector<8x128xf32>
    %94 = arith.addf %91, %93 : vector<8x128xf32>
    %c3_i32 = arith.constant 3 : i32
    %95 = arith.index_cast %c3_i32 : i32 to index
    %c0_21 = arith.constant 0 : index
    %c0_22 = arith.constant 0 : index
    %96 = vector.load %arg2[%95, %c0_21, %c0_22] : memref<8x8x384xf32, #tpu.memory_space<vmem>>, vector<1x8x384xf32>
    %97 = vector.shape_cast %96 : vector<1x8x384xf32> to vector<8x384xf32>
    %cst_23 = arith.constant dense<0.000000e+00> : vector<8x384xf32>
    %98 = tpu.matmul %94, %3, %cst_23 {dimension_numbers = #tpu.dot_dimension_numbers<[1], [0], [0], [1], [0, 0, 1, 1], [], []>} : vector<8x128xf32>, vector<128x384xf32>, vector<8x384xf32> -> vector<8x384xf32>
    %99 = vector.extract_strided_slice %97 {offsets = [0, 0], sizes = [8, 128], strides = [1, 1]} : vector<8x384xf32> to vector<8x128xf32>
    %100 = vector.extract_strided_slice %98 {offsets = [0, 0], sizes = [8, 128], strides = [1, 1]} : vector<8x384xf32> to vector<8x128xf32>
    %101 = arith.addf %99, %100 : vector<8x128xf32>
    %102 = arith.negf %101 : vector<8x128xf32>
    %103 = math.exp %102 : vector<8x128xf32>
    %cst_24 = arith.constant 1.000000e+00 : f32
    %104 = vector.broadcast %cst_24 : f32 to vector<8x128xf32>
    %105 = arith.addf %104, %103 : vector<8x128xf32>
    %106 = arith.divf %104, %105 : vector<8x128xf32>
    %107 = vector.extract_strided_slice %97 {offsets = [0, 128], sizes = [8, 128], strides = [1, 1]} : vector<8x384xf32> to vector<8x128xf32>
    %108 = vector.extract_strided_slice %98 {offsets = [0, 128], sizes = [8, 128], strides = [1, 1]} : vector<8x384xf32> to vector<8x128xf32>
    %109 = arith.addf %107, %108 : vector<8x128xf32>
    %110 = arith.negf %109 : vector<8x128xf32>
    %111 = math.exp %110 : vector<8x128xf32>
    %cst_25 = arith.constant 1.000000e+00 : f32
    %112 = vector.broadcast %cst_25 : f32 to vector<8x128xf32>
    %113 = arith.addf %112, %111 : vector<8x128xf32>
    %114 = arith.divf %112, %113 : vector<8x128xf32>
    %115 = vector.extract_strided_slice %97 {offsets = [0, 256], sizes = [8, 128], strides = [1, 1]} : vector<8x384xf32> to vector<8x128xf32>
    %116 = vector.extract_strided_slice %98 {offsets = [0, 256], sizes = [8, 128], strides = [1, 1]} : vector<8x384xf32> to vector<8x128xf32>
    %117 = arith.addf %116, %6 : vector<8x128xf32>
    %118 = arith.mulf %106, %117 : vector<8x128xf32>
    %119 = arith.addf %115, %118 : vector<8x128xf32>
    %120 = math.tanh %119 : vector<8x128xf32>
    %121 = arith.subf %94, %120 : vector<8x128xf32>
    %122 = arith.mulf %114, %121 : vector<8x128xf32>
    %123 = arith.addf %120, %122 : vector<8x128xf32>
    %c4_i32 = arith.constant 4 : i32
    %124 = arith.index_cast %c4_i32 : i32 to index
    %c0_26 = arith.constant 0 : index
    %c0_27 = arith.constant 0 : index
    %125 = vector.load %arg2[%124, %c0_26, %c0_27] : memref<8x8x384xf32, #tpu.memory_space<vmem>>, vector<1x8x384xf32>
    %126 = vector.shape_cast %125 : vector<1x8x384xf32> to vector<8x384xf32>
    %cst_28 = arith.constant dense<0.000000e+00> : vector<8x384xf32>
    %127 = tpu.matmul %123, %3, %cst_28 {dimension_numbers = #tpu.dot_dimension_numbers<[1], [0], [0], [1], [0, 0, 1, 1], [], []>} : vector<8x128xf32>, vector<128x384xf32>, vector<8x384xf32> -> vector<8x384xf32>
    %128 = vector.extract_strided_slice %126 {offsets = [0, 0], sizes = [8, 128], strides = [1, 1]} : vector<8x384xf32> to vector<8x128xf32>
    %129 = vector.extract_strided_slice %127 {offsets = [0, 0], sizes = [8, 128], strides = [1, 1]} : vector<8x384xf32> to vector<8x128xf32>
    %130 = arith.addf %128, %129 : vector<8x128xf32>
    %131 = arith.negf %130 : vector<8x128xf32>
    %132 = math.exp %131 : vector<8x128xf32>
    %cst_29 = arith.constant 1.000000e+00 : f32
    %133 = vector.broadcast %cst_29 : f32 to vector<8x128xf32>
    %134 = arith.addf %133, %132 : vector<8x128xf32>
    %135 = arith.divf %133, %134 : vector<8x128xf32>
    %136 = vector.extract_strided_slice %126 {offsets = [0, 128], sizes = [8, 128], strides = [1, 1]} : vector<8x384xf32> to vector<8x128xf32>
    %137 = vector.extract_strided_slice %127 {offsets = [0, 128], sizes = [8, 128], strides = [1, 1]} : vector<8x384xf32> to vector<8x128xf32>
    %138 = arith.addf %136, %137 : vector<8x128xf32>
    %139 = arith.negf %138 : vector<8x128xf32>
    %140 = math.exp %139 : vector<8x128xf32>
    %cst_30 = arith.constant 1.000000e+00 : f32
    %141 = vector.broadcast %cst_30 : f32 to vector<8x128xf32>
    %142 = arith.addf %141, %140 : vector<8x128xf32>
    %143 = arith.divf %141, %142 : vector<8x128xf32>
    %144 = vector.extract_strided_slice %126 {offsets = [0, 256], sizes = [8, 128], strides = [1, 1]} : vector<8x384xf32> to vector<8x128xf32>
    %145 = vector.extract_strided_slice %127 {offsets = [0, 256], sizes = [8, 128], strides = [1, 1]} : vector<8x384xf32> to vector<8x128xf32>
    %146 = arith.addf %145, %6 : vector<8x128xf32>
    %147 = arith.mulf %135, %146 : vector<8x128xf32>
    %148 = arith.addf %144, %147 : vector<8x128xf32>
    %149 = math.tanh %148 : vector<8x128xf32>
    %150 = arith.subf %123, %149 : vector<8x128xf32>
    %151 = arith.mulf %143, %150 : vector<8x128xf32>
    %152 = arith.addf %149, %151 : vector<8x128xf32>
    %c5_i32 = arith.constant 5 : i32
    %153 = arith.index_cast %c5_i32 : i32 to index
    %c0_31 = arith.constant 0 : index
    %c0_32 = arith.constant 0 : index
    %154 = vector.load %arg2[%153, %c0_31, %c0_32] : memref<8x8x384xf32, #tpu.memory_space<vmem>>, vector<1x8x384xf32>
    %155 = vector.shape_cast %154 : vector<1x8x384xf32> to vector<8x384xf32>
    %cst_33 = arith.constant dense<0.000000e+00> : vector<8x384xf32>
    %156 = tpu.matmul %152, %3, %cst_33 {dimension_numbers = #tpu.dot_dimension_numbers<[1], [0], [0], [1], [0, 0, 1, 1], [], []>} : vector<8x128xf32>, vector<128x384xf32>, vector<8x384xf32> -> vector<8x384xf32>
    %157 = vector.extract_strided_slice %155 {offsets = [0, 0], sizes = [8, 128], strides = [1, 1]} : vector<8x384xf32> to vector<8x128xf32>
    %158 = vector.extract_strided_slice %156 {offsets = [0, 0], sizes = [8, 128], strides = [1, 1]} : vector<8x384xf32> to vector<8x128xf32>
    %159 = arith.addf %157, %158 : vector<8x128xf32>
    %160 = arith.negf %159 : vector<8x128xf32>
    %161 = math.exp %160 : vector<8x128xf32>
    %cst_34 = arith.constant 1.000000e+00 : f32
    %162 = vector.broadcast %cst_34 : f32 to vector<8x128xf32>
    %163 = arith.addf %162, %161 : vector<8x128xf32>
    %164 = arith.divf %162, %163 : vector<8x128xf32>
    %165 = vector.extract_strided_slice %155 {offsets = [0, 128], sizes = [8, 128], strides = [1, 1]} : vector<8x384xf32> to vector<8x128xf32>
    %166 = vector.extract_strided_slice %156 {offsets = [0, 128], sizes = [8, 128], strides = [1, 1]} : vector<8x384xf32> to vector<8x128xf32>
    %167 = arith.addf %165, %166 : vector<8x128xf32>
    %168 = arith.negf %167 : vector<8x128xf32>
    %169 = math.exp %168 : vector<8x128xf32>
    %cst_35 = arith.constant 1.000000e+00 : f32
    %170 = vector.broadcast %cst_35 : f32 to vector<8x128xf32>
    %171 = arith.addf %170, %169 : vector<8x128xf32>
    %172 = arith.divf %170, %171 : vector<8x128xf32>
    %173 = vector.extract_strided_slice %155 {offsets = [0, 256], sizes = [8, 128], strides = [1, 1]} : vector<8x384xf32> to vector<8x128xf32>
    %174 = vector.extract_strided_slice %156 {offsets = [0, 256], sizes = [8, 128], strides = [1, 1]} : vector<8x384xf32> to vector<8x128xf32>
    %175 = arith.addf %174, %6 : vector<8x128xf32>
    %176 = arith.mulf %164, %175 : vector<8x128xf32>
    %177 = arith.addf %173, %176 : vector<8x128xf32>
    %178 = math.tanh %177 : vector<8x128xf32>
    %179 = arith.subf %152, %178 : vector<8x128xf32>
    %180 = arith.mulf %172, %179 : vector<8x128xf32>
    %181 = arith.addf %178, %180 : vector<8x128xf32>
    %c6_i32 = arith.constant 6 : i32
    %182 = arith.index_cast %c6_i32 : i32 to index
    %c0_36 = arith.constant 0 : index
    %c0_37 = arith.constant 0 : index
    %183 = vector.load %arg2[%182, %c0_36, %c0_37] : memref<8x8x384xf32, #tpu.memory_space<vmem>>, vector<1x8x384xf32>
    %184 = vector.shape_cast %183 : vector<1x8x384xf32> to vector<8x384xf32>
    %cst_38 = arith.constant dense<0.000000e+00> : vector<8x384xf32>
    %185 = tpu.matmul %181, %3, %cst_38 {dimension_numbers = #tpu.dot_dimension_numbers<[1], [0], [0], [1], [0, 0, 1, 1], [], []>} : vector<8x128xf32>, vector<128x384xf32>, vector<8x384xf32> -> vector<8x384xf32>
    %186 = vector.extract_strided_slice %184 {offsets = [0, 0], sizes = [8, 128], strides = [1, 1]} : vector<8x384xf32> to vector<8x128xf32>
    %187 = vector.extract_strided_slice %185 {offsets = [0, 0], sizes = [8, 128], strides = [1, 1]} : vector<8x384xf32> to vector<8x128xf32>
    %188 = arith.addf %186, %187 : vector<8x128xf32>
    %189 = arith.negf %188 : vector<8x128xf32>
    %190 = math.exp %189 : vector<8x128xf32>
    %cst_39 = arith.constant 1.000000e+00 : f32
    %191 = vector.broadcast %cst_39 : f32 to vector<8x128xf32>
    %192 = arith.addf %191, %190 : vector<8x128xf32>
    %193 = arith.divf %191, %192 : vector<8x128xf32>
    %194 = vector.extract_strided_slice %184 {offsets = [0, 128], sizes = [8, 128], strides = [1, 1]} : vector<8x384xf32> to vector<8x128xf32>
    %195 = vector.extract_strided_slice %185 {offsets = [0, 128], sizes = [8, 128], strides = [1, 1]} : vector<8x384xf32> to vector<8x128xf32>
    %196 = arith.addf %194, %195 : vector<8x128xf32>
    %197 = arith.negf %196 : vector<8x128xf32>
    %198 = math.exp %197 : vector<8x128xf32>
    %cst_40 = arith.constant 1.000000e+00 : f32
    %199 = vector.broadcast %cst_40 : f32 to vector<8x128xf32>
    %200 = arith.addf %199, %198 : vector<8x128xf32>
    %201 = arith.divf %199, %200 : vector<8x128xf32>
    %202 = vector.extract_strided_slice %184 {offsets = [0, 256], sizes = [8, 128], strides = [1, 1]} : vector<8x384xf32> to vector<8x128xf32>
    %203 = vector.extract_strided_slice %185 {offsets = [0, 256], sizes = [8, 128], strides = [1, 1]} : vector<8x384xf32> to vector<8x128xf32>
    %204 = arith.addf %203, %6 : vector<8x128xf32>
    %205 = arith.mulf %193, %204 : vector<8x128xf32>
    %206 = arith.addf %202, %205 : vector<8x128xf32>
    %207 = math.tanh %206 : vector<8x128xf32>
    %208 = arith.subf %181, %207 : vector<8x128xf32>
    %209 = arith.mulf %201, %208 : vector<8x128xf32>
    %210 = arith.addf %207, %209 : vector<8x128xf32>
    %c7_i32 = arith.constant 7 : i32
    %211 = arith.index_cast %c7_i32 : i32 to index
    %c0_41 = arith.constant 0 : index
    %c0_42 = arith.constant 0 : index
    %212 = vector.load %arg2[%211, %c0_41, %c0_42] : memref<8x8x384xf32, #tpu.memory_space<vmem>>, vector<1x8x384xf32>
    %213 = vector.shape_cast %212 : vector<1x8x384xf32> to vector<8x384xf32>
    %cst_43 = arith.constant dense<0.000000e+00> : vector<8x384xf32>
    %214 = tpu.matmul %210, %3, %cst_43 {dimension_numbers = #tpu.dot_dimension_numbers<[1], [0], [0], [1], [0, 0, 1, 1], [], []>} : vector<8x128xf32>, vector<128x384xf32>, vector<8x384xf32> -> vector<8x384xf32>
    %215 = vector.extract_strided_slice %213 {offsets = [0, 0], sizes = [8, 128], strides = [1, 1]} : vector<8x384xf32> to vector<8x128xf32>
    %216 = vector.extract_strided_slice %214 {offsets = [0, 0], sizes = [8, 128], strides = [1, 1]} : vector<8x384xf32> to vector<8x128xf32>
    %217 = arith.addf %215, %216 : vector<8x128xf32>
    %218 = arith.negf %217 : vector<8x128xf32>
    %219 = math.exp %218 : vector<8x128xf32>
    %cst_44 = arith.constant 1.000000e+00 : f32
    %220 = vector.broadcast %cst_44 : f32 to vector<8x128xf32>
    %221 = arith.addf %220, %219 : vector<8x128xf32>
    %222 = arith.divf %220, %221 : vector<8x128xf32>
    %223 = vector.extract_strided_slice %213 {offsets = [0, 128], sizes = [8, 128], strides = [1, 1]} : vector<8x384xf32> to vector<8x128xf32>
    %224 = vector.extract_strided_slice %214 {offsets = [0, 128], sizes = [8, 128], strides = [1, 1]} : vector<8x384xf32> to vector<8x128xf32>
    %225 = arith.addf %223, %224 : vector<8x128xf32>
    %226 = arith.negf %225 : vector<8x128xf32>
    %227 = math.exp %226 : vector<8x128xf32>
    %cst_45 = arith.constant 1.000000e+00 : f32
    %228 = vector.broadcast %cst_45 : f32 to vector<8x128xf32>
    %229 = arith.addf %228, %227 : vector<8x128xf32>
    %230 = arith.divf %228, %229 : vector<8x128xf32>
    %231 = vector.extract_strided_slice %213 {offsets = [0, 256], sizes = [8, 128], strides = [1, 1]} : vector<8x384xf32> to vector<8x128xf32>
    %232 = vector.extract_strided_slice %214 {offsets = [0, 256], sizes = [8, 128], strides = [1, 1]} : vector<8x384xf32> to vector<8x128xf32>
    %233 = arith.addf %232, %6 : vector<8x128xf32>
    %234 = arith.mulf %222, %233 : vector<8x128xf32>
    %235 = arith.addf %231, %234 : vector<8x128xf32>
    %236 = math.tanh %235 : vector<8x128xf32>
    %237 = arith.subf %210, %236 : vector<8x128xf32>
    %238 = arith.mulf %230, %237 : vector<8x128xf32>
    %239 = arith.addf %236, %238 : vector<8x128xf32>
    %c8_i32 = arith.constant 8 : i32
    %c0_46 = arith.constant 0 : index
    %c0_47 = arith.constant 0 : index
    %240 = vector.load %arg5[%c0_46, %c0_47] : memref<8x128xf32, #tpu.memory_space<vmem>>, vector<8x128xf32>
    tpu.vector_store %arg5[%c0_46, %c0_47], %239 {strides = array<i32>} : memref<8x128xf32, #tpu.memory_space<vmem>>, vector<8x128xf32>,
    return
  }
  func.func @transform_0(%arg0: i32, %arg1: i32) -> (i32, i32, i32) {
    %c1_i32 = arith.constant 1 : i32
    %0 = arith.muli %arg0, %c1_i32 : i32
    %1 = arith.addi %0, %arg1 : i32
    %c0_i32 = arith.constant 0 : i32
    %c0_i32_0 = arith.constant 0 : i32
    %c0_i32_1 = arith.constant 0 : i32
    return %1, %c0_i32, %c0_i32_0 : i32, i32, i32
  }
  func.func @transform_1(%arg0: i32, %arg1: i32) -> (i32, i32) {
    %c0_i32 = arith.constant 0 : i32
    %c0_i32_0 = arith.constant 0 : i32
    %c0_i32_1 = arith.constant 0 : i32
    return %c0_i32, %c0_i32_0 : i32, i32
  }
  func.func @transform_2(%arg0: i32, %arg1: i32) -> (i32, i32) {
    %c0_i32 = arith.constant 0 : i32
    %c0_i32_0 = arith.constant 0 : i32
    %c0_i32_1 = arith.constant 0 : i32
    return %c0_i32, %c0_i32_0 : i32, i32
  }
  func.func @transform_3(%arg0: i32, %arg1: i32) -> (i32, i32) {
    %c0_i32 = arith.constant 0 : i32
    %c0_i32_0 = arith.constant 0 : i32
    return %arg0, %c0_i32 : i32, i32
  }
}

module attributes {stable_mosaic.version = 11 : i64} {
  func.func @kernel(%arg0: i32, %arg1: i32, %arg2: memref<8x8x384xf32, #tpu.memory_space<vmem>>, %arg3: memref<128x384xf32, #tpu.memory_space<vmem>>, %arg4: memref<1x128xf32, #tpu.memory_space<vmem>>, %arg5: memref<8x128xf32, #tpu.memory_space<vmem>>) attributes {dimension_semantics = [#tpu.dimension_semantics<parallel>, #tpu.dimension_semantics<arbitrary>], iteration_bounds = array<i64: 1, 1>, scalar_prefetch = 0 : i64, scratch_operands = 0 : i64, tpu.core_type = #tpu.core_type<tc>, window_params = [{transform_indices = @transform_0, window_bounds = array<i64: 8, 8, 384>}, {pipeline_mode = #tpu.pipeline_mode<synchronous>, transform_indices = @transform_1, window_bounds = array<i64: 128, 384>}, {pipeline_mode = #tpu.pipeline_mode<synchronous>, transform_indices = @transform_2, window_bounds = array<i64: 1, 128>}, {transform_indices = @transform_3, window_bounds = array<i64: 8, 128>}]} {
    %c0_i32 = arith.constant 0 : i32
    %0 = arith.cmpi eq, %arg1, %c0_i32 : i32
    %1 = arith.extui %0 : i1 to i32
    %c0_i32_0 = arith.constant 0 : i32
    %2 = arith.cmpi ne, %1, %c0_i32_0 : i32
    scf.if %2 {
      %cst_48 = arith.constant 0.000000e+00 : f32
      %241 = vector.broadcast %cst_48 : f32 to vector<8x128xf32>
      %c0_49 = arith.constant 0 : index
      %c0_50 = arith.constant 0 : index
      %242 = vector.load %arg5[%c0_49, %c0_50] : memref<8x128xf32, #tpu.memory_space<vmem>>, vector<8x128xf32>
      tpu.vector_store %arg5[%c0_49, %c0_50], %241 {strides = array<i32>} : memref<8x128xf32, #tpu.memory_space<vmem>>, vector<8x128xf32>,
    } else {
    }
    %c0 = arith.constant 0 : index
    %c0_1 = arith.constant 0 : index
    %3 = vector.load %arg3[%c0, %c0_1] : memref<128x384xf32, #tpu.memory_space<vmem>>, vector<128x384xf32>
    %c0_2 = arith.constant 0 : index
    %c0_3 = arith.constant 0 : index
    %4 = vector.load %arg4[%c0_2, %c0_3] : memref<1x128xf32, #tpu.memory_space<vmem>>, vector<1x128xf32>
    %5 = vector.shape_cast %4 : vector<1x128xf32> to vector<1x128xf32>
    %6 = vector.broadcast %5 : vector<1x128xf32> to vector<8x128xf32>
    %c0_4 = arith.constant 0 : index
    %c0_5 = arith.constant 0 : index
    %7 = vector.load %arg5[%c0_4, %c0_5] : memref<8x128xf32, #tpu.memory_space<vmem>>, vector<8x128xf32>
    %c0_i32_6 = arith.constant 0 : i32
    %8 = arith.index_cast %c0_i32_6 : i32 to index
    %c0_7 = arith.constant 0 : index
    %c0_8 = arith.constant 0 : index
    %9 = vector.load %arg2[%8, %c0_7, %c0_8] : memref<8x8x384xf32, #tpu.memory_space<vmem>>, vector<1x8x384xf32>
    %10 = vector.shape_cast %9 : vector<1x8x384xf32> to vector<8x384xf32>
    %cst = arith.constant dense<0.000000e+00> : vector<8x384xf32>
    %11 = tpu.matmul %7, %3, %cst {dimension_numbers = #tpu.dot_dimension_numbers<[1], [0], [0], [1], [0, 0, 1, 1], [], []>} : vector<8x128xf32>, vector<128x384xf32>, vector<8x384xf32> -> vector<8x384xf32>
    %12 = vector.extract_strided_slice %10 {offsets = [0, 0], sizes = [8, 128], strides = [1, 1]} : vector<8x384xf32> to vector<8x128xf32>
    %13 = vector.extract_strided_slice %11 {offsets = [0, 0], sizes = [8, 128], strides = [1, 1]} : vector<8x384xf32> to vector<8x128xf32>
    %14 = arith.addf %12, %13 : vector<8x128xf32>
    %15 = arith.negf %14 : vector<8x128xf32>
    %16 = math.exp %15 : vector<8x128xf32>
    %cst_9 = arith.constant 1.000000e+00 : f32
    %17 = vector.broadcast %cst_9 : f32 to vector<8x128xf32>
    %18 = arith.addf %17, %16 : vector<8x128xf32>
    %19 = arith.divf %17, %18 : vector<8x128xf32>
    %20 = vector.extract_strided_slice %10 {offsets = [0, 128], sizes = [8, 128], strides = [1, 1]} : vector<8x384xf32> to vector<8x128xf32>
    %21 = vector.extract_strided_slice %11 {offsets = [0, 128], sizes = [8, 128], strides = [1, 1]} : vector<8x384xf32> to vector<8x128xf32>
    %22 = arith.addf %20, %21 : vector<8x128xf32>
    %23 = arith.negf %22 : vector<8x128xf32>
    %24 = math.exp %23 : vector<8x128xf32>
    %cst_10 = arith.constant 1.000000e+00 : f32
    %25 = vector.broadcast %cst_10 : f32 to vector<8x128xf32>
    %26 = arith.addf %25, %24 : vector<8x128xf32>
    %27 = arith.divf %25, %26 : vector<8x128xf32>
    %28 = vector.extract_strided_slice %10 {offsets = [0, 256], sizes = [8, 128], strides = [1, 1]} : vector<8x384xf32> to vector<8x128xf32>
    %29 = vector.extract_strided_slice %11 {offsets = [0, 256], sizes = [8, 128], strides = [1, 1]} : vector<8x384xf32> to vector<8x128xf32>
    %30 = arith.addf %29, %6 : vector<8x128xf32>
    %31 = arith.mulf %19, %30 : vector<8x128xf32>
    %32 = arith.addf %28, %31 : vector<8x128xf32>
    %33 = math.tanh %32 : vector<8x128xf32>
    %34 = arith.subf %7, %33 : vector<8x128xf32>
    %35 = arith.mulf %27, %34 : vector<8x128xf32>
    %36 = arith.addf %33, %35 : vector<8x128xf32>
    %c1_i32 = arith.constant 1 : i32
    %37 = arith.index_cast %c1_i32 : i32 to index
    %c0_11 = arith.constant 0 : index
    %c0_12 = arith.constant 0 : index
    %38 = vector.load %arg2[%37, %c0_11, %c0_12] : memref<8x8x384xf32, #tpu.memory_space<vmem>>, vector<1x8x384xf32>
    %39 = vector.shape_cast %38 : vector<1x8x384xf32> to vector<8x384xf32>
    %cst_13 = arith.constant dense<0.000000e+00> : vector<8x384xf32>
    %40 = tpu.matmul %36, %3, %cst_13 {dimension_numbers = #tpu.dot_dimension_numbers<[1], [0], [0], [1], [0, 0, 1, 1], [], []>} : vector<8x128xf32>, vector<128x384xf32>, vector<8x384xf32> -> vector<8x384xf32>
    %41 = vector.extract_strided_slice %39 {offsets = [0, 0], sizes = [8, 128], strides = [1, 1]} : vector<8x384xf32> to vector<8x128xf32>
    %42 = vector.extract_strided_slice %40 {offsets = [0, 0], sizes = [8, 128], strides = [1, 1]} : vector<8x384xf32> to vector<8x128xf32>
    %43 = arith.addf %41, %42 : vector<8x128xf32>
    %44 = arith.negf %43 : vector<8x128xf32>
    %45 = math.exp %44 : vector<8x128xf32>
    %cst_14 = arith.constant 1.000000e+00 : f32
    %46 = vector.broadcast %cst_14 : f32 to vector<8x128xf32>
    %47 = arith.addf %46, %45 : vector<8x128xf32>
    %48 = arith.divf %46, %47 : vector<8x128xf32>
    %49 = vector.extract_strided_slice %39 {offsets = [0, 128], sizes = [8, 128], strides = [1, 1]} : vector<8x384xf32> to vector<8x128xf32>
    %50 = vector.extract_strided_slice %40 {offsets = [0, 128], sizes = [8, 128], strides = [1, 1]} : vector<8x384xf32> to vector<8x128xf32>
    %51 = arith.addf %49, %50 : vector<8x128xf32>
    %52 = arith.negf %51 : vector<8x128xf32>
    %53 = math.exp %52 : vector<8x128xf32>
    %cst_15 = arith.constant 1.000000e+00 : f32
    %54 = vector.broadcast %cst_15 : f32 to vector<8x128xf32>
    %55 = arith.addf %54, %53 : vector<8x128xf32>
    %56 = arith.divf %54, %55 : vector<8x128xf32>
    %57 = vector.extract_strided_slice %39 {offsets = [0, 256], sizes = [8, 128], strides = [1, 1]} : vector<8x384xf32> to vector<8x128xf32>
    %58 = vector.extract_strided_slice %40 {offsets = [0, 256], sizes = [8, 128], strides = [1, 1]} : vector<8x384xf32> to vector<8x128xf32>
    %59 = arith.addf %58, %6 : vector<8x128xf32>
    %60 = arith.mulf %48, %59 : vector<8x128xf32>
    %61 = arith.addf %57, %60 : vector<8x128xf32>
    %62 = math.tanh %61 : vector<8x128xf32>
    %63 = arith.subf %36, %62 : vector<8x128xf32>
    %64 = arith.mulf %56, %63 : vector<8x128xf32>
    %65 = arith.addf %62, %64 : vector<8x128xf32>
    %c2_i32 = arith.constant 2 : i32
    %66 = arith.index_cast %c2_i32 : i32 to index
    %c0_16 = arith.constant 0 : index
    %c0_17 = arith.constant 0 : index
    %67 = vector.load %arg2[%66, %c0_16, %c0_17] : memref<8x8x384xf32, #tpu.memory_space<vmem>>, vector<1x8x384xf32>
    %68 = vector.shape_cast %67 : vector<1x8x384xf32> to vector<8x384xf32>
    %cst_18 = arith.constant dense<0.000000e+00> : vector<8x384xf32>
    %69 = tpu.matmul %65, %3, %cst_18 {dimension_numbers = #tpu.dot_dimension_numbers<[1], [0], [0], [1], [0, 0, 1, 1], [], []>} : vector<8x128xf32>, vector<128x384xf32>, vector<8x384xf32> -> vector<8x384xf32>
    %70 = vector.extract_strided_slice %68 {offsets = [0, 0], sizes = [8, 128], strides = [1, 1]} : vector<8x384xf32> to vector<8x128xf32>
    %71 = vector.extract_strided_slice %69 {offsets = [0, 0], sizes = [8, 128], strides = [1, 1]} : vector<8x384xf32> to vector<8x128xf32>
    %72 = arith.addf %70, %71 : vector<8x128xf32>
    %73 = arith.negf %72 : vector<8x128xf32>
    %74 = math.exp %73 : vector<8x128xf32>
    %cst_19 = arith.constant 1.000000e+00 : f32
    %75 = vector.broadcast %cst_19 : f32 to vector<8x128xf32>
    %76 = arith.addf %75, %74 : vector<8x128xf32>
    %77 = arith.divf %75, %76 : vector<8x128xf32>
    %78 = vector.extract_strided_slice %68 {offsets = [0, 128], sizes = [8, 128], strides = [1, 1]} : vector<8x384xf32> to vector<8x128xf32>
    %79 = vector.extract_strided_slice %69 {offsets = [0, 128], sizes = [8, 128], strides = [1, 1]} : vector<8x384xf32> to vector<8x128xf32>
    %80 = arith.addf %78, %79 : vector<8x128xf32>
    %81 = arith.negf %80 : vector<8x128xf32>
    %82 = math.exp %81 : vector<8x128xf32>
    %cst_20 = arith.constant 1.000000e+00 : f32
    %83 = vector.broadcast %cst_20 : f32 to vector<8x128xf32>
    %84 = arith.addf %83, %82 : vector<8x128xf32>
    %85 = arith.divf %83, %84 : vector<8x128xf32>
    %86 = vector.extract_strided_slice %68 {offsets = [0, 256], sizes = [8, 128], strides = [1, 1]} : vector<8x384xf32> to vector<8x128xf32>
    %87 = vector.extract_strided_slice %69 {offsets = [0, 256], sizes = [8, 128], strides = [1, 1]} : vector<8x384xf32> to vector<8x128xf32>
    %88 = arith.addf %87, %6 : vector<8x128xf32>
    %89 = arith.mulf %77, %88 : vector<8x128xf32>
    %90 = arith.addf %86, %89 : vector<8x128xf32>
    %91 = math.tanh %90 : vector<8x128xf32>
    %92 = arith.subf %65, %91 : vector<8x128xf32>
    %93 = arith.mulf %85, %92 : vector<8x128xf32>
    %94 = arith.addf %91, %93 : vector<8x128xf32>
    %c3_i32 = arith.constant 3 : i32
    %95 = arith.index_cast %c3_i32 : i32 to index
    %c0_21 = arith.constant 0 : index
    %c0_22 = arith.constant 0 : index
    %96 = vector.load %arg2[%95, %c0_21, %c0_22] : memref<8x8x384xf32, #tpu.memory_space<vmem>>, vector<1x8x384xf32>
    %97 = vector.shape_cast %96 : vector<1x8x384xf32> to vector<8x384xf32>
    %cst_23 = arith.constant dense<0.000000e+00> : vector<8x384xf32>
    %98 = tpu.matmul %94, %3, %cst_23 {dimension_numbers = #tpu.dot_dimension_numbers<[1], [0], [0], [1], [0, 0, 1, 1], [], []>} : vector<8x128xf32>, vector<128x384xf32>, vector<8x384xf32> -> vector<8x384xf32>
    %99 = vector.extract_strided_slice %97 {offsets = [0, 0], sizes = [8, 128], strides = [1, 1]} : vector<8x384xf32> to vector<8x128xf32>
    %100 = vector.extract_strided_slice %98 {offsets = [0, 0], sizes = [8, 128], strides = [1, 1]} : vector<8x384xf32> to vector<8x128xf32>
    %101 = arith.addf %99, %100 : vector<8x128xf32>
    %102 = arith.negf %101 : vector<8x128xf32>
    %103 = math.exp %102 : vector<8x128xf32>
    %cst_24 = arith.constant 1.000000e+00 : f32
    %104 = vector.broadcast %cst_24 : f32 to vector<8x128xf32>
    %105 = arith.addf %104, %103 : vector<8x128xf32>
    %106 = arith.divf %104, %105 : vector<8x128xf32>
    %107 = vector.extract_strided_slice %97 {offsets = [0, 128], sizes = [8, 128], strides = [1, 1]} : vector<8x384xf32> to vector<8x128xf32>
    %108 = vector.extract_strided_slice %98 {offsets = [0, 128], sizes = [8, 128], strides = [1, 1]} : vector<8x384xf32> to vector<8x128xf32>
    %109 = arith.addf %107, %108 : vector<8x128xf32>
    %110 = arith.negf %109 : vector<8x128xf32>
    %111 = math.exp %110 : vector<8x128xf32>
    %cst_25 = arith.constant 1.000000e+00 : f32
    %112 = vector.broadcast %cst_25 : f32 to vector<8x128xf32>
    %113 = arith.addf %112, %111 : vector<8x128xf32>
    %114 = arith.divf %112, %113 : vector<8x128xf32>
    %115 = vector.extract_strided_slice %97 {offsets = [0, 256], sizes = [8, 128], strides = [1, 1]} : vector<8x384xf32> to vector<8x128xf32>
    %116 = vector.extract_strided_slice %98 {offsets = [0, 256], sizes = [8, 128], strides = [1, 1]} : vector<8x384xf32> to vector<8x128xf32>
    %117 = arith.addf %116, %6 : vector<8x128xf32>
    %118 = arith.mulf %106, %117 : vector<8x128xf32>
    %119 = arith.addf %115, %118 : vector<8x128xf32>
    %120 = math.tanh %119 : vector<8x128xf32>
    %121 = arith.subf %94, %120 : vector<8x128xf32>
    %122 = arith.mulf %114, %121 : vector<8x128xf32>
    %123 = arith.addf %120, %122 : vector<8x128xf32>
    %c4_i32 = arith.constant 4 : i32
    %124 = arith.index_cast %c4_i32 : i32 to index
    %c0_26 = arith.constant 0 : index
    %c0_27 = arith.constant 0 : index
    %125 = vector.load %arg2[%124, %c0_26, %c0_27] : memref<8x8x384xf32, #tpu.memory_space<vmem>>, vector<1x8x384xf32>
    %126 = vector.shape_cast %125 : vector<1x8x384xf32> to vector<8x384xf32>
    %cst_28 = arith.constant dense<0.000000e+00> : vector<8x384xf32>
    %127 = tpu.matmul %123, %3, %cst_28 {dimension_numbers = #tpu.dot_dimension_numbers<[1], [0], [0], [1], [0, 0, 1, 1], [], []>} : vector<8x128xf32>, vector<128x384xf32>, vector<8x384xf32> -> vector<8x384xf32>
    %128 = vector.extract_strided_slice %126 {offsets = [0, 0], sizes = [8, 128], strides = [1, 1]} : vector<8x384xf32> to vector<8x128xf32>
    %129 = vector.extract_strided_slice %127 {offsets = [0, 0], sizes = [8, 128], strides = [1, 1]} : vector<8x384xf32> to vector<8x128xf32>
    %130 = arith.addf %128, %129 : vector<8x128xf32>
    %131 = arith.negf %130 : vector<8x128xf32>
    %132 = math.exp %131 : vector<8x128xf32>
    %cst_29 = arith.constant 1.000000e+00 : f32
    %133 = vector.broadcast %cst_29 : f32 to vector<8x128xf32>
    %134 = arith.addf %133, %132 : vector<8x128xf32>
    %135 = arith.divf %133, %134 : vector<8x128xf32>
    %136 = vector.extract_strided_slice %126 {offsets = [0, 128], sizes = [8, 128], strides = [1, 1]} : vector<8x384xf32> to vector<8x128xf32>
    %137 = vector.extract_strided_slice %127 {offsets = [0, 128], sizes = [8, 128], strides = [1, 1]} : vector<8x384xf32> to vector<8x128xf32>
    %138 = arith.addf %136, %137 : vector<8x128xf32>
    %139 = arith.negf %138 : vector<8x128xf32>
    %140 = math.exp %139 : vector<8x128xf32>
    %cst_30 = arith.constant 1.000000e+00 : f32
    %141 = vector.broadcast %cst_30 : f32 to vector<8x128xf32>
    %142 = arith.addf %141, %140 : vector<8x128xf32>
    %143 = arith.divf %141, %142 : vector<8x128xf32>
    %144 = vector.extract_strided_slice %126 {offsets = [0, 256], sizes = [8, 128], strides = [1, 1]} : vector<8x384xf32> to vector<8x128xf32>
    %145 = vector.extract_strided_slice %127 {offsets = [0, 256], sizes = [8, 128], strides = [1, 1]} : vector<8x384xf32> to vector<8x128xf32>
    %146 = arith.addf %145, %6 : vector<8x128xf32>
    %147 = arith.mulf %135, %146 : vector<8x128xf32>
    %148 = arith.addf %144, %147 : vector<8x128xf32>
    %149 = math.tanh %148 : vector<8x128xf32>
    %150 = arith.subf %123, %149 : vector<8x128xf32>
    %151 = arith.mulf %143, %150 : vector<8x128xf32>
    %152 = arith.addf %149, %151 : vector<8x128xf32>
    %c5_i32 = arith.constant 5 : i32
    %153 = arith.index_cast %c5_i32 : i32 to index
    %c0_31 = arith.constant 0 : index
    %c0_32 = arith.constant 0 : index
    %154 = vector.load %arg2[%153, %c0_31, %c0_32] : memref<8x8x384xf32, #tpu.memory_space<vmem>>, vector<1x8x384xf32>
    %155 = vector.shape_cast %154 : vector<1x8x384xf32> to vector<8x384xf32>
    %cst_33 = arith.constant dense<0.000000e+00> : vector<8x384xf32>
    %156 = tpu.matmul %152, %3, %cst_33 {dimension_numbers = #tpu.dot_dimension_numbers<[1], [0], [0], [1], [0, 0, 1, 1], [], []>} : vector<8x128xf32>, vector<128x384xf32>, vector<8x384xf32> -> vector<8x384xf32>
    %157 = vector.extract_strided_slice %155 {offsets = [0, 0], sizes = [8, 128], strides = [1, 1]} : vector<8x384xf32> to vector<8x128xf32>
    %158 = vector.extract_strided_slice %156 {offsets = [0, 0], sizes = [8, 128], strides = [1, 1]} : vector<8x384xf32> to vector<8x128xf32>
    %159 = arith.addf %157, %158 : vector<8x128xf32>
    %160 = arith.negf %159 : vector<8x128xf32>
    %161 = math.exp %160 : vector<8x128xf32>
    %cst_34 = arith.constant 1.000000e+00 : f32
    %162 = vector.broadcast %cst_34 : f32 to vector<8x128xf32>
    %163 = arith.addf %162, %161 : vector<8x128xf32>
    %164 = arith.divf %162, %163 : vector<8x128xf32>
    %165 = vector.extract_strided_slice %155 {offsets = [0, 128], sizes = [8, 128], strides = [1, 1]} : vector<8x384xf32> to vector<8x128xf32>
    %166 = vector.extract_strided_slice %156 {offsets = [0, 128], sizes = [8, 128], strides = [1, 1]} : vector<8x384xf32> to vector<8x128xf32>
    %167 = arith.addf %165, %166 : vector<8x128xf32>
    %168 = arith.negf %167 : vector<8x128xf32>
    %169 = math.exp %168 : vector<8x128xf32>
    %cst_35 = arith.constant 1.000000e+00 : f32
    %170 = vector.broadcast %cst_35 : f32 to vector<8x128xf32>
    %171 = arith.addf %170, %169 : vector<8x128xf32>
    %172 = arith.divf %170, %171 : vector<8x128xf32>
    %173 = vector.extract_strided_slice %155 {offsets = [0, 256], sizes = [8, 128], strides = [1, 1]} : vector<8x384xf32> to vector<8x128xf32>
    %174 = vector.extract_strided_slice %156 {offsets = [0, 256], sizes = [8, 128], strides = [1, 1]} : vector<8x384xf32> to vector<8x128xf32>
    %175 = arith.addf %174, %6 : vector<8x128xf32>
    %176 = arith.mulf %164, %175 : vector<8x128xf32>
    %177 = arith.addf %173, %176 : vector<8x128xf32>
    %178 = math.tanh %177 : vector<8x128xf32>
    %179 = arith.subf %152, %178 : vector<8x128xf32>
    %180 = arith.mulf %172, %179 : vector<8x128xf32>
    %181 = arith.addf %178, %180 : vector<8x128xf32>
    %c6_i32 = arith.constant 6 : i32
    %182 = arith.index_cast %c6_i32 : i32 to index
    %c0_36 = arith.constant 0 : index
    %c0_37 = arith.constant 0 : index
    %183 = vector.load %arg2[%182, %c0_36, %c0_37] : memref<8x8x384xf32, #tpu.memory_space<vmem>>, vector<1x8x384xf32>
    %184 = vector.shape_cast %183 : vector<1x8x384xf32> to vector<8x384xf32>
    %cst_38 = arith.constant dense<0.000000e+00> : vector<8x384xf32>
    %185 = tpu.matmul %181, %3, %cst_38 {dimension_numbers = #tpu.dot_dimension_numbers<[1], [0], [0], [1], [0, 0, 1, 1], [], []>} : vector<8x128xf32>, vector<128x384xf32>, vector<8x384xf32> -> vector<8x384xf32>
    %186 = vector.extract_strided_slice %184 {offsets = [0, 0], sizes = [8, 128], strides = [1, 1]} : vector<8x384xf32> to vector<8x128xf32>
    %187 = vector.extract_strided_slice %185 {offsets = [0, 0], sizes = [8, 128], strides = [1, 1]} : vector<8x384xf32> to vector<8x128xf32>
    %188 = arith.addf %186, %187 : vector<8x128xf32>
    %189 = arith.negf %188 : vector<8x128xf32>
    %190 = math.exp %189 : vector<8x128xf32>
    %cst_39 = arith.constant 1.000000e+00 : f32
    %191 = vector.broadcast %cst_39 : f32 to vector<8x128xf32>
    %192 = arith.addf %191, %190 : vector<8x128xf32>
    %193 = arith.divf %191, %192 : vector<8x128xf32>
    %194 = vector.extract_strided_slice %184 {offsets = [0, 128], sizes = [8, 128], strides = [1, 1]} : vector<8x384xf32> to vector<8x128xf32>
    %195 = vector.extract_strided_slice %185 {offsets = [0, 128], sizes = [8, 128], strides = [1, 1]} : vector<8x384xf32> to vector<8x128xf32>
    %196 = arith.addf %194, %195 : vector<8x128xf32>
    %197 = arith.negf %196 : vector<8x128xf32>
    %198 = math.exp %197 : vector<8x128xf32>
    %cst_40 = arith.constant 1.000000e+00 : f32
    %199 = vector.broadcast %cst_40 : f32 to vector<8x128xf32>
    %200 = arith.addf %199, %198 : vector<8x128xf32>
    %201 = arith.divf %199, %200 : vector<8x128xf32>
    %202 = vector.extract_strided_slice %184 {offsets = [0, 256], sizes = [8, 128], strides = [1, 1]} : vector<8x384xf32> to vector<8x128xf32>
    %203 = vector.extract_strided_slice %185 {offsets = [0, 256], sizes = [8, 128], strides = [1, 1]} : vector<8x384xf32> to vector<8x128xf32>
    %204 = arith.addf %203, %6 : vector<8x128xf32>
    %205 = arith.mulf %193, %204 : vector<8x128xf32>
    %206 = arith.addf %202, %205 : vector<8x128xf32>
    %207 = math.tanh %206 : vector<8x128xf32>
    %208 = arith.subf %181, %207 : vector<8x128xf32>
    %209 = arith.mulf %201, %208 : vector<8x128xf32>
    %210 = arith.addf %207, %209 : vector<8x128xf32>
    %c7_i32 = arith.constant 7 : i32
    %211 = arith.index_cast %c7_i32 : i32 to index
    %c0_41 = arith.constant 0 : index
    %c0_42 = arith.constant 0 : index
    %212 = vector.load %arg2[%211, %c0_41, %c0_42] : memref<8x8x384xf32, #tpu.memory_space<vmem>>, vector<1x8x384xf32>
    %213 = vector.shape_cast %212 : vector<1x8x384xf32> to vector<8x384xf32>
    %cst_43 = arith.constant dense<0.000000e+00> : vector<8x384xf32>
    %214 = tpu.matmul %210, %3, %cst_43 {dimension_numbers = #tpu.dot_dimension_numbers<[1], [0], [0], [1], [0, 0, 1, 1], [], []>} : vector<8x128xf32>, vector<128x384xf32>, vector<8x384xf32> -> vector<8x384xf32>
    %215 = vector.extract_strided_slice %213 {offsets = [0, 0], sizes = [8, 128], strides = [1, 1]} : vector<8x384xf32> to vector<8x128xf32>
    %216 = vector.extract_strided_slice %214 {offsets = [0, 0], sizes = [8, 128], strides = [1, 1]} : vector<8x384xf32> to vector<8x128xf32>
    %217 = arith.addf %215, %216 : vector<8x128xf32>
    %218 = arith.negf %217 : vector<8x128xf32>
    %219 = math.exp %218 : vector<8x128xf32>
    %cst_44 = arith.constant 1.000000e+00 : f32
    %220 = vector.broadcast %cst_44 : f32 to vector<8x128xf32>
    %221 = arith.addf %220, %219 : vector<8x128xf32>
    %222 = arith.divf %220, %221 : vector<8x128xf32>
    %223 = vector.extract_strided_slice %213 {offsets = [0, 128], sizes = [8, 128], strides = [1, 1]} : vector<8x384xf32> to vector<8x128xf32>
    %224 = vector.extract_strided_slice %214 {offsets = [0, 128], sizes = [8, 128], strides = [1, 1]} : vector<8x384xf32> to vector<8x128xf32>
    %225 = arith.addf %223, %224 : vector<8x128xf32>
    %226 = arith.negf %225 : vector<8x128xf32>
    %227 = math.exp %226 : vector<8x128xf32>
    %cst_45 = arith.constant 1.000000e+00 : f32
    %228 = vector.broadcast %cst_45 : f32 to vector<8x128xf32>
    %229 = arith.addf %228, %227 : vector<8x128xf32>
    %230 = arith.divf %228, %229 : vector<8x128xf32>
    %231 = vector.extract_strided_slice %213 {offsets = [0, 256], sizes = [8, 128], strides = [1, 1]} : vector<8x384xf32> to vector<8x128xf32>
    %232 = vector.extract_strided_slice %214 {offsets = [0, 256], sizes = [8, 128], strides = [1, 1]} : vector<8x384xf32> to vector<8x128xf32>
    %233 = arith.addf %232, %6 : vector<8x128xf32>
    %234 = arith.mulf %222, %233 : vector<8x128xf32>
    %235 = arith.addf %231, %234 : vector<8x128xf32>
    %236 = math.tanh %235 : vector<8x128xf32>
    %237 = arith.subf %210, %236 : vector<8x128xf32>
    %238 = arith.mulf %230, %237 : vector<8x128xf32>
    %239 = arith.addf %236, %238 : vector<8x128xf32>
    %c8_i32 = arith.constant 8 : i32
    %c0_46 = arith.constant 0 : index
    %c0_47 = arith.constant 0 : index
    %240 = vector.load %arg5[%c0_46, %c0_47] : memref<8x128xf32, #tpu.memory_space<vmem>>, vector<8x128xf32>
    tpu.vector_store %arg5[%c0_46, %c0_47], %239 {strides = array<i32>} : memref<8x128xf32, #tpu.memory_space<vmem>>, vector<8x128xf32>,
    return
  }
  func.func @transform_0(%arg0: i32, %arg1: i32) -> (i32, i32, i32) {
    %c1_i32 = arith.constant 1 : i32
    %0 = arith.muli %arg0, %c1_i32 : i32
    %1 = arith.addi %0, %arg1 : i32
    %c0_i32 = arith.constant 0 : i32
    %c0_i32_0 = arith.constant 0 : i32
    %c0_i32_1 = arith.constant 0 : i32
    return %1, %c0_i32, %c0_i32_0 : i32, i32, i32
  }
  func.func @transform_1(%arg0: i32, %arg1: i32) -> (i32, i32) {
    %c0_i32 = arith.constant 0 : i32
    %c0_i32_0 = arith.constant 0 : i32
    %c0_i32_1 = arith.constant 0 : i32
    return %c0_i32, %c0_i32_0 : i32, i32
  }
  func.func @transform_2(%arg0: i32, %arg1: i32) -> (i32, i32) {
    %c0_i32 = arith.constant 0 : i32
    %c0_i32_0 = arith.constant 0 : i32
    %c0_i32_1 = arith.constant 0 : i32
    return %c0_i32, %c0_i32_0 : i32, i32
  }
  func.func @transform_3(%arg0: i32, %arg1: i32) -> (i32, i32) {
    %c0_i32 = arith.constant 0 : i32
    %c0_i32_0 = arith.constant 0 : i32
    return %arg0, %c0_i32 : i32, i32
  }
}

</mosaic_0001>

<llo_original>
// kernel: tpu_custom_call.1
$region0: #{tpu_custom_call.1}
  #allocation0 [shape = 'u32[]', space=smem, size = 0x4, offset = 0x4, fixed_abs, tag = 'smem constant byte address 0x4 - core index']
  #allocation1 [shape = 'u32[144,128]{1,0:T(1,128)}', space=vmem, size = 0x12000, scoped, tag = 'internal scratch']
  %s0 = inlined_call_operand.hbm [shape: f32[8,8,384], index: 0, kind: input, shape index: {}]
  %s1 = inlined_call_operand.hbm [shape: f32[128,384], index: 1, kind: input, shape index: {}]
  %s2 = inlined_call_operand.vmem [shape: f32[1,128], index: 2, kind: input, shape index: {}]
  %s3 = inlined_call_operand.hbm [shape: f32[8,128], index: 3, kind: output, shape index: {}]
  %s4 = sld [smem:[#allocation0]]
  $region34: #{tpu_custom_call.1} parent=0
    _
  %s6 = ssub.s32 1, %s4
  %s7 = scalar_select 0, %s6, %s4
  $region1: #{tpu_custom_call.1} parent=0
    #allocation2 [shape = 'u8[98304]{0}', space=vmem, size = 0x18000, scoped, tag = 'input window, operand 0, single buffered']
    #allocation3 [shape = 's32[1]{0}', space=sflag, size = 0x4, scoped, tag = 'scoped memory for tpu_custom_call.1']
    #allocation4 [shape = 's32[1]{0}', space=sflag, size = 0x4, scoped, tag = 'scoped memory for tpu_custom_call.1']
    #allocation5 [shape = 'u8[196608]{0}', space=vmem, size = 0x30000, scoped, tag = 'input window, operand 1, single buffered']
    #allocation6 [shape = 's32[1]{0}', space=sflag, size = 0x4, scoped, tag = 'scoped memory for tpu_custom_call.1']
    #allocation7 [shape = 'u8[4096]{0}', space=vmem, size = 0x1000, scoped, tag = 'output window, operand 0, single buffered']
    %8 = vsyncpa [#allocation3], 0
    %9 = vsyncpa [#allocation6], 0
    %10 = vsyncpa [#allocation4], 0
    // Predicated region
    $region2: #{tpu_custom_call.1} parent=1 // pred_check
      _
    $region3: #{tpu_custom_call.1} parent=1 // pred_check_branch
      %12 = sbr.rel (0) target = $region5
    $region4: #{tpu_custom_call.1} parent=1 // pred_region
      %s13 = sadd.s32 0, 0
      %s14 = smul.u32 8, %s13
      %s16 = ssub.s32 3072, 3072
      %17 = vsyncadd [#allocation3], %s16
      %s18 = smul.addr %s14, 3
      %s19 = smul.addr %s18, 128
      %s20 = scalar_lea.hbm %s0, %s19
      %s21 = sshll.u32 [#allocation2], 4
      %s22 = int_to_ptr.vmem [resolvable:$true] %s21
      %27 = dma.hbm_to_vmem [thread:$0]  %s20, 3072, %s22, [#allocation3], 384, 384, 24
    $region5: #{tpu_custom_call.1} parent=1 // pred_fallthru
      _
    // Predicated region
    $region6: #{tpu_custom_call.1} parent=1 // pred_check
      _
    $region7: #{tpu_custom_call.1} parent=1 // pred_check_branch
      %29 = sbr.rel (0) target = $region9
    $region8: #{tpu_custom_call.1} parent=1 // pred_region
      %s31 = ssub.s32 6144, 6144
      %32 = vsyncadd [#allocation6], %s31
      %s33 = sshll.u32 [#allocation5], 4
      %s34 = int_to_ptr.vmem [resolvable:$true] %s33
      %39 = dma.hbm_to_vmem [thread:$0]  %s1, 6144, %s34, [#allocation6], 384, 384, 24
    $region9: #{tpu_custom_call.1} parent=1 // pred_fallthru
      _
    // Predicated region
    $region10: #{tpu_custom_call.1} parent=1 // pred_check
      _
    $region11: #{tpu_custom_call.1} parent=1 // pred_check_branch
      %41 = sbr.rel (0) target = $region13
    $region12: #{tpu_custom_call.1} parent=1 // pred_region
      _
    $region13: #{tpu_custom_call.1} parent=1 // pred_fallthru
      _
    // Predicated region
    $region14: #{tpu_custom_call.1} parent=1 // pred_check
      _
    $region15: #{tpu_custom_call.1} parent=1 // pred_check_branch
      %43 = sbr.rel (0) target = $region17
    $region16: #{tpu_custom_call.1} parent=1 // pred_region
      %44 = dma.done [#allocation3], 3072
    $region17: #{tpu_custom_call.1} parent=1 // pred_fallthru
      _
    // Predicated region
    $region18: #{tpu_custom_call.1} parent=1 // pred_check
      _
    $region19: #{tpu_custom_call.1} parent=1 // pred_check_branch
      %46 = sbr.rel (0) target = $region21
    $region20: #{tpu_custom_call.1} parent=1 // pred_region
      %47 = dma.done [#allocation6], 6144
    $region21: #{tpu_custom_call.1} parent=1 // pred_fallthru
      _
    %s48 = sadd.s32 0, 0
    %s49 = smul.u32 8, %s48
    %p50 = scmp.eq.s32.totalorder 0, 0
    // Predicated region
    $region22: #{tpu_custom_call.1} parent=1 // pred_check
      %p51 = pneg %p50
    $region23: #{tpu_custom_call.1} parent=1 // pred_check_branch
      %53 = sbr.rel (%p51) target = $region25
    $region24: #{tpu_custom_call.1} parent=1 // pred_region
      %54 = vst [vmem:[#allocation7] sm:$0xff] 0.0
    $region25: #{tpu_custom_call.1} parent=1 // pred_fallthru
      _
    %v55 = vld [vmem:[#allocation5] sm:$0xff]
    %v56 = vld [vmem:[#allocation5 + $0x8] sm:$0xff]
    %v57 = vld [vmem:[#allocation5 + $0x10] sm:$0xff]
    %v58 = vld [vmem:[#allocation5 + $0x18] sm:$0xff]
    %v59 = vld [vmem:[#allocation5 + $0x20] sm:$0xff]
    %v60 = vld [vmem:[#allocation5 + $0x28] sm:$0xff]
    %v61 = vld [vmem:[#allocation5 + $0x30] sm:$0xff]
    %v62 = vld [vmem:[#allocation5 + $0x38] sm:$0xff]
    %v63 = vld [vmem:[#allocation5 + $0x40] sm:$0xff]
    %v64 = vld [vmem:[#allocation5 + $0x48] sm:$0xff]
    %v65 = vld [vmem:[#allocation5 + $0x50] sm:$0xff]
    %v66 = vld [vmem:[#allocation5 + $0x58] sm:$0xff]
    %v67 = vld [vmem:[#allocation5 + $0x60] sm:$0xff]
    %v68 = vld [vmem:[#allocation5 + $0x68] sm:$0xff]
    %v69 = vld [vmem:[#allocation5 + $0x70] sm:$0xff]
    %v70 = vld [vmem:[#allocation5 + $0x78] sm:$0xff]
    %v71 = vld [vmem:[#allocation5 + $0x80] sm:$0xff]
    %v72 = vld [vmem:[#allocation5 + $0x88] sm:$0xff]
    %v73 = vld [vmem:[#allocation5 + $0x90] sm:$0xff]
    %v74 = vld [vmem:[#allocation5 + $0x98] sm:$0xff]
    %v75 = vld [vmem:[#allocation5 + $0xa0] sm:$0xff]
    %v76 = vld [vmem:[#allocation5 + $0xa8] sm:$0xff]
    %v77 = vld [vmem:[#allocation5 + $0xb0] sm:$0xff]
    %v78 = vld [vmem:[#allocation5 + $0xb8] sm:$0xff]
    %v79 = vld [vmem:[#allocation5 + $0xc0] sm:$0xff]
    %v80 = vld [vmem:[#allocation5 + $0xc8] sm:$0xff]
    %v81 = vld [vmem:[#allocation5 + $0xd0] sm:$0xff]
    %v82 = vld [vmem:[#allocation5 + $0xd8] sm:$0xff]
    %v83 = vld [vmem:[#allocation5 + $0xe0] sm:$0xff]
    %v84 = vld [vmem:[#allocation5 + $0xe8] sm:$0xff]
    %v85 = vld [vmem:[#allocation5 + $0xf0] sm:$0xff]
    %v86 = vld [vmem:[#allocation5 + $0xf8] sm:$0xff]
    %v87 = vld [vmem:[#allocation5 + $0x100] sm:$0xff]
    %v88 = vld [vmem:[#allocation5 + $0x108] sm:$0xff]
    %v89 = vld [vmem:[#allocation5 + $0x110] sm:$0xff]
    %v90 = vld [vmem:[#allocation5 + $0x118] sm:$0xff]
    %v91 = vld [vmem:[#allocation5 + $0x120] sm:$0xff]
    %v92 = vld [vmem:[#allocation5 + $0x128] sm:$0xff]
    %v93 = vld [vmem:[#allocation5 + $0x130] sm:$0xff]
    %v94 = vld [vmem:[#allocation5 + $0x138] sm:$0xff]
    %v95 = vld [vmem:[#allocation5 + $0x140] sm:$0xff]
    %v96 = vld [vmem:[#allocation5 + $0x148] sm:$0xff]
    %v97 = vld [vmem:[#allocation5 + $0x150] sm:$0xff]
    %v98 = vld [vmem:[#allocation5 + $0x158] sm:$0xff]
    %v99 = vld [vmem:[#allocation5 + $0x160] sm:$0xff]
    %v100 = vld [vmem:[#allocation5 + $0x168] sm:$0xff]
    %v101 = vld [vmem:[#allocation5 + $0x170] sm:$0xff]
    %v102 = vld [vmem:[#allocation5 + $0x178] sm:$0xff]
    %v103 = vld [vmem:[%s2] sm:$0x1]
    %v105 = vlaneseq
    %v106 = vshrl.u32 %v105, 7
    %v107 = vsub.s32 0, %v106
    %v108 = vrot.slane %v103, %v107
    %v110 = vld [vmem:[#allocation7] sm:$0xff]
    %v111 = vld [vmem:[#allocation2] sm:$0xff]
    %v112 = vld [vmem:[#allocation2 + $0x8] sm:$0xff]
    %v113 = vld [vmem:[#allocation2 + $0x10] sm:$0xff]
    %114 = vmatprep.subr.mxu0 %v101
    %115 = vmatpush1.msra.mxu0 %v100
    %116 = vmatprep.subr.mxu0 %v98
    %117 = vmatpush1.msra.mxu0 %v97
    %118 = vmatprep.subr.mxu0 %v95
    %119 = vmatpush1.msra.mxu0 %v94
    %120 = vmatprep.subr.mxu0 %v92
    %121 = vmatpush1.msra.mxu0 %v91
    %122 = vmatprep.subr.mxu0 %v89
    %123 = vmatpush1.msra.mxu0 %v88
    %124 = vmatprep.subr.mxu0 %v86
    %125 = vmatpush1.msra.mxu0 %v85
    %126 = vmatprep.subr.mxu0 %v83
    %127 = vmatpush1.msra.mxu0 %v82
    %128 = vmatprep.subr.mxu0 %v80
    %129 = vmatpush1.msra.mxu0 %v79
    %130 = vmatprep.subr.mxu0 %v77
    %131 = vmatpush1.msra.mxu0 %v76
    %132 = vmatprep.subr.mxu0 %v74
    %133 = vmatpush1.msra.mxu0 %v73
    %134 = vmatprep.subr.mxu0 %v71
    %135 = vmatpush1.msra.mxu0 %v70
    %136 = vmatprep.subr.mxu0 %v68
    %137 = vmatpush1.msra.mxu0 %v67
    %138 = vmatprep.subr.mxu0 %v65
    %139 = vmatpush1.msra.mxu0 %v64
    %140 = vmatprep.subr.mxu0 %v62
    %141 = vmatpush1.msra.mxu0 %v61
    %142 = vmatprep.subr.mxu0 %v59
    %143 = vmatpush1.msra.mxu0 %v58
    %144 = vmatprep.subr.mxu0 %v56
    %145 = vmatpush1.msra.mxu0 %v55
    %146 = vmatprep.subr.mxu0 0.0
    %147 = vmatpush2.msra.mxu0 0.0
    %148 = vmatprep.subr.mxu0 0.0
    %149 = vmatpush2.msra.mxu0 0.0
    %150 = vmatprep.subr.mxu0 0.0
    %151 = vmatpush2.msra.mxu0 0.0
    %152 = vmatprep.subr.mxu0 0.0
    %153 = vmatpush2.msra.mxu0 0.0
    %154 = vmatprep.subr.mxu0 0.0
    %155 = vmatpush2.msra.mxu0 0.0
    %156 = vmatprep.subr.mxu0 0.0
    %157 = vmatpush2.msra.mxu0 0.0
    %158 = vmatprep.subr.mxu0 0.0
    %159 = vmatpush2.msra.mxu0 0.0
    %160 = vmatprep.subr.mxu0 0.0
    %161 = vmatpush2.msra.mxu0 0.0
    %162 = vmatprep.subr.mxu0 0.0
    %163 = vmatpush2.msra.mxu0 0.0
    %164 = vmatprep.subr.mxu0 0.0
    %165 = vmatpush2.msra.mxu0 0.0
    %166 = vmatprep.subr.mxu0 0.0
    %167 = vmatpush2.msra.mxu0 0.0
    %168 = vmatprep.subr.mxu0 0.0
    %169 = vmatpush2.msra.mxu0 0.0
    %170 = vmatprep.subr.mxu0 0.0
    %171 = vmatpush2.msra.mxu0 0.0
    %172 = vmatprep.subr.mxu0 0.0
    %173 = vmatpush2.msra.mxu0 0.0
    %174 = vmatprep.subr.mxu0 0.0
    %175 = vmatpush2.msra.mxu0 0.0
    %176 = vmatprep.subr.mxu0 0.0
    %177 = vmatpush2.msra.mxu0 0.0
    %178 = vmatprep.mubr.f32.mxu0 0.0
    %179 = vmatmul.mubr.f32.gmra.mxu0 %v110
    %v180 = vpop.f32.mrf.mxu0
    %v181 = vadd.f32 0.0, %v180
    %v182 = vpop.f32.mrf.mxu0
    %v183 = vadd.f32 0.0, %v182
    %184 = vdwg.mxu0
    %185 = vmatprep.subr.mxu0 0.0
    %186 = vmatpush1.msra.mxu0 %v102
    %187 = vmatprep.subr.mxu0 0.0
    %188 = vmatpush1.msra.mxu0 %v99
    %189 = vmatprep.subr.mxu0 0.0
    %190 = vmatpush1.msra.mxu0 %v96
    %191 = vmatprep.subr.mxu0 0.0
    %192 = vmatpush1.msra.mxu0 %v93
    %193 = vmatprep.subr.mxu0 0.0
    %194 = vmatpush1.msra.mxu0 %v90
    %195 = vmatprep.subr.mxu0 0.0
    %196 = vmatpush1.msra.mxu0 %v87
    %197 = vmatprep.subr.mxu0 0.0
    %198 = vmatpush1.msra.mxu0 %v84
    %199 = vmatprep.subr.mxu0 0.0
    %200 = vmatpush1.msra.mxu0 %v81
    %201 = vmatprep.subr.mxu0 0.0
    %202 = vmatpush1.msra.mxu0 %v78
    %203 = vmatprep.subr.mxu0 0.0
    %204 = vmatpush1.msra.mxu0 %v75
    %205 = vmatprep.subr.mxu0 0.0
    %206 = vmatpush1.msra.mxu0 %v72
    %207 = vmatprep.subr.mxu0 0.0
    %208 = vmatpush1.msra.mxu0 %v69
    %209 = vmatprep.subr.mxu0 0.0
    %210 = vmatpush1.msra.mxu0 %v66
    %211 = vmatprep.subr.mxu0 0.0
    %212 = vmatpush1.msra.mxu0 %v63
    %213 = vmatprep.subr.mxu0 0.0
    %214 = vmatpush1.msra.mxu0 %v60
    %215 = vmatprep.subr.mxu0 0.0
    %216 = vmatpush1.msra.mxu0 %v57
    %217 = vmatprep.subr.mxu0 0.0
    %218 = vmatpush2.msra.mxu0 0.0
    %219 = vmatprep.subr.mxu0 0.0
    %220 = vmatpush2.msra.mxu0 0.0
    %221 = vmatprep.subr.mxu0 0.0
    %222 = vmatpush2.msra.mxu0 0.0
    %223 = vmatprep.subr.mxu0 0.0
    %224 = vmatpush2.msra.mxu0 0.0
    %225 = vmatprep.subr.mxu0 0.0
    %226 = vmatpush2.msra.mxu0 0.0
    %227 = vmatprep.subr.mxu0 0.0
    %228 = vmatpush2.msra.mxu0 0.0
    %229 = vmatprep.subr.mxu0 0.0
    %230 = vmatpush2.msra.mxu0 0.0
    %231 = vmatprep.subr.mxu0 0.0
    %232 = vmatpush2.msra.mxu0 0.0
    %233 = vmatprep.subr.mxu0 0.0
    %234 = vmatpush2.msra.mxu0 0.0
    %235 = vmatprep.subr.mxu0 0.0
    %236 = vmatpush2.msra.mxu0 0.0
    %237 = vmatprep.subr.mxu0 0.0
    %238 = vmatpush2.msra.mxu0 0.0
    %239 = vmatprep.subr.mxu0 0.0
    %240 = vmatpush2.msra.mxu0 0.0
    %241 = vmatprep.subr.mxu0 0.0
    %242 = vmatpush2.msra.mxu0 0.0
    %243 = vmatprep.subr.mxu0 0.0
    %244 = vmatpush2.msra.mxu0 0.0
    %245 = vmatprep.subr.mxu0 0.0
    %246 = vmatpush2.msra.mxu0 0.0
    %247 = vmatprep.subr.mxu0 0.0
    %248 = vmatpush2.msra.mxu0 0.0
    %249 = vmatprep.mubr.f32.mxu0 0.0
    %250 = vmatmul.mubr.f32.gmra.mxu0 %v110
    %v251 = vpop.f32.mrf.mxu0
    %v252 = vadd.f32 0.0, %v251
    %v253 = vpop.f32.mrf.mxu0
    %254 = vdwg.mxu0
    %v255 = vadd.f32 %v111, %v181
    %v256 = vxor.u32 %v255, 2147483648
    %v257 = vmul.f32 %v256, 1.442695
    %v258 = vpow.pop %v257
    %v259 = vadd.f32 %v258, 1.0
    %v260 = vrcp.pop %v259
    %v261 = vmul.f32 1.0, %v260
    %v262 = vadd.f32 %v112, %v183
    %v263 = vxor.u32 %v262, 2147483648
    %v264 = vmul.f32 %v263, 1.442695
    %v265 = vpow.pop %v264
    %v266 = vadd.f32 %v265, 1.0
    %v267 = vrcp.pop %v266
    %v268 = vmul.f32 1.0, %v267
    %v269 = vadd.f32 %v252, %v108
    %v270 = vmul.f32 %v261, %v269
    %v271 = vadd.f32 %v113, %v270
    %v272 = vtanh.pop %v271
    %v273 = vsub.f32 %v110, %v272
    %v274 = vmul.f32 %v268, %v273
    %v275 = vadd.f32 %v272, %v274
    %s276 = scalar_lea.vmem [#allocation2], 24
    %v277 = vld [vmem:[%s276] sm:$0xff]
    %v278 = vld [vmem:[%s276 + $0x8] sm:$0xff]
    %v279 = vld [vmem:[%s276 + $0x10] sm:$0xff]
    %280 = vmatprep.subr.mxu0 %v101
    %281 = vmatpush1.msra.mxu0 %v100
    %282 = vmatprep.subr.mxu0 %v98
    %283 = vmatpush1.msra.mxu0 %v97
    %284 = vmatprep.subr.mxu0 %v95
    %285 = vmatpush1.msra.mxu0 %v94
    %286 = vmatprep.subr.mxu0 %v92
    %287 = vmatpush1.msra.mxu0 %v91
    %288 = vmatprep.subr.mxu0 %v89
    %289 = vmatpush1.msra.mxu0 %v88
    %290 = vmatprep.subr.mxu0 %v86
    %291 = vmatpush1.msra.mxu0 %v85
    %292 = vmatprep.subr.mxu0 %v83
    %293 = vmatpush1.msra.mxu0 %v82
    %294 = vmatprep.subr.mxu0 %v80
    %295 = vmatpush1.msra.mxu0 %v79
    %296 = vmatprep.subr.mxu0 %v77
    %297 = vmatpush1.msra.mxu0 %v76
    %298 = vmatprep.subr.mxu0 %v74
    %299 = vmatpush1.msra.mxu0 %v73
    %300 = vmatprep.subr.mxu0 %v71
    %301 = vmatpush1.msra.mxu0 %v70
    %302 = vmatprep.subr.mxu0 %v68
    %303 = vmatpush1.msra.mxu0 %v67
    %304 = vmatprep.subr.mxu0 %v65
    %305 = vmatpush1.msra.mxu0 %v64
    %306 = vmatprep.subr.mxu0 %v62
    %307 = vmatpush1.msra.mxu0 %v61
    %308 = vmatprep.subr.mxu0 %v59
    %309 = vmatpush1.msra.mxu0 %v58
    %310 = vmatprep.subr.mxu0 %v56
    %311 = vmatpush1.msra.mxu0 %v55
    %312 = vmatprep.subr.mxu0 0.0
    %313 = vmatpush2.msra.mxu0 0.0
    %314 = vmatprep.subr.mxu0 0.0
    %315 = vmatpush2.msra.mxu0 0.0
    %316 = vmatprep.subr.mxu0 0.0
    %317 = vmatpush2.msra.mxu0 0.0
    %318 = vmatprep.subr.mxu0 0.0
    %319 = vmatpush2.msra.mxu0 0.0
    %320 = vmatprep.subr.mxu0 0.0
    %321 = vmatpush2.msra.mxu0 0.0
    %322 = vmatprep.subr.mxu0 0.0
    %323 = vmatpush2.msra.mxu0 0.0
    %324 = vmatprep.subr.mxu0 0.0
    %325 = vmatpush2.msra.mxu0 0.0
    %326 = vmatprep.subr.mxu0 0.0
    %327 = vmatpush2.msra.mxu0 0.0
    %328 = vmatprep.subr.mxu0 0.0
    %329 = vmatpush2.msra.mxu0 0.0
    %330 = vmatprep.subr.mxu0 0.0
    %331 = vmatpush2.msra.mxu0 0.0
    %332 = vmatprep.subr.mxu0 0.0
    %333 = vmatpush2.msra.mxu0 0.0
    %334 = vmatprep.subr.mxu0 0.0
    %335 = vmatpush2.msra.mxu0 0.0
    %336 = vmatprep.subr.mxu0 0.0
    %337 = vmatpush2.msra.mxu0 0.0
    %338 = vmatprep.subr.mxu0 0.0
    %339 = vmatpush2.msra.mxu0 0.0
    %340 = vmatprep.subr.mxu0 0.0
    %341 = vmatpush2.msra.mxu0 0.0
    %342 = vmatprep.subr.mxu0 0.0
    %343 = vmatpush2.msra.mxu0 0.0
    %344 = vmatprep.mubr.f32.mxu0 0.0
    %345 = vmatmul.mubr.f32.gmra.mxu0 %v275
    %v346 = vpop.f32.mrf.mxu0
    %v347 = vadd.f32 0.0, %v346
    %v348 = vpop.f32.mrf.mxu0
    %v349 = vadd.f32 0.0, %v348
    %350 = vdwg.mxu0
    %351 = vmatprep.subr.mxu0 0.0
    %352 = vmatpush1.msra.mxu0 %v102
    %353 = vmatprep.subr.mxu0 0.0
    %354 = vmatpush1.msra.mxu0 %v99
    %355 = vmatprep.subr.mxu0 0.0
    %356 = vmatpush1.msra.mxu0 %v96
    %357 = vmatprep.subr.mxu0 0.0
    %358 = vmatpush1.msra.mxu0 %v93
    %359 = vmatprep.subr.mxu0 0.0
    %360 = vmatpush1.msra.mxu0 %v90
    %361 = vmatprep.subr.mxu0 0.0
    %362 = vmatpush1.msra.mxu0 %v87
    %363 = vmatprep.subr.mxu0 0.0
    %364 = vmatpush1.msra.mxu0 %v84
    %365 = vmatprep.subr.mxu0 0.0
    %366 = vmatpush1.msra.mxu0 %v81
    %367 = vmatprep.subr.mxu0 0.0
    %368 = vmatpush1.msra.mxu0 %v78
    %369 = vmatprep.subr.mxu0 0.0
    %370 = vmatpush1.msra.mxu0 %v75
    %371 = vmatprep.subr.mxu0 0.0
    %372 = vmatpush1.msra.mxu0 %v72
    %373 = vmatprep.subr.mxu0 0.0
    %374 = vmatpush1.msra.mxu0 %v69
    %375 = vmatprep.subr.mxu0 0.0
    %376 = vmatpush1.msra.mxu0 %v66
    %377 = vmatprep.subr.mxu0 0.0
    %378 = vmatpush1.msra.mxu0 %v63
    %379 = vmatprep.subr.mxu0 0.0
    %380 = vmatpush1.msra.mxu0 %v60
    %381 = vmatprep.subr.mxu0 0.0
    %382 = vmatpush1.msra.mxu0 %v57
    %383 = vmatprep.subr.mxu0 0.0
    %384 = vmatpush2.msra.mxu0 0.0
    %385 = vmatprep.subr.mxu0 0.0
    %386 = vmatpush2.msra.mxu0 0.0
    %387 = vmatprep.subr.mxu0 0.0
    %388 = vmatpush2.msra.mxu0 0.0
    %389 = vmatprep.subr.mxu0 0.0
    %390 = vmatpush2.msra.mxu0 0.0
    %391 = vmatprep.subr.mxu0 0.0
    %392 = vmatpush2.msra.mxu0 0.0
    %393 = vmatprep.subr.mxu0 0.0
    %394 = vmatpush2.msra.mxu0 0.0
    %395 = vmatprep.subr.mxu0 0.0
    %396 = vmatpush2.msra.mxu0 0.0
    %397 = vmatprep.subr.mxu0 0.0
    %398 = vmatpush2.msra.mxu0 0.0
    %399 = vmatprep.subr.mxu0 0.0
    %400 = vmatpush2.msra.mxu0 0.0
    %401 = vmatprep.subr.mxu0 0.0
    %402 = vmatpush2.msra.mxu0 0.0
    %403 = vmatprep.subr.mxu0 0.0
    %404 = vmatpush2.msra.mxu0 0.0
    %405 = vmatprep.subr.mxu0 0.0
    %406 = vmatpush2.msra.mxu0 0.0
    %407 = vmatprep.subr.mxu0 0.0
    %408 = vmatpush2.msra.mxu0 0.0
    %409 = vmatprep.subr.mxu0 0.0
    %410 = vmatpush2.msra.mxu0 0.0
    %411 = vmatprep.subr.mxu0 0.0
    %412 = vmatpush2.msra.mxu0 0.0
    %413 = vmatprep.subr.mxu0 0.0
    %414 = vmatpush2.msra.mxu0 0.0
    %415 = vmatprep.mubr.f32.mxu0 0.0
    %416 = vmatmul.mubr.f32.gmra.mxu0 %v275
    %v417 = vpop.f32.mrf.mxu0
    %v418 = vadd.f32 0.0, %v417
    %v419 = vpop.f32.mrf.mxu0
    %420 = vdwg.mxu0
    %v421 = vadd.f32 %v277, %v347
    %v422 = vxor.u32 %v421, 2147483648
    %v423 = vmul.f32 %v422, 1.442695
    %v424 = vpow.pop %v423
    %v425 = vadd.f32 %v424, 1.0
    %v426 = vrcp.pop %v425
    %v427 = vmul.f32 1.0, %v426
    %v428 = vadd.f32 %v278, %v349
    %v429 = vxor.u32 %v428, 2147483648
    %v430 = vmul.f32 %v429, 1.442695
    %v431 = vpow.pop %v430
    %v432 = vadd.f32 %v431, 1.0
    %v433 = vrcp.pop %v432
    %v434 = vmul.f32 1.0, %v433
    %v435 = vadd.f32 %v418, %v108
    %v436 = vmul.f32 %v427, %v435
    %v437 = vadd.f32 %v279, %v436
    %v438 = vtanh.pop %v437
    %v439 = vsub.f32 %v275, %v438
    %v440 = vmul.f32 %v434, %v439
    %v441 = vadd.f32 %v438, %v440
    %s442 = scalar_lea.vmem [#allocation2], 48
    %v443 = vld [vmem:[%s442] sm:$0xff]
    %v444 = vld [vmem:[%s442 + $0x8] sm:$0xff]
    %v445 = vld [vmem:[%s442 + $0x10] sm:$0xff]
    %446 = vmatprep.subr.mxu0 %v101
    %447 = vmatpush1.msra.mxu0 %v100
    %448 = vmatprep.subr.mxu0 %v98
    %449 = vmatpush1.msra.mxu0 %v97
    %450 = vmatprep.subr.mxu0 %v95
    %451 = vmatpush1.msra.mxu0 %v94
    %452 = vmatprep.subr.mxu0 %v92
    %453 = vmatpush1.msra.mxu0 %v91
    %454 = vmatprep.subr.mxu0 %v89
    %455 = vmatpush1.msra.mxu0 %v88
    %456 = vmatprep.subr.mxu0 %v86
    %457 = vmatpush1.msra.mxu0 %v85
    %458 = vmatprep.subr.mxu0 %v83
    %459 = vmatpush1.msra.mxu0 %v82
    %460 = vmatprep.subr.mxu0 %v80
    %461 = vmatpush1.msra.mxu0 %v79
    %462 = vmatprep.subr.mxu0 %v77
    %463 = vmatpush1.msra.mxu0 %v76
    %464 = vmatprep.subr.mxu0 %v74
    %465 = vmatpush1.msra.mxu0 %v73
    %466 = vmatprep.subr.mxu0 %v71
    %467 = vmatpush1.msra.mxu0 %v70
    %468 = vmatprep.subr.mxu0 %v68
    %469 = vmatpush1.msra.mxu0 %v67
    %470 = vmatprep.subr.mxu0 %v65
    %471 = vmatpush1.msra.mxu0 %v64
    %472 = vmatprep.subr.mxu0 %v62
    %473 = vmatpush1.msra.mxu0 %v61
    %474 = vmatprep.subr.mxu0 %v59
    %475 = vmatpush1.msra.mxu0 %v58
    %476 = vmatprep.subr.mxu0 %v56
    %477 = vmatpush1.msra.mxu0 %v55
    %478 = vmatprep.subr.mxu0 0.0
    %479 = vmatpush2.msra.mxu0 0.0
    %480 = vmatprep.subr.mxu0 0.0
    %481 = vmatpush2.msra.mxu0 0.0
    %482 = vmatprep.subr.mxu0 0.0
    %483 = vmatpush2.msra.mxu0 0.0
    %484 = vmatprep.subr.mxu0 0.0
    %485 = vmatpush2.msra.mxu0 0.0
    %486 = vmatprep.subr.mxu0 0.0
    %487 = vmatpush2.msra.mxu0 0.0
    %488 = vmatprep.subr.mxu0 0.0
    %489 = vmatpush2.msra.mxu0 0.0
    %490 = vmatprep.subr.mxu0 0.0
    %491 = vmatpush2.msra.mxu0 0.0
    %492 = vmatprep.subr.mxu0 0.0
    %493 = vmatpush2.msra.mxu0 0.0
    %494 = vmatprep.subr.mxu0 0.0
    %495 = vmatpush2.msra.mxu0 0.0
    %496 = vmatprep.subr.mxu0 0.0
    %497 = vmatpush2.msra.mxu0 0.0
    %498 = vmatprep.subr.mxu0 0.0
    %499 = vmatpush2.msra.mxu0 0.0
    %500 = vmatprep.subr.mxu0 0.0
    %501 = vmatpush2.msra.mxu0 0.0
    %502 = vmatprep.subr.mxu0 0.0
    %503 = vmatpush2.msra.mxu0 0.0
    %504 = vmatprep.subr.mxu0 0.0
    %505 = vmatpush2.msra.mxu0 0.0
    %506 = vmatprep.subr.mxu0 0.0
    %507 = vmatpush2.msra.mxu0 0.0
    %508 = vmatprep.subr.mxu0 0.0
    %509 = vmatpush2.msra.mxu0 0.0
    %510 = vmatprep.mubr.f32.mxu0 0.0
    %511 = vmatmul.mubr.f32.gmra.mxu0 %v441
    %v512 = vpop.f32.mrf.mxu0
    %v513 = vadd.f32 0.0, %v512
    %v514 = vpop.f32.mrf.mxu0
    %v515 = vadd.f32 0.0, %v514
    %516 = vdwg.mxu0
    %517 = vmatprep.subr.mxu0 0.0
    %518 = vmatpush1.msra.mxu0 %v102
    %519 = vmatprep.subr.mxu0 0.0
    %520 = vmatpush1.msra.mxu0 %v99
    %521 = vmatprep.subr.mxu0 0.0
    %522 = vmatpush1.msra.mxu0 %v96
    %523 = vmatprep.subr.mxu0 0.0
    %524 = vmatpush1.msra.mxu0 %v93
    %525 = vmatprep.subr.mxu0 0.0
    %526 = vmatpush1.msra.mxu0 %v90
    %527 = vmatprep.subr.mxu0 0.0
    %528 = vmatpush1.msra.mxu0 %v87
    %529 = vmatprep.subr.mxu0 0.0
    %530 = vmatpush1.msra.mxu0 %v84
    %531 = vmatprep.subr.mxu0 0.0
    %532 = vmatpush1.msra.mxu0 %v81
    %533 = vmatprep.subr.mxu0 0.0
    %534 = vmatpush1.msra.mxu0 %v78
    %535 = vmatprep.subr.mxu0 0.0
    %536 = vmatpush1.msra.mxu0 %v75
    %537 = vmatprep.subr.mxu0 0.0
    %538 = vmatpush1.msra.mxu0 %v72
    %539 = vmatprep.subr.mxu0 0.0
    %540 = vmatpush1.msra.mxu0 %v69
    %541 = vmatprep.subr.mxu0 0.0
    %542 = vmatpush1.msra.mxu0 %v66
    %543 = vmatprep.subr.mxu0 0.0
    %544 = vmatpush1.msra.mxu0 %v63
    %545 = vmatprep.subr.mxu0 0.0
    %546 = vmatpush1.msra.mxu0 %v60
    %547 = vmatprep.subr.mxu0 0.0
    %548 = vmatpush1.msra.mxu0 %v57
    %549 = vmatprep.subr.mxu0 0.0
    %550 = vmatpush2.msra.mxu0 0.0
    %551 = vmatprep.subr.mxu0 0.0
    %552 = vmatpush2.msra.mxu0 0.0
    %553 = vmatprep.subr.mxu0 0.0
    %554 = vmatpush2.msra.mxu0 0.0
    %555 = vmatprep.subr.mxu0 0.0
    %556 = vmatpush2.msra.mxu0 0.0
    %557 = vmatprep.subr.mxu0 0.0
    %558 = vmatpush2.msra.mxu0 0.0
    %559 = vmatprep.subr.mxu0 0.0
    %560 = vmatpush2.msra.mxu0 0.0
    %561 = vmatprep.subr.mxu0 0.0
    %562 = vmatpush2.msra.mxu0 0.0
    %563 = vmatprep.subr.mxu0 0.0
    %564 = vmatpush2.msra.mxu0 0.0
    %565 = vmatprep.subr.mxu0 0.0
    %566 = vmatpush2.msra.mxu0 0.0
    %567 = vmatprep.subr.mxu0 0.0
    %568 = vmatpush2.msra.mxu0 0.0
    %569 = vmatprep.subr.mxu0 0.0
    %570 = vmatpush2.msra.mxu0 0.0
    %571 = vmatprep.subr.mxu0 0.0
    %572 = vmatpush2.msra.mxu0 0.0
    %573 = vmatprep.subr.mxu0 0.0
    %574 = vmatpush2.msra.mxu0 0.0
    %575 = vmatprep.subr.mxu0 0.0
    %576 = vmatpush2.msra.mxu0 0.0
    %577 = vmatprep.subr.mxu0 0.0
    %578 = vmatpush2.msra.mxu0 0.0
    %579 = vmatprep.subr.mxu0 0.0
    %580 = vmatpush2.msra.mxu0 0.0
    %581 = vmatprep.mubr.f32.mxu0 0.0
    %582 = vmatmul.mubr.f32.gmra.mxu0 %v441
    %v583 = vpop.f32.mrf.mxu0
    %v584 = vadd.f32 0.0, %v583
    %v585 = vpop.f32.mrf.mxu0
    %586 = vdwg.mxu0
    %v587 = vadd.f32 %v443, %v513
    %v588 = vxor.u32 %v587, 2147483648
    %v589 = vmul.f32 %v588, 1.442695
    %v590 = vpow.pop %v589
    %v591 = vadd.f32 %v590, 1.0
    %v592 = vrcp.pop %v591
    %v593 = vmul.f32 1.0, %v592
    %v594 = vadd.f32 %v444, %v515
    %v595 = vxor.u32 %v594, 2147483648
    %v596 = vmul.f32 %v595, 1.442695
    %v597 = vpow.pop %v596
    %v598 = vadd.f32 %v597, 1.0
    %v599 = vrcp.pop %v598
    %v600 = vmul.f32 1.0, %v599
    %v601 = vadd.f32 %v584, %v108
    %v602 = vmul.f32 %v593, %v601
    %v603 = vadd.f32 %v445, %v602
    %v604 = vtanh.pop %v603
    %v605 = vsub.f32 %v441, %v604
    %v606 = vmul.f32 %v600, %v605
    %v607 = vadd.f32 %v604, %v606
    %s608 = scalar_lea.vmem [#allocation2], 72
    %v609 = vld [vmem:[%s608] sm:$0xff]
    %v610 = vld [vmem:[%s608 + $0x8] sm:$0xff]
    %v611 = vld [vmem:[%s608 + $0x10] sm:$0xff]
    %612 = vmatprep.subr.mxu0 %v101
    %613 = vmatpush1.msra.mxu0 %v100
    %614 = vmatprep.subr.mxu0 %v98
    %615 = vmatpush1.msra.mxu0 %v97
    %616 = vmatprep.subr.mxu0 %v95
    %617 = vmatpush1.msra.mxu0 %v94
    %618 = vmatprep.subr.mxu0 %v92
    %619 = vmatpush1.msra.mxu0 %v91
    %620 = vmatprep.subr.mxu0 %v89
    %621 = vmatpush1.msra.mxu0 %v88
    %622 = vmatprep.subr.mxu0 %v86
    %623 = vmatpush1.msra.mxu0 %v85
    %624 = vmatprep.subr.mxu0 %v83
    %625 = vmatpush1.msra.mxu0 %v82
    %626 = vmatprep.subr.mxu0 %v80
    %627 = vmatpush1.msra.mxu0 %v79
    %628 = vmatprep.subr.mxu0 %v77
    %629 = vmatpush1.msra.mxu0 %v76
    %630 = vmatprep.subr.mxu0 %v74
    %631 = vmatpush1.msra.mxu0 %v73
    %632 = vmatprep.subr.mxu0 %v71
    %633 = vmatpush1.msra.mxu0 %v70
    %634 = vmatprep.subr.mxu0 %v68
    %635 = vmatpush1.msra.mxu0 %v67
    %636 = vmatprep.subr.mxu0 %v65
    %637 = vmatpush1.msra.mxu0 %v64
    %638 = vmatprep.subr.mxu0 %v62
    %639 = vmatpush1.msra.mxu0 %v61
    %640 = vmatprep.subr.mxu0 %v59
    %641 = vmatpush1.msra.mxu0 %v58
    %642 = vmatprep.subr.mxu0 %v56
    %643 = vmatpush1.msra.mxu0 %v55
    %644 = vmatprep.subr.mxu0 0.0
    %645 = vmatpush2.msra.mxu0 0.0
    %646 = vmatprep.subr.mxu0 0.0
    %647 = vmatpush2.msra.mxu0 0.0
    %648 = vmatprep.subr.mxu0 0.0
    %649 = vmatpush2.msra.mxu0 0.0
    %650 = vmatprep.subr.mxu0 0.0
    %651 = vmatpush2.msra.mxu0 0.0
    %652 = vmatprep.subr.mxu0 0.0
    %653 = vmatpush2.msra.mxu0 0.0
    %654 = vmatprep.subr.mxu0 0.0
    %655 = vmatpush2.msra.mxu0 0.0
    %656 = vmatprep.subr.mxu0 0.0
    %657 = vmatpush2.msra.mxu0 0.0
    %658 = vmatprep.subr.mxu0 0.0
    %659 = vmatpush2.msra.mxu0 0.0
    %660 = vmatprep.subr.mxu0 0.0
    %661 = vmatpush2.msra.mxu0 0.0
    %662 = vmatprep.subr.mxu0 0.0
    %663 = vmatpush2.msra.mxu0 0.0
    %664 = vmatprep.subr.mxu0 0.0
    %665 = vmatpush2.msra.mxu0 0.0
    %666 = vmatprep.subr.mxu0 0.0
    %667 = vmatpush2.msra.mxu0 0.0
    %668 = vmatprep.subr.mxu0 0.0
    %669 = vmatpush2.msra.mxu0 0.0
    %670 = vmatprep.subr.mxu0 0.0
    %671 = vmatpush2.msra.mxu0 0.0
    %672 = vmatprep.subr.mxu0 0.0
    %673 = vmatpush2.msra.mxu0 0.0
    %674 = vmatprep.subr.mxu0 0.0
    %675 = vmatpush2.msra.mxu0 0.0
    %676 = vmatprep.mubr.f32.mxu0 0.0
    %677 = vmatmul.mubr.f32.gmra.mxu0 %v607
    %v678 = vpop.f32.mrf.mxu0
    %v679 = vadd.f32 0.0, %v678
    %v680 = vpop.f32.mrf.mxu0
    %v681 = vadd.f32 0.0, %v680
    %682 = vdwg.mxu0
    %683 = vmatprep.subr.mxu0 0.0
    %684 = vmatpush1.msra.mxu0 %v102
    %685 = vmatprep.subr.mxu0 0.0
    %686 = vmatpush1.msra.mxu0 %v99
    %687 = vmatprep.subr.mxu0 0.0
    %688 = vmatpush1.msra.mxu0 %v96
    %689 = vmatprep.subr.mxu0 0.0
    %690 = vmatpush1.msra.mxu0 %v93
    %691 = vmatprep.subr.mxu0 0.0
    %692 = vmatpush1.msra.mxu0 %v90
    %693 = vmatprep.subr.mxu0 0.0
    %694 = vmatpush1.msra.mxu0 %v87
    %695 = vmatprep.subr.mxu0 0.0
    %696 = vmatpush1.msra.mxu0 %v84
    %697 = vmatprep.subr.mxu0 0.0
    %698 = vmatpush1.msra.mxu0 %v81
    %699 = vmatprep.subr.mxu0 0.0
    %700 = vmatpush1.msra.mxu0 %v78
    %701 = vmatprep.subr.mxu0 0.0
    %702 = vmatpush1.msra.mxu0 %v75
    %703 = vmatprep.subr.mxu0 0.0
    %704 = vmatpush1.msra.mxu0 %v72
    %705 = vmatprep.subr.mxu0 0.0
    %706 = vmatpush1.msra.mxu0 %v69
    %707 = vmatprep.subr.mxu0 0.0
    %708 = vmatpush1.msra.mxu0 %v66
    %709 = vmatprep.subr.mxu0 0.0
    %710 = vmatpush1.msra.mxu0 %v63
    %711 = vmatprep.subr.mxu0 0.0
    %712 = vmatpush1.msra.mxu0 %v60
    %713 = vmatprep.subr.mxu0 0.0
    %714 = vmatpush1.msra.mxu0 %v57
    %715 = vmatprep.subr.mxu0 0.0
    %716 = vmatpush2.msra.mxu0 0.0
    %717 = vmatprep.subr.mxu0 0.0
    %718 = vmatpush2.msra.mxu0 0.0
    %719 = vmatprep.subr.mxu0 0.0
    %720 = vmatpush2.msra.mxu0 0.0
    %721 = vmatprep.subr.mxu0 0.0
    %722 = vmatpush2.msra.mxu0 0.0
    %723 = vmatprep.subr.mxu0 0.0
    %724 = vmatpush2.msra.mxu0 0.0
    %725 = vmatprep.subr.mxu0 0.0
    %726 = vmatpush2.msra.mxu0 0.0
    %727 = vmatprep.subr.mxu0 0.0
    %728 = vmatpush2.msra.mxu0 0.0
    %729 = vmatprep.subr.mxu0 0.0
    %730 = vmatpush2.msra.mxu0 0.0
    %731 = vmatprep.subr.mxu0 0.0
    %732 = vmatpush2.msra.mxu0 0.0
    %733 = vmatprep.subr.mxu0 0.0
    %734 = vmatpush2.msra.mxu0 0.0
    %735 = vmatprep.subr.mxu0 0.0
    %736 = vmatpush2.msra.mxu0 0.0
    %737 = vmatprep.subr.mxu0 0.0
    %738 = vmatpush2.msra.mxu0 0.0
    %739 = vmatprep.subr.mxu0 0.0
    %740 = vmatpush2.msra.mxu0 0.0
    %741 = vmatprep.subr.mxu0 0.0
    %742 = vmatpush2.msra.mxu0 0.0
    %743 = vmatprep.subr.mxu0 0.0
    %744 = vmatpush2.msra.mxu0 0.0
    %745 = vmatprep.subr.mxu0 0.0
    %746 = vmatpush2.msra.mxu0 0.0
    %747 = vmatprep.mubr.f32.mxu0 0.0
    %748 = vmatmul.mubr.f32.gmra.mxu0 %v607
    %v749 = vpop.f32.mrf.mxu0
    %v750 = vadd.f32 0.0, %v749
    %v751 = vpop.f32.mrf.mxu0
    %752 = vdwg.mxu0
    %v753 = vadd.f32 %v609, %v679
    %v754 = vxor.u32 %v753, 2147483648
    %v755 = vmul.f32 %v754, 1.442695
    %v756 = vpow.pop %v755
    %v757 = vadd.f32 %v756, 1.0
    %v758 = vrcp.pop %v757
    %v759 = vmul.f32 1.0, %v758
    %v760 = vadd.f32 %v610, %v681
    %v761 = vxor.u32 %v760, 2147483648
    %v762 = vmul.f32 %v761, 1.442695
    %v763 = vpow.pop %v762
    %v764 = vadd.f32 %v763, 1.0
    %v765 = vrcp.pop %v764
    %v766 = vmul.f32 1.0, %v765
    %v767 = vadd.f32 %v750, %v108
    %v768 = vmul.f32 %v759, %v767
    %v769 = vadd.f32 %v611, %v768
    %v770 = vtanh.pop %v769
    %v771 = vsub.f32 %v607, %v770
    %v772 = vmul.f32 %v766, %v771
    %v773 = vadd.f32 %v770, %v772
    %s774 = scalar_lea.vmem [#allocation2], 96
    %v775 = vld [vmem:[%s774] sm:$0xff]
    %v776 = vld [vmem:[%s774 + $0x8] sm:$0xff]
    %v777 = vld [vmem:[%s774 + $0x10] sm:$0xff]
    %778 = vmatprep.subr.mxu0 %v101
    %779 = vmatpush1.msra.mxu0 %v100
    %780 = vmatprep.subr.mxu0 %v98
    %781 = vmatpush1.msra.mxu0 %v97
    %782 = vmatprep.subr.mxu0 %v95
    %783 = vmatpush1.msra.mxu0 %v94
    %784 = vmatprep.subr.mxu0 %v92
    %785 = vmatpush1.msra.mxu0 %v91
    %786 = vmatprep.subr.mxu0 %v89
    %787 = vmatpush1.msra.mxu0 %v88
    %788 = vmatprep.subr.mxu0 %v86
    %789 = vmatpush1.msra.mxu0 %v85
    %790 = vmatprep.subr.mxu0 %v83
    %791 = vmatpush1.msra.mxu0 %v82
    %792 = vmatprep.subr.mxu0 %v80
    %793 = vmatpush1.msra.mxu0 %v79
    %794 = vmatprep.subr.mxu0 %v77
    %795 = vmatpush1.msra.mxu0 %v76
    %796 = vmatprep.subr.mxu0 %v74
    %797 = vmatpush1.msra.mxu0 %v73
    %798 = vmatprep.subr.mxu0 %v71
    %799 = vmatpush1.msra.mxu0 %v70
    %800 = vmatprep.subr.mxu0 %v68
    %801 = vmatpush1.msra.mxu0 %v67
    %802 = vmatprep.subr.mxu0 %v65
    %803 = vmatpush1.msra.mxu0 %v64
    %804 = vmatprep.subr.mxu0 %v62
    %805 = vmatpush1.msra.mxu0 %v61
    %806 = vmatprep.subr.mxu0 %v59
    %807 = vmatpush1.msra.mxu0 %v58
    %808 = vmatprep.subr.mxu0 %v56
    %809 = vmatpush1.msra.mxu0 %v55
    %810 = vmatprep.subr.mxu0 0.0
    %811 = vmatpush2.msra.mxu0 0.0
    %812 = vmatprep.subr.mxu0 0.0
    %813 = vmatpush2.msra.mxu0 0.0
    %814 = vmatprep.subr.mxu0 0.0
    %815 = vmatpush2.msra.mxu0 0.0
    %816 = vmatprep.subr.mxu0 0.0
    %817 = vmatpush2.msra.mxu0 0.0
    %818 = vmatprep.subr.mxu0 0.0
    %819 = vmatpush2.msra.mxu0 0.0
    %820 = vmatprep.subr.mxu0 0.0
    %821 = vmatpush2.msra.mxu0 0.0
    %822 = vmatprep.subr.mxu0 0.0
    %823 = vmatpush2.msra.mxu0 0.0
    %824 = vmatprep.subr.mxu0 0.0
    %825 = vmatpush2.msra.mxu0 0.0
    %826 = vmatprep.subr.mxu0 0.0
    %827 = vmatpush2.msra.mxu0 0.0
    %828 = vmatprep.subr.mxu0 0.0
    %829 = vmatpush2.msra.mxu0 0.0
    %830 = vmatprep.subr.mxu0 0.0
    %831 = vmatpush2.msra.mxu0 0.0
    %832 = vmatprep.subr.mxu0 0.0
    %833 = vmatpush2.msra.mxu0 0.0
    %834 = vmatprep.subr.mxu0 0.0
    %835 = vmatpush2.msra.mxu0 0.0
    %836 = vmatprep.subr.mxu0 0.0
    %837 = vmatpush2.msra.mxu0 0.0
    %838 = vmatprep.subr.mxu0 0.0
    %839 = vmatpush2.msra.mxu0 0.0
    %840 = vmatprep.subr.mxu0 0.0
    %841 = vmatpush2.msra.mxu0 0.0
    %842 = vmatprep.mubr.f32.mxu0 0.0
    %843 = vmatmul.mubr.f32.gmra.mxu0 %v773
    %v844 = vpop.f32.mrf.mxu0
    %v845 = vadd.f32 0.0, %v844
    %v846 = vpop.f32.mrf.mxu0
    %v847 = vadd.f32 0.0, %v846
    %848 = vdwg.mxu0
    %849 = vmatprep.subr.mxu0 0.0
    %850 = vmatpush1.msra.mxu0 %v102
    %851 = vmatprep.subr.mxu0 0.0
    %852 = vmatpush1.msra.mxu0 %v99
    %853 = vmatprep.subr.mxu0 0.0
    %854 = vmatpush1.msra.mxu0 %v96
    %855 = vmatprep.subr.mxu0 0.0
    %856 = vmatpush1.msra.mxu0 %v93
    %857 = vmatprep.subr.mxu0 0.0
    %858 = vmatpush1.msra.mxu0 %v90
    %859 = vmatprep.subr.mxu0 0.0
    %860 = vmatpush1.msra.mxu0 %v87
    %861 = vmatprep.subr.mxu0 0.0
    %862 = vmatpush1.msra.mxu0 %v84
    %863 = vmatprep.subr.mxu0 0.0
    %864 = vmatpush1.msra.mxu0 %v81
    %865 = vmatprep.subr.mxu0 0.0
    %866 = vmatpush1.msra.mxu0 %v78
    %867 = vmatprep.subr.mxu0 0.0
    %868 = vmatpush1.msra.mxu0 %v75
    %869 = vmatprep.subr.mxu0 0.0
    %870 = vmatpush1.msra.mxu0 %v72
    %871 = vmatprep.subr.mxu0 0.0
    %872 = vmatpush1.msra.mxu0 %v69
    %873 = vmatprep.subr.mxu0 0.0
    %874 = vmatpush1.msra.mxu0 %v66
    %875 = vmatprep.subr.mxu0 0.0
    %876 = vmatpush1.msra.mxu0 %v63
    %877 = vmatprep.subr.mxu0 0.0
    %878 = vmatpush1.msra.mxu0 %v60
    %879 = vmatprep.subr.mxu0 0.0
    %880 = vmatpush1.msra.mxu0 %v57
    %881 = vmatprep.subr.mxu0 0.0
    %882 = vmatpush2.msra.mxu0 0.0
    %883 = vmatprep.subr.mxu0 0.0
    %884 = vmatpush2.msra.mxu0 0.0
    %885 = vmatprep.subr.mxu0 0.0
    %886 = vmatpush2.msra.mxu0 0.0
    %887 = vmatprep.subr.mxu0 0.0
    %888 = vmatpush2.msra.mxu0 0.0
    %889 = vmatprep.subr.mxu0 0.0
    %890 = vmatpush2.msra.mxu0 0.0
    %891 = vmatprep.subr.mxu0 0.0
    %892 = vmatpush2.msra.mxu0 0.0
    %893 = vmatprep.subr.mxu0 0.0
    %894 = vmatpush2.msra.mxu0 0.0
    %895 = vmatprep.subr.mxu0 0.0
    %896 = vmatpush2.msra.mxu0 0.0
    %897 = vmatprep.subr.mxu0 0.0
    %898 = vmatpush2.msra.mxu0 0.0
    %899 = vmatprep.subr.mxu0 0.0
    %900 = vmatpush2.msra.mxu0 0.0
    %901 = vmatprep.subr.mxu0 0.0
    %902 = vmatpush2.msra.mxu0 0.0
    %903 = vmatprep.subr.mxu0 0.0
    %904 = vmatpush2.msra.mxu0 0.0
    %905 = vmatprep.subr.mxu0 0.0
    %906 = vmatpush2.msra.mxu0 0.0
    %907 = vmatprep.subr.mxu0 0.0
    %908 = vmatpush2.msra.mxu0 0.0
    %909 = vmatprep.subr.mxu0 0.0
    %910 = vmatpush2.msra.mxu0 0.0
    %911 = vmatprep.subr.mxu0 0.0
    %912 = vmatpush2.msra.mxu0 0.0
    %913 = vmatprep.mubr.f32.mxu0 0.0
    %914 = vmatmul.mubr.f32.gmra.mxu0 %v773
    %v915 = vpop.f32.mrf.mxu0
    %v916 = vadd.f32 0.0, %v915
    %v917 = vpop.f32.mrf.mxu0
    %918 = vdwg.mxu0
    %v919 = vadd.f32 %v775, %v845
    %v920 = vxor.u32 %v919, 2147483648
    %v921 = vmul.f32 %v920, 1.442695
    %v922 = vpow.pop %v921
    %v923 = vadd.f32 %v922, 1.0
    %v924 = vrcp.pop %v923
    %v925 = vmul.f32 1.0, %v924
    %v926 = vadd.f32 %v776, %v847
    %v927 = vxor.u32 %v926, 2147483648
    %v928 = vmul.f32 %v927, 1.442695
    %v929 = vpow.pop %v928
    %v930 = vadd.f32 %v929, 1.0
    %v931 = vrcp.pop %v930
    %v932 = vmul.f32 1.0, %v931
    %v933 = vadd.f32 %v916, %v108
    %v934 = vmul.f32 %v925, %v933
    %v935 = vadd.f32 %v777, %v934
    %v936 = vtanh.pop %v935
    %v937 = vsub.f32 %v773, %v936
    %v938 = vmul.f32 %v932, %v937
    %v939 = vadd.f32 %v936, %v938
    %s940 = scalar_lea.vmem [#allocation2], 120
    %v941 = vld [vmem:[%s940] sm:$0xff]
    %v942 = vld [vmem:[%s940 + $0x8] sm:$0xff]
    %v943 = vld [vmem:[%s940 + $0x10] sm:$0xff]
    %944 = vmatprep.subr.mxu0 %v101
    %945 = vmatpush1.msra.mxu0 %v100
    %946 = vmatprep.subr.mxu0 %v98
    %947 = vmatpush1.msra.mxu0 %v97
    %948 = vmatprep.subr.mxu0 %v95
    %949 = vmatpush1.msra.mxu0 %v94
    %950 = vmatprep.subr.mxu0 %v92
    %951 = vmatpush1.msra.mxu0 %v91
    %952 = vmatprep.subr.mxu0 %v89
    %953 = vmatpush1.msra.mxu0 %v88
    %954 = vmatprep.subr.mxu0 %v86
    %955 = vmatpush1.msra.mxu0 %v85
    %956 = vmatprep.subr.mxu0 %v83
    %957 = vmatpush1.msra.mxu0 %v82
    %958 = vmatprep.subr.mxu0 %v80
    %959 = vmatpush1.msra.mxu0 %v79
    %960 = vmatprep.subr.mxu0 %v77
    %961 = vmatpush1.msra.mxu0 %v76
    %962 = vmatprep.subr.mxu0 %v74
    %963 = vmatpush1.msra.mxu0 %v73
    %964 = vmatprep.subr.mxu0 %v71
    %965 = vmatpush1.msra.mxu0 %v70
    %966 = vmatprep.subr.mxu0 %v68
    %967 = vmatpush1.msra.mxu0 %v67
    %968 = vmatprep.subr.mxu0 %v65
    %969 = vmatpush1.msra.mxu0 %v64
    %970 = vmatprep.subr.mxu0 %v62
    %971 = vmatpush1.msra.mxu0 %v61
    %972 = vmatprep.subr.mxu0 %v59
    %973 = vmatpush1.msra.mxu0 %v58
    %974 = vmatprep.subr.mxu0 %v56
    %975 = vmatpush1.msra.mxu0 %v55
    %976 = vmatprep.subr.mxu0 0.0
    %977 = vmatpush2.msra.mxu0 0.0
    %978 = vmatprep.subr.mxu0 0.0
    %979 = vmatpush2.msra.mxu0 0.0
    %980 = vmatprep.subr.mxu0 0.0
    %981 = vmatpush2.msra.mxu0 0.0
    %982 = vmatprep.subr.mxu0 0.0
    %983 = vmatpush2.msra.mxu0 0.0
    %984 = vmatprep.subr.mxu0 0.0
    %985 = vmatpush2.msra.mxu0 0.0
    %986 = vmatprep.subr.mxu0 0.0
    %987 = vmatpush2.msra.mxu0 0.0
    %988 = vmatprep.subr.mxu0 0.0
    %989 = vmatpush2.msra.mxu0 0.0
    %990 = vmatprep.subr.mxu0 0.0
    %991 = vmatpush2.msra.mxu0 0.0
    %992 = vmatprep.subr.mxu0 0.0
    %993 = vmatpush2.msra.mxu0 0.0
    %994 = vmatprep.subr.mxu0 0.0
    %995 = vmatpush2.msra.mxu0 0.0
    %996 = vmatprep.subr.mxu0 0.0
    %997 = vmatpush2.msra.mxu0 0.0
    %998 = vmatprep.subr.mxu0 0.0
    %999 = vmatpush2.msra.mxu0 0.0
    %1000 = vmatprep.subr.mxu0 0.0
    %1001 = vmatpush2.msra.mxu0 0.0
    %1002 = vmatprep.subr.mxu0 0.0
    %1003 = vmatpush2.msra.mxu0 0.0
    %1004 = vmatprep.subr.mxu0 0.0
    %1005 = vmatpush2.msra.mxu0 0.0
    %1006 = vmatprep.subr.mxu0 0.0
    %1007 = vmatpush2.msra.mxu0 0.0
    %1008 = vmatprep.mubr.f32.mxu0 0.0
    %1009 = vmatmul.mubr.f32.gmra.mxu0 %v939
    %v1010 = vpop.f32.mrf.mxu0
    %v1011 = vadd.f32 0.0, %v1010
    %v1012 = vpop.f32.mrf.mxu0
    %v1013 = vadd.f32 0.0, %v1012
    %1014 = vdwg.mxu0
    %1015 = vmatprep.subr.mxu0 0.0
    %1016 = vmatpush1.msra.mxu0 %v102
    %1017 = vmatprep.subr.mxu0 0.0
    %1018 = vmatpush1.msra.mxu0 %v99
    %1019 = vmatprep.subr.mxu0 0.0
    %1020 = vmatpush1.msra.mxu0 %v96
    %1021 = vmatprep.subr.mxu0 0.0
    %1022 = vmatpush1.msra.mxu0 %v93
    %1023 = vmatprep.subr.mxu0 0.0
    %1024 = vmatpush1.msra.mxu0 %v90
    %1025 = vmatprep.subr.mxu0 0.0
    %1026 = vmatpush1.msra.mxu0 %v87
    %1027 = vmatprep.subr.mxu0 0.0
    %1028 = vmatpush1.msra.mxu0 %v84
    %1029 = vmatprep.subr.mxu0 0.0
    %1030 = vmatpush1.msra.mxu0 %v81
    %1031 = vmatprep.subr.mxu0 0.0
    %1032 = vmatpush1.msra.mxu0 %v78
    %1033 = vmatprep.subr.mxu0 0.0
    %1034 = vmatpush1.msra.mxu0 %v75
    %1035 = vmatprep.subr.mxu0 0.0
    %1036 = vmatpush1.msra.mxu0 %v72
    %1037 = vmatprep.subr.mxu0 0.0
    %1038 = vmatpush1.msra.mxu0 %v69
    %1039 = vmatprep.subr.mxu0 0.0
    %1040 = vmatpush1.msra.mxu0 %v66
    %1041 = vmatprep.subr.mxu0 0.0
    %1042 = vmatpush1.msra.mxu0 %v63
    %1043 = vmatprep.subr.mxu0 0.0
    %1044 = vmatpush1.msra.mxu0 %v60
    %1045 = vmatprep.subr.mxu0 0.0
    %1046 = vmatpush1.msra.mxu0 %v57
    %1047 = vmatprep.subr.mxu0 0.0
    %1048 = vmatpush2.msra.mxu0 0.0
    %1049 = vmatprep.subr.mxu0 0.0
    %1050 = vmatpush2.msra.mxu0 0.0
    %1051 = vmatprep.subr.mxu0 0.0
    %1052 = vmatpush2.msra.mxu0 0.0
    %1053 = vmatprep.subr.mxu0 0.0
    %1054 = vmatpush2.msra.mxu0 0.0
    %1055 = vmatprep.subr.mxu0 0.0
    %1056 = vmatpush2.msra.mxu0 0.0
    %1057 = vmatprep.subr.mxu0 0.0
    %1058 = vmatpush2.msra.mxu0 0.0
    %1059 = vmatprep.subr.mxu0 0.0
    %1060 = vmatpush2.msra.mxu0 0.0
    %1061 = vmatprep.subr.mxu0 0.0
    %1062 = vmatpush2.msra.mxu0 0.0
    %1063 = vmatprep.subr.mxu0 0.0
    %1064 = vmatpush2.msra.mxu0 0.0
    %1065 = vmatprep.subr.mxu0 0.0
    %1066 = vmatpush2.msra.mxu0 0.0
    %1067 = vmatprep.subr.mxu0 0.0
    %1068 = vmatpush2.msra.mxu0 0.0
    %1069 = vmatprep.subr.mxu0 0.0
    %1070 = vmatpush2.msra.mxu0 0.0
    %1071 = vmatprep.subr.mxu0 0.0
    %1072 = vmatpush2.msra.mxu0 0.0
    %1073 = vmatprep.subr.mxu0 0.0
    %1074 = vmatpush2.msra.mxu0 0.0
    %1075 = vmatprep.subr.mxu0 0.0
    %1076 = vmatpush2.msra.mxu0 0.0
    %1077 = vmatprep.subr.mxu0 0.0
    %1078 = vmatpush2.msra.mxu0 0.0
    %1079 = vmatprep.mubr.f32.mxu0 0.0
    %1080 = vmatmul.mubr.f32.gmra.mxu0 %v939
    %v1081 = vpop.f32.mrf.mxu0
    %v1082 = vadd.f32 0.0, %v1081
    %v1083 = vpop.f32.mrf.mxu0
    %1084 = vdwg.mxu0
    %v1085 = vadd.f32 %v941, %v1011
    %v1086 = vxor.u32 %v1085, 2147483648
    %v1087 = vmul.f32 %v1086, 1.442695
    %v1088 = vpow.pop %v1087
    %v1089 = vadd.f32 %v1088, 1.0
    %v1090 = vrcp.pop %v1089
    %v1091 = vmul.f32 1.0, %v1090
    %v1092 = vadd.f32 %v942, %v1013
    %v1093 = vxor.u32 %v1092, 2147483648
    %v1094 = vmul.f32 %v1093, 1.442695
    %v1095 = vpow.pop %v1094
    %v1096 = vadd.f32 %v1095, 1.0
    %v1097 = vrcp.pop %v1096
    %v1098 = vmul.f32 1.0, %v1097
    %v1099 = vadd.f32 %v1082, %v108
    %v1100 = vmul.f32 %v1091, %v1099
    %v1101 = vadd.f32 %v943, %v1100
    %v1102 = vtanh.pop %v1101
    %v1103 = vsub.f32 %v939, %v1102
    %v1104 = vmul.f32 %v1098, %v1103
    %v1105 = vadd.f32 %v1102, %v1104
    %s1106 = scalar_lea.vmem [#allocation2], 144
    %v1107 = vld [vmem:[%s1106] sm:$0xff]
    %v1108 = vld [vmem:[%s1106 + $0x8] sm:$0xff]
    %v1109 = vld [vmem:[%s1106 + $0x10] sm:$0xff]
    %1110 = vmatprep.subr.mxu0 %v101
    %1111 = vmatpush1.msra.mxu0 %v100
    %1112 = vmatprep.subr.mxu0 %v98
    %1113 = vmatpush1.msra.mxu0 %v97
    %1114 = vmatprep.subr.mxu0 %v95
    %1115 = vmatpush1.msra.mxu0 %v94
    %1116 = vmatprep.subr.mxu0 %v92
    %1117 = vmatpush1.msra.mxu0 %v91
    %1118 = vmatprep.subr.mxu0 %v89
    %1119 = vmatpush1.msra.mxu0 %v88
    %1120 = vmatprep.subr.mxu0 %v86
    %1121 = vmatpush1.msra.mxu0 %v85
    %1122 = vmatprep.subr.mxu0 %v83
    %1123 = vmatpush1.msra.mxu0 %v82
    %1124 = vmatprep.subr.mxu0 %v80
    %1125 = vmatpush1.msra.mxu0 %v79
    %1126 = vmatprep.subr.mxu0 %v77
    %1127 = vmatpush1.msra.mxu0 %v76
    %1128 = vmatprep.subr.mxu0 %v74
    %1129 = vmatpush1.msra.mxu0 %v73
    %1130 = vmatprep.subr.mxu0 %v71
    %1131 = vmatpush1.msra.mxu0 %v70
    %1132 = vmatprep.subr.mxu0 %v68
    %1133 = vmatpush1.msra.mxu0 %v67
    %1134 = vmatprep.subr.mxu0 %v65
    %1135 = vmatpush1.msra.mxu0 %v64
    %1136 = vmatprep.subr.mxu0 %v62
    %1137 = vmatpush1.msra.mxu0 %v61
    %1138 = vmatprep.subr.mxu0 %v59
    %1139 = vmatpush1.msra.mxu0 %v58
    %1140 = vmatprep.subr.mxu0 %v56
    %1141 = vmatpush1.msra.mxu0 %v55
    %1142 = vmatprep.subr.mxu0 0.0
    %1143 = vmatpush2.msra.mxu0 0.0
    %1144 = vmatprep.subr.mxu0 0.0
    %1145 = vmatpush2.msra.mxu0 0.0
    %1146 = vmatprep.subr.mxu0 0.0
    %1147 = vmatpush2.msra.mxu0 0.0
    %1148 = vmatprep.subr.mxu0 0.0
    %1149 = vmatpush2.msra.mxu0 0.0
    %1150 = vmatprep.subr.mxu0 0.0
    %1151 = vmatpush2.msra.mxu0 0.0
    %1152 = vmatprep.subr.mxu0 0.0
    %1153 = vmatpush2.msra.mxu0 0.0
    %1154 = vmatprep.subr.mxu0 0.0
    %1155 = vmatpush2.msra.mxu0 0.0
    %1156 = vmatprep.subr.mxu0 0.0
    %1157 = vmatpush2.msra.mxu0 0.0
    %1158 = vmatprep.subr.mxu0 0.0
    %1159 = vmatpush2.msra.mxu0 0.0
    %1160 = vmatprep.subr.mxu0 0.0
    %1161 = vmatpush2.msra.mxu0 0.0
    %1162 = vmatprep.subr.mxu0 0.0
    %1163 = vmatpush2.msra.mxu0 0.0
    %1164 = vmatprep.subr.mxu0 0.0
    %1165 = vmatpush2.msra.mxu0 0.0
    %1166 = vmatprep.subr.mxu0 0.0
    %1167 = vmatpush2.msra.mxu0 0.0
    %1168 = vmatprep.subr.mxu0 0.0
    %1169 = vmatpush2.msra.mxu0 0.0
    %1170 = vmatprep.subr.mxu0 0.0
    %1171 = vmatpush2.msra.mxu0 0.0
    %1172 = vmatprep.subr.mxu0 0.0
    %1173 = vmatpush2.msra.mxu0 0.0
    %1174 = vmatprep.mubr.f32.mxu0 0.0
    %1175 = vmatmul.mubr.f32.gmra.mxu0 %v1105
    %v1176 = vpop.f32.mrf.mxu0
    %v1177 = vadd.f32 0.0, %v1176
    %v1178 = vpop.f32.mrf.mxu0
    %v1179 = vadd.f32 0.0, %v1178
    %1180 = vdwg.mxu0
    %1181 = vmatprep.subr.mxu0 0.0
    %1182 = vmatpush1.msra.mxu0 %v102
    %1183 = vmatprep.subr.mxu0 0.0
    %1184 = vmatpush1.msra.mxu0 %v99
    %1185 = vmatprep.subr.mxu0 0.0
    %1186 = vmatpush1.msra.mxu0 %v96
    %1187 = vmatprep.subr.mxu0 0.0
    %1188 = vmatpush1.msra.mxu0 %v93
    %1189 = vmatprep.subr.mxu0 0.0
    %1190 = vmatpush1.msra.mxu0 %v90
    %1191 = vmatprep.subr.mxu0 0.0
    %1192 = vmatpush1.msra.mxu0 %v87
    %1193 = vmatprep.subr.mxu0 0.0
    %1194 = vmatpush1.msra.mxu0 %v84
    %1195 = vmatprep.subr.mxu0 0.0
    %1196 = vmatpush1.msra.mxu0 %v81
    %1197 = vmatprep.subr.mxu0 0.0
    %1198 = vmatpush1.msra.mxu0 %v78
    %1199 = vmatprep.subr.mxu0 0.0
    %1200 = vmatpush1.msra.mxu0 %v75
    %1201 = vmatprep.subr.mxu0 0.0
    %1202 = vmatpush1.msra.mxu0 %v72
    %1203 = vmatprep.subr.mxu0 0.0
    %1204 = vmatpush1.msra.mxu0 %v69
    %1205 = vmatprep.subr.mxu0 0.0
    %1206 = vmatpush1.msra.mxu0 %v66
    %1207 = vmatprep.subr.mxu0 0.0
    %1208 = vmatpush1.msra.mxu0 %v63
    %1209 = vmatprep.subr.mxu0 0.0
    %1210 = vmatpush1.msra.mxu0 %v60
    %1211 = vmatprep.subr.mxu0 0.0
    %1212 = vmatpush1.msra.mxu0 %v57
    %1213 = vmatprep.subr.mxu0 0.0
    %1214 = vmatpush2.msra.mxu0 0.0
    %1215 = vmatprep.subr.mxu0 0.0
    %1216 = vmatpush2.msra.mxu0 0.0
    %1217 = vmatprep.subr.mxu0 0.0
    %1218 = vmatpush2.msra.mxu0 0.0
    %1219 = vmatprep.subr.mxu0 0.0
    %1220 = vmatpush2.msra.mxu0 0.0
    %1221 = vmatprep.subr.mxu0 0.0
    %1222 = vmatpush2.msra.mxu0 0.0
    %1223 = vmatprep.subr.mxu0 0.0
    %1224 = vmatpush2.msra.mxu0 0.0
    %1225 = vmatprep.subr.mxu0 0.0
    %1226 = vmatpush2.msra.mxu0 0.0
    %1227 = vmatprep.subr.mxu0 0.0
    %1228 = vmatpush2.msra.mxu0 0.0
    %1229 = vmatprep.subr.mxu0 0.0
    %1230 = vmatpush2.msra.mxu0 0.0
    %1231 = vmatprep.subr.mxu0 0.0
    %1232 = vmatpush2.msra.mxu0 0.0
    %1233 = vmatprep.subr.mxu0 0.0
    %1234 = vmatpush2.msra.mxu0 0.0
    %1235 = vmatprep.subr.mxu0 0.0
    %1236 = vmatpush2.msra.mxu0 0.0
    %1237 = vmatprep.subr.mxu0 0.0
    %1238 = vmatpush2.msra.mxu0 0.0
    %1239 = vmatprep.subr.mxu0 0.0
    %1240 = vmatpush2.msra.mxu0 0.0
    %1241 = vmatprep.subr.mxu0 0.0
    %1242 = vmatpush2.msra.mxu0 0.0
    %1243 = vmatprep.subr.mxu0 0.0
    %1244 = vmatpush2.msra.mxu0 0.0
    %1245 = vmatprep.mubr.f32.mxu0 0.0
    %1246 = vmatmul.mubr.f32.gmra.mxu0 %v1105
    %v1247 = vpop.f32.mrf.mxu0
    %v1248 = vadd.f32 0.0, %v1247
    %v1249 = vpop.f32.mrf.mxu0
    %1250 = vdwg.mxu0
    %v1251 = vadd.f32 %v1107, %v1177
    %v1252 = vxor.u32 %v1251, 2147483648
    %v1253 = vmul.f32 %v1252, 1.442695
    %v1254 = vpow.pop %v1253
    %v1255 = vadd.f32 %v1254, 1.0
    %v1256 = vrcp.pop %v1255
    %v1257 = vmul.f32 1.0, %v1256
    %v1258 = vadd.f32 %v1108, %v1179
    %v1259 = vxor.u32 %v1258, 2147483648
    %v1260 = vmul.f32 %v1259, 1.442695
    %v1261 = vpow.pop %v1260
    %v1262 = vadd.f32 %v1261, 1.0
    %v1263 = vrcp.pop %v1262
    %v1264 = vmul.f32 1.0, %v1263
    %v1265 = vadd.f32 %v1248, %v108
    %v1266 = vmul.f32 %v1257, %v1265
    %v1267 = vadd.f32 %v1109, %v1266
    %v1268 = vtanh.pop %v1267
    %v1269 = vsub.f32 %v1105, %v1268
    %v1270 = vmul.f32 %v1264, %v1269
    %v1271 = vadd.f32 %v1268, %v1270
    %s1272 = scalar_lea.vmem [#allocation2], 168
    %v1273 = vld [vmem:[%s1272] sm:$0xff]
    %v1274 = vld [vmem:[%s1272 + $0x8] sm:$0xff]
    %v1275 = vld [vmem:[%s1272 + $0x10] sm:$0xff]
    %1276 = vmatprep.subr.mxu0 %v101
    %1277 = vmatpush1.msra.mxu0 %v100
    %1278 = vmatprep.subr.mxu0 %v98
    %1279 = vmatpush1.msra.mxu0 %v97
    %1280 = vmatprep.subr.mxu0 %v95
    %1281 = vmatpush1.msra.mxu0 %v94
    %1282 = vmatprep.subr.mxu0 %v92
    %1283 = vmatpush1.msra.mxu0 %v91
    %1284 = vmatprep.subr.mxu0 %v89
    %1285 = vmatpush1.msra.mxu0 %v88
    %1286 = vmatprep.subr.mxu0 %v86
    %1287 = vmatpush1.msra.mxu0 %v85
    %1288 = vmatprep.subr.mxu0 %v83
    %1289 = vmatpush1.msra.mxu0 %v82
    %1290 = vmatprep.subr.mxu0 %v80
    %1291 = vmatpush1.msra.mxu0 %v79
    %1292 = vmatprep.subr.mxu0 %v77
    %1293 = vmatpush1.msra.mxu0 %v76
    %1294 = vmatprep.subr.mxu0 %v74
    %1295 = vmatpush1.msra.mxu0 %v73
    %1296 = vmatprep.subr.mxu0 %v71
    %1297 = vmatpush1.msra.mxu0 %v70
    %1298 = vmatprep.subr.mxu0 %v68
    %1299 = vmatpush1.msra.mxu0 %v67
    %1300 = vmatprep.subr.mxu0 %v65
    %1301 = vmatpush1.msra.mxu0 %v64
    %1302 = vmatprep.subr.mxu0 %v62
    %1303 = vmatpush1.msra.mxu0 %v61
    %1304 = vmatprep.subr.mxu0 %v59
    %1305 = vmatpush1.msra.mxu0 %v58
    %1306 = vmatprep.subr.mxu0 %v56
    %1307 = vmatpush1.msra.mxu0 %v55
    %1308 = vmatprep.subr.mxu0 0.0
    %1309 = vmatpush2.msra.mxu0 0.0
    %1310 = vmatprep.subr.mxu0 0.0
    %1311 = vmatpush2.msra.mxu0 0.0
    %1312 = vmatprep.subr.mxu0 0.0
    %1313 = vmatpush2.msra.mxu0 0.0
    %1314 = vmatprep.subr.mxu0 0.0
    %1315 = vmatpush2.msra.mxu0 0.0
    %1316 = vmatprep.subr.mxu0 0.0
    %1317 = vmatpush2.msra.mxu0 0.0
    %1318 = vmatprep.subr.mxu0 0.0
    %1319 = vmatpush2.msra.mxu0 0.0
    %1320 = vmatprep.subr.mxu0 0.0
    %1321 = vmatpush2.msra.mxu0 0.0
    %1322 = vmatprep.subr.mxu0 0.0
    %1323 = vmatpush2.msra.mxu0 0.0
    %1324 = vmatprep.subr.mxu0 0.0
    %1325 = vmatpush2.msra.mxu0 0.0
    %1326 = vmatprep.subr.mxu0 0.0
    %1327 = vmatpush2.msra.mxu0 0.0
    %1328 = vmatprep.subr.mxu0 0.0
    %1329 = vmatpush2.msra.mxu0 0.0
    %1330 = vmatprep.subr.mxu0 0.0
    %1331 = vmatpush2.msra.mxu0 0.0
    %1332 = vmatprep.subr.mxu0 0.0
    %1333 = vmatpush2.msra.mxu0 0.0
    %1334 = vmatprep.subr.mxu0 0.0
    %1335 = vmatpush2.msra.mxu0 0.0
    %1336 = vmatprep.subr.mxu0 0.0
    %1337 = vmatpush2.msra.mxu0 0.0
    %1338 = vmatprep.subr.mxu0 0.0
    %1339 = vmatpush2.msra.mxu0 0.0
    %1340 = vmatprep.mubr.f32.mxu0 0.0
    %1341 = vmatmul.mubr.f32.gmra.mxu0 %v1271
    %v1342 = vpop.f32.mrf.mxu0
    %v1343 = vadd.f32 0.0, %v1342
    %v1344 = vpop.f32.mrf.mxu0
    %v1345 = vadd.f32 0.0, %v1344
    %1346 = vdwg.mxu0
    %1347 = vmatprep.subr.mxu0 0.0
    %1348 = vmatpush1.msra.mxu0 %v102
    %1349 = vmatprep.subr.mxu0 0.0
    %1350 = vmatpush1.msra.mxu0 %v99
    %1351 = vmatprep.subr.mxu0 0.0
    %1352 = vmatpush1.msra.mxu0 %v96
    %1353 = vmatprep.subr.mxu0 0.0
    %1354 = vmatpush1.msra.mxu0 %v93
    %1355 = vmatprep.subr.mxu0 0.0
    %1356 = vmatpush1.msra.mxu0 %v90
    %1357 = vmatprep.subr.mxu0 0.0
    %1358 = vmatpush1.msra.mxu0 %v87
    %1359 = vmatprep.subr.mxu0 0.0
    %1360 = vmatpush1.msra.mxu0 %v84
    %1361 = vmatprep.subr.mxu0 0.0
    %1362 = vmatpush1.msra.mxu0 %v81
    %1363 = vmatprep.subr.mxu0 0.0
    %1364 = vmatpush1.msra.mxu0 %v78
    %1365 = vmatprep.subr.mxu0 0.0
    %1366 = vmatpush1.msra.mxu0 %v75
    %1367 = vmatprep.subr.mxu0 0.0
    %1368 = vmatpush1.msra.mxu0 %v72
    %1369 = vmatprep.subr.mxu0 0.0
    %1370 = vmatpush1.msra.mxu0 %v69
    %1371 = vmatprep.subr.mxu0 0.0
    %1372 = vmatpush1.msra.mxu0 %v66
    %1373 = vmatprep.subr.mxu0 0.0
    %1374 = vmatpush1.msra.mxu0 %v63
    %1375 = vmatprep.subr.mxu0 0.0
    %1376 = vmatpush1.msra.mxu0 %v60
    %1377 = vmatprep.subr.mxu0 0.0
    %1378 = vmatpush1.msra.mxu0 %v57
    %1379 = vmatprep.subr.mxu0 0.0
    %1380 = vmatpush2.msra.mxu0 0.0
    %1381 = vmatprep.subr.mxu0 0.0
    %1382 = vmatpush2.msra.mxu0 0.0
    %1383 = vmatprep.subr.mxu0 0.0
    %1384 = vmatpush2.msra.mxu0 0.0
    %1385 = vmatprep.subr.mxu0 0.0
    %1386 = vmatpush2.msra.mxu0 0.0
    %1387 = vmatprep.subr.mxu0 0.0
    %1388 = vmatpush2.msra.mxu0 0.0
    %1389 = vmatprep.subr.mxu0 0.0
    %1390 = vmatpush2.msra.mxu0 0.0
    %1391 = vmatprep.subr.mxu0 0.0
    %1392 = vmatpush2.msra.mxu0 0.0
    %1393 = vmatprep.subr.mxu0 0.0
    %1394 = vmatpush2.msra.mxu0 0.0
    %1395 = vmatprep.subr.mxu0 0.0
    %1396 = vmatpush2.msra.mxu0 0.0
    %1397 = vmatprep.subr.mxu0 0.0
    %1398 = vmatpush2.msra.mxu0 0.0
    %1399 = vmatprep.subr.mxu0 0.0
    %1400 = vmatpush2.msra.mxu0 0.0
    %1401 = vmatprep.subr.mxu0 0.0
    %1402 = vmatpush2.msra.mxu0 0.0
    %1403 = vmatprep.subr.mxu0 0.0
    %1404 = vmatpush2.msra.mxu0 0.0
    %1405 = vmatprep.subr.mxu0 0.0
    %1406 = vmatpush2.msra.mxu0 0.0
    %1407 = vmatprep.subr.mxu0 0.0
    %1408 = vmatpush2.msra.mxu0 0.0
    %1409 = vmatprep.subr.mxu0 0.0
    %1410 = vmatpush2.msra.mxu0 0.0
    %1411 = vmatprep.mubr.f32.mxu0 0.0
    %1412 = vmatmul.mubr.f32.gmra.mxu0 %v1271
    %v1413 = vpop.f32.mrf.mxu0
    %v1414 = vadd.f32 0.0, %v1413
    %v1415 = vpop.f32.mrf.mxu0
    %1416 = vdwg.mxu0
    %v1417 = vadd.f32 %v1273, %v1343
    %v1418 = vxor.u32 %v1417, 2147483648
    %v1419 = vmul.f32 %v1418, 1.442695
    %v1420 = vpow.pop %v1419
    %v1421 = vadd.f32 %v1420, 1.0
    %v1422 = vrcp.pop %v1421
    %v1423 = vmul.f32 1.0, %v1422
    %v1424 = vadd.f32 %v1274, %v1345
    %v1425 = vxor.u32 %v1424, 2147483648
    %v1426 = vmul.f32 %v1425, 1.442695
    %v1427 = vpow.pop %v1426
    %v1428 = vadd.f32 %v1427, 1.0
    %v1429 = vrcp.pop %v1428
    %v1430 = vmul.f32 1.0, %v1429
    %v1431 = vadd.f32 %v1414, %v108
    %v1432 = vmul.f32 %v1423, %v1431
    %v1433 = vadd.f32 %v1275, %v1432
    %v1434 = vtanh.pop %v1433
    %v1435 = vsub.f32 %v1271, %v1434
    %v1436 = vmul.f32 %v1430, %v1435
    %v1437 = vadd.f32 %v1434, %v1436
    %1438 = vst [vmem:[#allocation7] sm:$0xff] %v1437
    // Predicated region
    $region26: #{tpu_custom_call.1} parent=1 // pred_check
      _
    $region27: #{tpu_custom_call.1} parent=1 // pred_check_branch
      %1440 = sbr.rel (0) target = $region29
    $region28: #{tpu_custom_call.1} parent=1 // pred_region
      %s1442 = ssub.s32 128, 128
      %1443 = vsyncadd [#allocation4], %s1442
      %s1445 = sshll.u32 [#allocation7], 4
      %s1446 = int_to_ptr.vmem [resolvable:$true] %s1445
      %1448 = dma.vmem_to_hbm [thread:$0]  %s1446, 128, %s3, [#allocation4]
    $region29: #{tpu_custom_call.1} parent=1 // pred_fallthru
      _
    // Predicated region
    $region30: #{tpu_custom_call.1} parent=1 // pred_check
      _
    $region31: #{tpu_custom_call.1} parent=1 // pred_check_branch
      %1450 = sbr.rel (0) target = $region33
    $region32: #{tpu_custom_call.1} parent=1 // pred_region
      %1451 = dma.done [#allocation4], 128
    $region33: #{tpu_custom_call.1} parent=1 // pred_fallthru
      _
    %1452 = vsyncpa [#allocation3], 1
    %1453 = vsyncpa [#allocation6], 1
    %1454 = vsyncpa [#allocation4], 1

// kernel: tpu_custom_call.1
$region0: #{tpu_custom_call.1}
  #allocation0 [shape = 'u32[]', space=smem, size = 0x4, offset = 0x4, fixed_abs, tag = 'smem constant byte address 0x4 - core index']
  #allocation1 [shape = 'u32[144,128]{1,0:T(1,128)}', space=vmem, size = 0x12000, scoped, tag = 'internal scratch']
  %s0 = inlined_call_operand.hbm [shape: f32[8,8,384], index: 0, kind: input, shape index: {}]
  %s1 = inlined_call_operand.hbm [shape: f32[128,384], index: 1, kind: input, shape index: {}]
  %s2 = inlined_call_operand.vmem [shape: f32[1,128], index: 2, kind: input, shape index: {}]
  %s3 = inlined_call_operand.hbm [shape: f32[8,128], index: 3, kind: output, shape index: {}]
  %s4 = sld [smem:[#allocation0]]
  $region34: #{tpu_custom_call.1} parent=0
    _
  %s6 = ssub.s32 1, %s4
  %s7 = scalar_select 0, %s6, %s4
  $region1: #{tpu_custom_call.1} parent=0
    #allocation2 [shape = 'u8[98304]{0}', space=vmem, size = 0x18000, scoped, tag = 'input window, operand 0, single buffered']
    #allocation3 [shape = 's32[1]{0}', space=sflag, size = 0x4, scoped, tag = 'scoped memory for tpu_custom_call.1']
    #allocation4 [shape = 's32[1]{0}', space=sflag, size = 0x4, scoped, tag = 'scoped memory for tpu_custom_call.1']
    #allocation5 [shape = 'u8[196608]{0}', space=vmem, size = 0x30000, scoped, tag = 'input window, operand 1, single buffered']
    #allocation6 [shape = 's32[1]{0}', space=sflag, size = 0x4, scoped, tag = 'scoped memory for tpu_custom_call.1']
    #allocation7 [shape = 'u8[4096]{0}', space=vmem, size = 0x1000, scoped, tag = 'output window, operand 0, single buffered']
    %8 = vsyncpa [#allocation3], 0
    %9 = vsyncpa [#allocation6], 0
    %10 = vsyncpa [#allocation4], 0
    // Predicated region
    $region2: #{tpu_custom_call.1} parent=1 // pred_check
      _
    $region3: #{tpu_custom_call.1} parent=1 // pred_check_branch
      %12 = sbr.rel (0) target = $region5
    $region4: #{tpu_custom_call.1} parent=1 // pred_region
      %s13 = sadd.s32 0, 0
      %s14 = smul.u32 8, %s13
      %s16 = ssub.s32 3072, 3072
      %17 = vsyncadd [#allocation3], %s16
      %s18 = smul.addr %s14, 3
      %s19 = smul.addr %s18, 128
      %s20 = scalar_lea.hbm %s0, %s19
      %s21 = sshll.u32 [#allocation2], 4
      %s22 = int_to_ptr.vmem [resolvable:$true] %s21
      %27 = dma.hbm_to_vmem [thread:$0]  %s20, 3072, %s22, [#allocation3], 384, 384, 24
    $region5: #{tpu_custom_call.1} parent=1 // pred_fallthru
      _
    // Predicated region
    $region6: #{tpu_custom_call.1} parent=1 // pred_check
      _
    $region7: #{tpu_custom_call.1} parent=1 // pred_check_branch
      %29 = sbr.rel (0) target = $region9
    $region8: #{tpu_custom_call.1} parent=1 // pred_region
      %s31 = ssub.s32 6144, 6144
      %32 = vsyncadd [#allocation6], %s31
      %s33 = sshll.u32 [#allocation5], 4
      %s34 = int_to_ptr.vmem [resolvable:$true] %s33
      %39 = dma.hbm_to_vmem [thread:$0]  %s1, 6144, %s34, [#allocation6], 384, 384, 24
    $region9: #{tpu_custom_call.1} parent=1 // pred_fallthru
      _
    // Predicated region
    $region10: #{tpu_custom_call.1} parent=1 // pred_check
      _
    $region11: #{tpu_custom_call.1} parent=1 // pred_check_branch
      %41 = sbr.rel (0) target = $region13
    $region12: #{tpu_custom_call.1} parent=1 // pred_region
      _
    $region13: #{tpu_custom_call.1} parent=1 // pred_fallthru
      _
    // Predicated region
    $region14: #{tpu_custom_call.1} parent=1 // pred_check
      _
    $region15: #{tpu_custom_call.1} parent=1 // pred_check_branch
      %43 = sbr.rel (0) target = $region17
    $region16: #{tpu_custom_call.1} parent=1 // pred_region
      %44 = dma.done [#allocation3], 3072
    $region17: #{tpu_custom_call.1} parent=1 // pred_fallthru
      _
    // Predicated region
    $region18: #{tpu_custom_call.1} parent=1 // pred_check
      _
    $region19: #{tpu_custom_call.1} parent=1 // pred_check_branch
      %46 = sbr.rel (0) target = $region21
    $region20: #{tpu_custom_call.1} parent=1 // pred_region
      %47 = dma.done [#allocation6], 6144
    $region21: #{tpu_custom_call.1} parent=1 // pred_fallthru
      _
    %s48 = sadd.s32 0, 0
    %s49 = smul.u32 8, %s48
    %p50 = scmp.eq.s32.totalorder 0, 0
    // Predicated region
    $region22: #{tpu_custom_call.1} parent=1 // pred_check
      %p51 = pneg %p50
    $region23: #{tpu_custom_call.1} parent=1 // pred_check_branch
      %53 = sbr.rel (%p51) target = $region25
    $region24: #{tpu_custom_call.1} parent=1 // pred_region
      %54 = vst [vmem:[#allocation7] sm:$0xff] 0.0
    $region25: #{tpu_custom_call.1} parent=1 // pred_fallthru
      _
    %v55 = vld [vmem:[#allocation5] sm:$0xff]
    %v56 = vld [vmem:[#allocation5 + $0x8] sm:$0xff]
    %v57 = vld [vmem:[#allocation5 + $0x10] sm:$0xff]
    %v58 = vld [vmem:[#allocation5 + $0x18] sm:$0xff]
    %v59 = vld [vmem:[#allocation5 + $0x20] sm:$0xff]
    %v60 = vld [vmem:[#allocation5 + $0x28] sm:$0xff]
    %v61 = vld [vmem:[#allocation5 + $0x30] sm:$0xff]
    %v62 = vld [vmem:[#allocation5 + $0x38] sm:$0xff]
    %v63 = vld [vmem:[#allocation5 + $0x40] sm:$0xff]
    %v64 = vld [vmem:[#allocation5 + $0x48] sm:$0xff]
    %v65 = vld [vmem:[#allocation5 + $0x50] sm:$0xff]
    %v66 = vld [vmem:[#allocation5 + $0x58] sm:$0xff]
    %v67 = vld [vmem:[#allocation5 + $0x60] sm:$0xff]
    %v68 = vld [vmem:[#allocation5 + $0x68] sm:$0xff]
    %v69 = vld [vmem:[#allocation5 + $0x70] sm:$0xff]
    %v70 = vld [vmem:[#allocation5 + $0x78] sm:$0xff]
    %v71 = vld [vmem:[#allocation5 + $0x80] sm:$0xff]
    %v72 = vld [vmem:[#allocation5 + $0x88] sm:$0xff]
    %v73 = vld [vmem:[#allocation5 + $0x90] sm:$0xff]
    %v74 = vld [vmem:[#allocation5 + $0x98] sm:$0xff]
    %v75 = vld [vmem:[#allocation5 + $0xa0] sm:$0xff]
    %v76 = vld [vmem:[#allocation5 + $0xa8] sm:$0xff]
    %v77 = vld [vmem:[#allocation5 + $0xb0] sm:$0xff]
    %v78 = vld [vmem:[#allocation5 + $0xb8] sm:$0xff]
    %v79 = vld [vmem:[#allocation5 + $0xc0] sm:$0xff]
    %v80 = vld [vmem:[#allocation5 + $0xc8] sm:$0xff]
    %v81 = vld [vmem:[#allocation5 + $0xd0] sm:$0xff]
    %v82 = vld [vmem:[#allocation5 + $0xd8] sm:$0xff]
    %v83 = vld [vmem:[#allocation5 + $0xe0] sm:$0xff]
    %v84 = vld [vmem:[#allocation5 + $0xe8] sm:$0xff]
    %v85 = vld [vmem:[#allocation5 + $0xf0] sm:$0xff]
    %v86 = vld [vmem:[#allocation5 + $0xf8] sm:$0xff]
    %v87 = vld [vmem:[#allocation5 + $0x100] sm:$0xff]
    %v88 = vld [vmem:[#allocation5 + $0x108] sm:$0xff]
    %v89 = vld [vmem:[#allocation5 + $0x110] sm:$0xff]
    %v90 = vld [vmem:[#allocation5 + $0x118] sm:$0xff]
    %v91 = vld [vmem:[#allocation5 + $0x120] sm:$0xff]
    %v92 = vld [vmem:[#allocation5 + $0x128] sm:$0xff]
    %v93 = vld [vmem:[#allocation5 + $0x130] sm:$0xff]
    %v94 = vld [vmem:[#allocation5 + $0x138] sm:$0xff]
    %v95 = vld [vmem:[#allocation5 + $0x140] sm:$0xff]
    %v96 = vld [vmem:[#allocation5 + $0x148] sm:$0xff]
    %v97 = vld [vmem:[#allocation5 + $0x150] sm:$0xff]
    %v98 = vld [vmem:[#allocation5 + $0x158] sm:$0xff]
    %v99 = vld [vmem:[#allocation5 + $0x160] sm:$0xff]
    %v100 = vld [vmem:[#allocation5 + $0x168] sm:$0xff]
    %v101 = vld [vmem:[#allocation5 + $0x170] sm:$0xff]
    %v102 = vld [vmem:[#allocation5 + $0x178] sm:$0xff]
    %v103 = vld [vmem:[%s2] sm:$0x1]
    %v105 = vlaneseq
    %v106 = vshrl.u32 %v105, 7
    %v107 = vsub.s32 0, %v106
    %v108 = vrot.slane %v103, %v107
    %v110 = vld [vmem:[#allocation7] sm:$0xff]
    %v111 = vld [vmem:[#allocation2] sm:$0xff]
    %v112 = vld [vmem:[#allocation2 + $0x8] sm:$0xff]
    %v113 = vld [vmem:[#allocation2 + $0x10] sm:$0xff]
    %114 = vmatprep.subr.mxu0 %v101
    %115 = vmatpush1.msra.mxu0 %v100
    %116 = vmatprep.subr.mxu0 %v98
    %117 = vmatpush1.msra.mxu0 %v97
    %118 = vmatprep.subr.mxu0 %v95
    %119 = vmatpush1.msra.mxu0 %v94
    %120 = vmatprep.subr.mxu0 %v92
    %121 = vmatpush1.msra.mxu0 %v91
    %122 = vmatprep.subr.mxu0 %v89
    %123 = vmatpush1.msra.mxu0 %v88
    %124 = vmatprep.subr.mxu0 %v86
    %125 = vmatpush1.msra.mxu0 %v85
    %126 = vmatprep.subr.mxu0 %v83
    %127 = vmatpush1.msra.mxu0 %v82
    %128 = vmatprep.subr.mxu0 %v80
    %129 = vmatpush1.msra.mxu0 %v79
    %130 = vmatprep.subr.mxu0 %v77
    %131 = vmatpush1.msra.mxu0 %v76
    %132 = vmatprep.subr.mxu0 %v74
    %133 = vmatpush1.msra.mxu0 %v73
    %134 = vmatprep.subr.mxu0 %v71
    %135 = vmatpush1.msra.mxu0 %v70
    %136 = vmatprep.subr.mxu0 %v68
    %137 = vmatpush1.msra.mxu0 %v67
    %138 = vmatprep.subr.mxu0 %v65
    %139 = vmatpush1.msra.mxu0 %v64
    %140 = vmatprep.subr.mxu0 %v62
    %141 = vmatpush1.msra.mxu0 %v61
    %142 = vmatprep.subr.mxu0 %v59
    %143 = vmatpush1.msra.mxu0 %v58
    %144 = vmatprep.subr.mxu0 %v56
    %145 = vmatpush1.msra.mxu0 %v55
    %146 = vmatprep.subr.mxu0 0.0
    %147 = vmatpush2.msra.mxu0 0.0
    %148 = vmatprep.subr.mxu0 0.0
    %149 = vmatpush2.msra.mxu0 0.0
    %150 = vmatprep.subr.mxu0 0.0
    %151 = vmatpush2.msra.mxu0 0.0
    %152 = vmatprep.subr.mxu0 0.0
    %153 = vmatpush2.msra.mxu0 0.0
    %154 = vmatprep.subr.mxu0 0.0
    %155 = vmatpush2.msra.mxu0 0.0
    %156 = vmatprep.subr.mxu0 0.0
    %157 = vmatpush2.msra.mxu0 0.0
    %158 = vmatprep.subr.mxu0 0.0
    %159 = vmatpush2.msra.mxu0 0.0
    %160 = vmatprep.subr.mxu0 0.0
    %161 = vmatpush2.msra.mxu0 0.0
    %162 = vmatprep.subr.mxu0 0.0
    %163 = vmatpush2.msra.mxu0 0.0
    %164 = vmatprep.subr.mxu0 0.0
    %165 = vmatpush2.msra.mxu0 0.0
    %166 = vmatprep.subr.mxu0 0.0
    %167 = vmatpush2.msra.mxu0 0.0
    %168 = vmatprep.subr.mxu0 0.0
    %169 = vmatpush2.msra.mxu0 0.0
    %170 = vmatprep.subr.mxu0 0.0
    %171 = vmatpush2.msra.mxu0 0.0
    %172 = vmatprep.subr.mxu0 0.0
    %173 = vmatpush2.msra.mxu0 0.0
    %174 = vmatprep.subr.mxu0 0.0
    %175 = vmatpush2.msra.mxu0 0.0
    %176 = vmatprep.subr.mxu0 0.0
    %177 = vmatpush2.msra.mxu0 0.0
    %178 = vmatprep.mubr.f32.mxu0 0.0
    %179 = vmatmul.mubr.f32.gmra.mxu0 %v110
    %v180 = vpop.f32.mrf.mxu0
    %v181 = vadd.f32 0.0, %v180
    %v182 = vpop.f32.mrf.mxu0
    %v183 = vadd.f32 0.0, %v182
    %184 = vdwg.mxu0
    %185 = vmatprep.subr.mxu0 0.0
    %186 = vmatpush1.msra.mxu0 %v102
    %187 = vmatprep.subr.mxu0 0.0
    %188 = vmatpush1.msra.mxu0 %v99
    %189 = vmatprep.subr.mxu0 0.0
    %190 = vmatpush1.msra.mxu0 %v96
    %191 = vmatprep.subr.mxu0 0.0
    %192 = vmatpush1.msra.mxu0 %v93
    %193 = vmatprep.subr.mxu0 0.0
    %194 = vmatpush1.msra.mxu0 %v90
    %195 = vmatprep.subr.mxu0 0.0
    %196 = vmatpush1.msra.mxu0 %v87
    %197 = vmatprep.subr.mxu0 0.0
    %198 = vmatpush1.msra.mxu0 %v84
    %199 = vmatprep.subr.mxu0 0.0
    %200 = vmatpush1.msra.mxu0 %v81
    %201 = vmatprep.subr.mxu0 0.0
    %202 = vmatpush1.msra.mxu0 %v78
    %203 = vmatprep.subr.mxu0 0.0
    %204 = vmatpush1.msra.mxu0 %v75
    %205 = vmatprep.subr.mxu0 0.0
    %206 = vmatpush1.msra.mxu0 %v72
    %207 = vmatprep.subr.mxu0 0.0
    %208 = vmatpush1.msra.mxu0 %v69
    %209 = vmatprep.subr.mxu0 0.0
    %210 = vmatpush1.msra.mxu0 %v66
    %211 = vmatprep.subr.mxu0 0.0
    %212 = vmatpush1.msra.mxu0 %v63
    %213 = vmatprep.subr.mxu0 0.0
    %214 = vmatpush1.msra.mxu0 %v60
    %215 = vmatprep.subr.mxu0 0.0
    %216 = vmatpush1.msra.mxu0 %v57
    %217 = vmatprep.subr.mxu0 0.0
    %218 = vmatpush2.msra.mxu0 0.0
    %219 = vmatprep.subr.mxu0 0.0
    %220 = vmatpush2.msra.mxu0 0.0
    %221 = vmatprep.subr.mxu0 0.0
    %222 = vmatpush2.msra.mxu0 0.0
    %223 = vmatprep.subr.mxu0 0.0
    %224 = vmatpush2.msra.mxu0 0.0
    %225 = vmatprep.subr.mxu0 0.0
    %226 = vmatpush2.msra.mxu0 0.0
    %227 = vmatprep.subr.mxu0 0.0
    %228 = vmatpush2.msra.mxu0 0.0
    %229 = vmatprep.subr.mxu0 0.0
    %230 = vmatpush2.msra.mxu0 0.0
    %231 = vmatprep.subr.mxu0 0.0
    %232 = vmatpush2.msra.mxu0 0.0
    %233 = vmatprep.subr.mxu0 0.0
    %234 = vmatpush2.msra.mxu0 0.0
    %235 = vmatprep.subr.mxu0 0.0
    %236 = vmatpush2.msra.mxu0 0.0
    %237 = vmatprep.subr.mxu0 0.0
    %238 = vmatpush2.msra.mxu0 0.0
    %239 = vmatprep.subr.mxu0 0.0
    %240 = vmatpush2.msra.mxu0 0.0
    %241 = vmatprep.subr.mxu0 0.0
    %242 = vmatpush2.msra.mxu0 0.0
    %243 = vmatprep.subr.mxu0 0.0
    %244 = vmatpush2.msra.mxu0 0.0
    %245 = vmatprep.subr.mxu0 0.0
    %246 = vmatpush2.msra.mxu0 0.0
    %247 = vmatprep.subr.mxu0 0.0
    %248 = vmatpush2.msra.mxu0 0.0
    %249 = vmatprep.mubr.f32.mxu0 0.0
    %250 = vmatmul.mubr.f32.gmra.mxu0 %v110
    %v251 = vpop.f32.mrf.mxu0
    %v252 = vadd.f32 0.0, %v251
    %v253 = vpop.f32.mrf.mxu0
    %254 = vdwg.mxu0
    %v255 = vadd.f32 %v111, %v181
    %v256 = vxor.u32 %v255, 2147483648
    %v257 = vmul.f32 %v256, 1.442695
    %v258 = vpow.pop %v257
    %v259 = vadd.f32 %v258, 1.0
    %v260 = vrcp.pop %v259
    %v261 = vmul.f32 1.0, %v260
    %v262 = vadd.f32 %v112, %v183
    %v263 = vxor.u32 %v262, 2147483648
    %v264 = vmul.f32 %v263, 1.442695
    %v265 = vpow.pop %v264
    %v266 = vadd.f32 %v265, 1.0
    %v267 = vrcp.pop %v266
    %v268 = vmul.f32 1.0, %v267
    %v269 = vadd.f32 %v252, %v108
    %v270 = vmul.f32 %v261, %v269
    %v271 = vadd.f32 %v113, %v270
    %v272 = vtanh.pop %v271
    %v273 = vsub.f32 %v110, %v272
    %v274 = vmul.f32 %v268, %v273
    %v275 = vadd.f32 %v272, %v274
    %s276 = scalar_lea.vmem [#allocation2], 24
    %v277 = vld [vmem:[%s276] sm:$0xff]
    %v278 = vld [vmem:[%s276 + $0x8] sm:$0xff]
    %v279 = vld [vmem:[%s276 + $0x10] sm:$0xff]
    %280 = vmatprep.subr.mxu0 %v101
    %281 = vmatpush1.msra.mxu0 %v100
    %282 = vmatprep.subr.mxu0 %v98
    %283 = vmatpush1.msra.mxu0 %v97
    %284 = vmatprep.subr.mxu0 %v95
    %285 = vmatpush1.msra.mxu0 %v94
    %286 = vmatprep.subr.mxu0 %v92
    %287 = vmatpush1.msra.mxu0 %v91
    %288 = vmatprep.subr.mxu0 %v89
    %289 = vmatpush1.msra.mxu0 %v88
    %290 = vmatprep.subr.mxu0 %v86
    %291 = vmatpush1.msra.mxu0 %v85
    %292 = vmatprep.subr.mxu0 %v83
    %293 = vmatpush1.msra.mxu0 %v82
    %294 = vmatprep.subr.mxu0 %v80
    %295 = vmatpush1.msra.mxu0 %v79
    %296 = vmatprep.subr.mxu0 %v77
    %297 = vmatpush1.msra.mxu0 %v76
    %298 = vmatprep.subr.mxu0 %v74
    %299 = vmatpush1.msra.mxu0 %v73
    %300 = vmatprep.subr.mxu0 %v71
    %301 = vmatpush1.msra.mxu0 %v70
    %302 = vmatprep.subr.mxu0 %v68
    %303 = vmatpush1.msra.mxu0 %v67
    %304 = vmatprep.subr.mxu0 %v65
    %305 = vmatpush1.msra.mxu0 %v64
    %306 = vmatprep.subr.mxu0 %v62
    %307 = vmatpush1.msra.mxu0 %v61
    %308 = vmatprep.subr.mxu0 %v59
    %309 = vmatpush1.msra.mxu0 %v58
    %310 = vmatprep.subr.mxu0 %v56
    %311 = vmatpush1.msra.mxu0 %v55
    %312 = vmatprep.subr.mxu0 0.0
    %313 = vmatpush2.msra.mxu0 0.0
    %314 = vmatprep.subr.mxu0 0.0
    %315 = vmatpush2.msra.mxu0 0.0
    %316 = vmatprep.subr.mxu0 0.0
    %317 = vmatpush2.msra.mxu0 0.0
    %318 = vmatprep.subr.mxu0 0.0
    %319 = vmatpush2.msra.mxu0 0.0
    %320 = vmatprep.subr.mxu0 0.0
    %321 = vmatpush2.msra.mxu0 0.0
    %322 = vmatprep.subr.mxu0 0.0
    %323 = vmatpush2.msra.mxu0 0.0
    %324 = vmatprep.subr.mxu0 0.0
    %325 = vmatpush2.msra.mxu0 0.0
    %326 = vmatprep.subr.mxu0 0.0
    %327 = vmatpush2.msra.mxu0 0.0
    %328 = vmatprep.subr.mxu0 0.0
    %329 = vmatpush2.msra.mxu0 0.0
    %330 = vmatprep.subr.mxu0 0.0
    %331 = vmatpush2.msra.mxu0 0.0
    %332 = vmatprep.subr.mxu0 0.0
    %333 = vmatpush2.msra.mxu0 0.0
    %334 = vmatprep.subr.mxu0 0.0
    %335 = vmatpush2.msra.mxu0 0.0
    %336 = vmatprep.subr.mxu0 0.0
    %337 = vmatpush2.msra.mxu0 0.0
    %338 = vmatprep.subr.mxu0 0.0
    %339 = vmatpush2.msra.mxu0 0.0
    %340 = vmatprep.subr.mxu0 0.0
    %341 = vmatpush2.msra.mxu0 0.0
    %342 = vmatprep.subr.mxu0 0.0
    %343 = vmatpush2.msra.mxu0 0.0
    %344 = vmatprep.mubr.f32.mxu0 0.0
    %345 = vmatmul.mubr.f32.gmra.mxu0 %v275
    %v346 = vpop.f32.mrf.mxu0
    %v347 = vadd.f32 0.0, %v346
    %v348 = vpop.f32.mrf.mxu0
    %v349 = vadd.f32 0.0, %v348
    %350 = vdwg.mxu0
    %351 = vmatprep.subr.mxu0 0.0
    %352 = vmatpush1.msra.mxu0 %v102
    %353 = vmatprep.subr.mxu0 0.0
    %354 = vmatpush1.msra.mxu0 %v99
    %355 = vmatprep.subr.mxu0 0.0
    %356 = vmatpush1.msra.mxu0 %v96
    %357 = vmatprep.subr.mxu0 0.0
    %358 = vmatpush1.msra.mxu0 %v93
    %359 = vmatprep.subr.mxu0 0.0
    %360 = vmatpush1.msra.mxu0 %v90
    %361 = vmatprep.subr.mxu0 0.0
    %362 = vmatpush1.msra.mxu0 %v87
    %363 = vmatprep.subr.mxu0 0.0
    %364 = vmatpush1.msra.mxu0 %v84
    %365 = vmatprep.subr.mxu0 0.0
    %366 = vmatpush1.msra.mxu0 %v81
    %367 = vmatprep.subr.mxu0 0.0
    %368 = vmatpush1.msra.mxu0 %v78
    %369 = vmatprep.subr.mxu0 0.0
    %370 = vmatpush1.msra.mxu0 %v75
    %371 = vmatprep.subr.mxu0 0.0
    %372 = vmatpush1.msra.mxu0 %v72
    %373 = vmatprep.subr.mxu0 0.0
    %374 = vmatpush1.msra.mxu0 %v69
    %375 = vmatprep.subr.mxu0 0.0
    %376 = vmatpush1.msra.mxu0 %v66
    %377 = vmatprep.subr.mxu0 0.0
    %378 = vmatpush1.msra.mxu0 %v63
    %379 = vmatprep.subr.mxu0 0.0
    %380 = vmatpush1.msra.mxu0 %v60
    %381 = vmatprep.subr.mxu0 0.0
    %382 = vmatpush1.msra.mxu0 %v57
    %383 = vmatprep.subr.mxu0 0.0
    %384 = vmatpush2.msra.mxu0 0.0
    %385 = vmatprep.subr.mxu0 0.0
    %386 = vmatpush2.msra.mxu0 0.0
    %387 = vmatprep.subr.mxu0 0.0
    %388 = vmatpush2.msra.mxu0 0.0
    %389 = vmatprep.subr.mxu0 0.0
    %390 = vmatpush2.msra.mxu0 0.0
    %391 = vmatprep.subr.mxu0 0.0
    %392 = vmatpush2.msra.mxu0 0.0
    %393 = vmatprep.subr.mxu0 0.0
    %394 = vmatpush2.msra.mxu0 0.0
    %395 = vmatprep.subr.mxu0 0.0
    %396 = vmatpush2.msra.mxu0 0.0
    %397 = vmatprep.subr.mxu0 0.0
    %398 = vmatpush2.msra.mxu0 0.0
    %399 = vmatprep.subr.mxu0 0.0
    %400 = vmatpush2.msra.mxu0 0.0
    %401 = vmatprep.subr.mxu0 0.0
    %402 = vmatpush2.msra.mxu0 0.0
    %403 = vmatprep.subr.mxu0 0.0
    %404 = vmatpush2.msra.mxu0 0.0
    %405 = vmatprep.subr.mxu0 0.0
    %406 = vmatpush2.msra.mxu0 0.0
    %407 = vmatprep.subr.mxu0 0.0
    %408 = vmatpush2.msra.mxu0 0.0
    %409 = vmatprep.subr.mxu0 0.0
    %410 = vmatpush2.msra.mxu0 0.0
    %411 = vmatprep.subr.mxu0 0.0
    %412 = vmatpush2.msra.mxu0 0.0
    %413 = vmatprep.subr.mxu0 0.0
    %414 = vmatpush2.msra.mxu0 0.0
    %415 = vmatprep.mubr.f32.mxu0 0.0
    %416 = vmatmul.mubr.f32.gmra.mxu0 %v275
    %v417 = vpop.f32.mrf.mxu0
    %v418 = vadd.f32 0.0, %v417
    %v419 = vpop.f32.mrf.mxu0
    %420 = vdwg.mxu0
    %v421 = vadd.f32 %v277, %v347
    %v422 = vxor.u32 %v421, 2147483648
    %v423 = vmul.f32 %v422, 1.442695
    %v424 = vpow.pop %v423
    %v425 = vadd.f32 %v424, 1.0
    %v426 = vrcp.pop %v425
    %v427 = vmul.f32 1.0, %v426
    %v428 = vadd.f32 %v278, %v349
    %v429 = vxor.u32 %v428, 2147483648
    %v430 = vmul.f32 %v429, 1.442695
    %v431 = vpow.pop %v430
    %v432 = vadd.f32 %v431, 1.0
    %v433 = vrcp.pop %v432
    %v434 = vmul.f32 1.0, %v433
    %v435 = vadd.f32 %v418, %v108
    %v436 = vmul.f32 %v427, %v435
    %v437 = vadd.f32 %v279, %v436
    %v438 = vtanh.pop %v437
    %v439 = vsub.f32 %v275, %v438
    %v440 = vmul.f32 %v434, %v439
    %v441 = vadd.f32 %v438, %v440
    %s442 = scalar_lea.vmem [#allocation2], 48
    %v443 = vld [vmem:[%s442] sm:$0xff]
    %v444 = vld [vmem:[%s442 + $0x8] sm:$0xff]
    %v445 = vld [vmem:[%s442 + $0x10] sm:$0xff]
    %446 = vmatprep.subr.mxu0 %v101
    %447 = vmatpush1.msra.mxu0 %v100
    %448 = vmatprep.subr.mxu0 %v98
    %449 = vmatpush1.msra.mxu0 %v97
    %450 = vmatprep.subr.mxu0 %v95
    %451 = vmatpush1.msra.mxu0 %v94
    %452 = vmatprep.subr.mxu0 %v92
    %453 = vmatpush1.msra.mxu0 %v91
    %454 = vmatprep.subr.mxu0 %v89
    %455 = vmatpush1.msra.mxu0 %v88
    %456 = vmatprep.subr.mxu0 %v86
    %457 = vmatpush1.msra.mxu0 %v85
    %458 = vmatprep.subr.mxu0 %v83
    %459 = vmatpush1.msra.mxu0 %v82
    %460 = vmatprep.subr.mxu0 %v80
    %461 = vmatpush1.msra.mxu0 %v79
    %462 = vmatprep.subr.mxu0 %v77
    %463 = vmatpush1.msra.mxu0 %v76
    %464 = vmatprep.subr.mxu0 %v74
    %465 = vmatpush1.msra.mxu0 %v73
    %466 = vmatprep.subr.mxu0 %v71
    %467 = vmatpush1.msra.mxu0 %v70
    %468 = vmatprep.subr.mxu0 %v68
    %469 = vmatpush1.msra.mxu0 %v67
    %470 = vmatprep.subr.mxu0 %v65
    %471 = vmatpush1.msra.mxu0 %v64
    %472 = vmatprep.subr.mxu0 %v62
    %473 = vmatpush1.msra.mxu0 %v61
    %474 = vmatprep.subr.mxu0 %v59
    %475 = vmatpush1.msra.mxu0 %v58
    %476 = vmatprep.subr.mxu0 %v56
    %477 = vmatpush1.msra.mxu0 %v55
    %478 = vmatprep.subr.mxu0 0.0
    %479 = vmatpush2.msra.mxu0 0.0
    %480 = vmatprep.subr.mxu0 0.0
    %481 = vmatpush2.msra.mxu0 0.0
    %482 = vmatprep.subr.mxu0 0.0
    %483 = vmatpush2.msra.mxu0 0.0
    %484 = vmatprep.subr.mxu0 0.0
    %485 = vmatpush2.msra.mxu0 0.0
    %486 = vmatprep.subr.mxu0 0.0
    %487 = vmatpush2.msra.mxu0 0.0
    %488 = vmatprep.subr.mxu0 0.0
    %489 = vmatpush2.msra.mxu0 0.0
    %490 = vmatprep.subr.mxu0 0.0
    %491 = vmatpush2.msra.mxu0 0.0
    %492 = vmatprep.subr.mxu0 0.0
    %493 = vmatpush2.msra.mxu0 0.0
    %494 = vmatprep.subr.mxu0 0.0
    %495 = vmatpush2.msra.mxu0 0.0
    %496 = vmatprep.subr.mxu0 0.0
    %497 = vmatpush2.msra.mxu0 0.0
    %498 = vmatprep.subr.mxu0 0.0
    %499 = vmatpush2.msra.mxu0 0.0
    %500 = vmatprep.subr.mxu0 0.0
    %501 = vmatpush2.msra.mxu0 0.0
    %502 = vmatprep.subr.mxu0 0.0
    %503 = vmatpush2.msra.mxu0 0.0
    %504 = vmatprep.subr.mxu0 0.0
    %505 = vmatpush2.msra.mxu0 0.0
    %506 = vmatprep.subr.mxu0 0.0
    %507 = vmatpush2.msra.mxu0 0.0
    %508 = vmatprep.subr.mxu0 0.0
    %509 = vmatpush2.msra.mxu0 0.0
    %510 = vmatprep.mubr.f32.mxu0 0.0
    %511 = vmatmul.mubr.f32.gmra.mxu0 %v441
    %v512 = vpop.f32.mrf.mxu0
    %v513 = vadd.f32 0.0, %v512
    %v514 = vpop.f32.mrf.mxu0
    %v515 = vadd.f32 0.0, %v514
    %516 = vdwg.mxu0
    %517 = vmatprep.subr.mxu0 0.0
    %518 = vmatpush1.msra.mxu0 %v102
    %519 = vmatprep.subr.mxu0 0.0
    %520 = vmatpush1.msra.mxu0 %v99
    %521 = vmatprep.subr.mxu0 0.0
    %522 = vmatpush1.msra.mxu0 %v96
    %523 = vmatprep.subr.mxu0 0.0
    %524 = vmatpush1.msra.mxu0 %v93
    %525 = vmatprep.subr.mxu0 0.0
    %526 = vmatpush1.msra.mxu0 %v90
    %527 = vmatprep.subr.mxu0 0.0
    %528 = vmatpush1.msra.mxu0 %v87
    %529 = vmatprep.subr.mxu0 0.0
    %530 = vmatpush1.msra.mxu0 %v84
    %531 = vmatprep.subr.mxu0 0.0
    %532 = vmatpush1.msra.mxu0 %v81
    %533 = vmatprep.subr.mxu0 0.0
    %534 = vmatpush1.msra.mxu0 %v78
    %535 = vmatprep.subr.mxu0 0.0
    %536 = vmatpush1.msra.mxu0 %v75
    %537 = vmatprep.subr.mxu0 0.0
    %538 = vmatpush1.msra.mxu0 %v72
    %539 = vmatprep.subr.mxu0 0.0
    %540 = vmatpush1.msra.mxu0 %v69
    %541 = vmatprep.subr.mxu0 0.0
    %542 = vmatpush1.msra.mxu0 %v66
    %543 = vmatprep.subr.mxu0 0.0
    %544 = vmatpush1.msra.mxu0 %v63
    %545 = vmatprep.subr.mxu0 0.0
    %546 = vmatpush1.msra.mxu0 %v60
    %547 = vmatprep.subr.mxu0 0.0
    %548 = vmatpush1.msra.mxu0 %v57
    %549 = vmatprep.subr.mxu0 0.0
    %550 = vmatpush2.msra.mxu0 0.0
    %551 = vmatprep.subr.mxu0 0.0
    %552 = vmatpush2.msra.mxu0 0.0
    %553 = vmatprep.subr.mxu0 0.0
    %554 = vmatpush2.msra.mxu0 0.0
    %555 = vmatprep.subr.mxu0 0.0
    %556 = vmatpush2.msra.mxu0 0.0
    %557 = vmatprep.subr.mxu0 0.0
    %558 = vmatpush2.msra.mxu0 0.0
    %559 = vmatprep.subr.mxu0 0.0
    %560 = vmatpush2.msra.mxu0 0.0
    %561 = vmatprep.subr.mxu0 0.0
    %562 = vmatpush2.msra.mxu0 0.0
    %563 = vmatprep.subr.mxu0 0.0
    %564 = vmatpush2.msra.mxu0 0.0
    %565 = vmatprep.subr.mxu0 0.0
    %566 = vmatpush2.msra.mxu0 0.0
    %567 = vmatprep.subr.mxu0 0.0
    %568 = vmatpush2.msra.mxu0 0.0
    %569 = vmatprep.subr.mxu0 0.0
    %570 = vmatpush2.msra.mxu0 0.0
    %571 = vmatprep.subr.mxu0 0.0
    %572 = vmatpush2.msra.mxu0 0.0
    %573 = vmatprep.subr.mxu0 0.0
    %574 = vmatpush2.msra.mxu0 0.0
    %575 = vmatprep.subr.mxu0 0.0
    %576 = vmatpush2.msra.mxu0 0.0
    %577 = vmatprep.subr.mxu0 0.0
    %578 = vmatpush2.msra.mxu0 0.0
    %579 = vmatprep.subr.mxu0 0.0
    %580 = vmatpush2.msra.mxu0 0.0
    %581 = vmatprep.mubr.f32.mxu0 0.0
    %582 = vmatmul.mubr.f32.gmra.mxu0 %v441
    %v583 = vpop.f32.mrf.mxu0
    %v584 = vadd.f32 0.0, %v583
    %v585 = vpop.f32.mrf.mxu0
    %586 = vdwg.mxu0
    %v587 = vadd.f32 %v443, %v513
    %v588 = vxor.u32 %v587, 2147483648
    %v589 = vmul.f32 %v588, 1.442695
    %v590 = vpow.pop %v589
    %v591 = vadd.f32 %v590, 1.0
    %v592 = vrcp.pop %v591
    %v593 = vmul.f32 1.0, %v592
    %v594 = vadd.f32 %v444, %v515
    %v595 = vxor.u32 %v594, 2147483648
    %v596 = vmul.f32 %v595, 1.442695
    %v597 = vpow.pop %v596
    %v598 = vadd.f32 %v597, 1.0
    %v599 = vrcp.pop %v598
    %v600 = vmul.f32 1.0, %v599
    %v601 = vadd.f32 %v584, %v108
    %v602 = vmul.f32 %v593, %v601
    %v603 = vadd.f32 %v445, %v602
    %v604 = vtanh.pop %v603
    %v605 = vsub.f32 %v441, %v604
    %v606 = vmul.f32 %v600, %v605
    %v607 = vadd.f32 %v604, %v606
    %s608 = scalar_lea.vmem [#allocation2], 72
    %v609 = vld [vmem:[%s608] sm:$0xff]
    %v610 = vld [vmem:[%s608 + $0x8] sm:$0xff]
    %v611 = vld [vmem:[%s608 + $0x10] sm:$0xff]
    %612 = vmatprep.subr.mxu0 %v101
    %613 = vmatpush1.msra.mxu0 %v100
    %614 = vmatprep.subr.mxu0 %v98
    %615 = vmatpush1.msra.mxu0 %v97
    %616 = vmatprep.subr.mxu0 %v95
    %617 = vmatpush1.msra.mxu0 %v94
    %618 = vmatprep.subr.mxu0 %v92
    %619 = vmatpush1.msra.mxu0 %v91
    %620 = vmatprep.subr.mxu0 %v89
    %621 = vmatpush1.msra.mxu0 %v88
    %622 = vmatprep.subr.mxu0 %v86
    %623 = vmatpush1.msra.mxu0 %v85
    %624 = vmatprep.subr.mxu0 %v83
    %625 = vmatpush1.msra.mxu0 %v82
    %626 = vmatprep.subr.mxu0 %v80
    %627 = vmatpush1.msra.mxu0 %v79
    %628 = vmatprep.subr.mxu0 %v77
    %629 = vmatpush1.msra.mxu0 %v76
    %630 = vmatprep.subr.mxu0 %v74
    %631 = vmatpush1.msra.mxu0 %v73
    %632 = vmatprep.subr.mxu0 %v71
    %633 = vmatpush1.msra.mxu0 %v70
    %634 = vmatprep.subr.mxu0 %v68
    %635 = vmatpush1.msra.mxu0 %v67
    %636 = vmatprep.subr.mxu0 %v65
    %637 = vmatpush1.msra.mxu0 %v64
    %638 = vmatprep.subr.mxu0 %v62
    %639 = vmatpush1.msra.mxu0 %v61
    %640 = vmatprep.subr.mxu0 %v59
    %641 = vmatpush1.msra.mxu0 %v58
    %642 = vmatprep.subr.mxu0 %v56
    %643 = vmatpush1.msra.mxu0 %v55
    %644 = vmatprep.subr.mxu0 0.0
    %645 = vmatpush2.msra.mxu0 0.0
    %646 = vmatprep.subr.mxu0 0.0
    %647 = vmatpush2.msra.mxu0 0.0
    %648 = vmatprep.subr.mxu0 0.0
    %649 = vmatpush2.msra.mxu0 0.0
    %650 = vmatprep.subr.mxu0 0.0
    %651 = vmatpush2.msra.mxu0 0.0
    %652 = vmatprep.subr.mxu0 0.0
    %653 = vmatpush2.msra.mxu0 0.0
    %654 = vmatprep.subr.mxu0 0.0
    %655 = vmatpush2.msra.mxu0 0.0
    %656 = vmatprep.subr.mxu0 0.0
    %657 = vmatpush2.msra.mxu0 0.0
    %658 = vmatprep.subr.mxu0 0.0
    %659 = vmatpush2.msra.mxu0 0.0
    %660 = vmatprep.subr.mxu0 0.0
    %661 = vmatpush2.msra.mxu0 0.0
    %662 = vmatprep.subr.mxu0 0.0
    %663 = vmatpush2.msra.mxu0 0.0
    %664 = vmatprep.subr.mxu0 0.0
    %665 = vmatpush2.msra.mxu0 0.0
    %666 = vmatprep.subr.mxu0 0.0
    %667 = vmatpush2.msra.mxu0 0.0
    %668 = vmatprep.subr.mxu0 0.0
    %669 = vmatpush2.msra.mxu0 0.0
    %670 = vmatprep.subr.mxu0 0.0
    %671 = vmatpush2.msra.mxu0 0.0
    %672 = vmatprep.subr.mxu0 0.0
    %673 = vmatpush2.msra.mxu0 0.0
    %674 = vmatprep.subr.mxu0 0.0
    %675 = vmatpush2.msra.mxu0 0.0
    %676 = vmatprep.mubr.f32.mxu0 0.0
    %677 = vmatmul.mubr.f32.gmra.mxu0 %v607
    %v678 = vpop.f32.mrf.mxu0
    %v679 = vadd.f32 0.0, %v678
    %v680 = vpop.f32.mrf.mxu0
    %v681 = vadd.f32 0.0, %v680
    %682 = vdwg.mxu0
    %683 = vmatprep.subr.mxu0 0.0
    %684 = vmatpush1.msra.mxu0 %v102
    %685 = vmatprep.subr.mxu0 0.0
    %686 = vmatpush1.msra.mxu0 %v99
    %687 = vmatprep.subr.mxu0 0.0
    %688 = vmatpush1.msra.mxu0 %v96
    %689 = vmatprep.subr.mxu0 0.0
    %690 = vmatpush1.msra.mxu0 %v93
    %691 = vmatprep.subr.mxu0 0.0
    %692 = vmatpush1.msra.mxu0 %v90
    %693 = vmatprep.subr.mxu0 0.0
    %694 = vmatpush1.msra.mxu0 %v87
    %695 = vmatprep.subr.mxu0 0.0
    %696 = vmatpush1.msra.mxu0 %v84
    %697 = vmatprep.subr.mxu0 0.0
    %698 = vmatpush1.msra.mxu0 %v81
    %699 = vmatprep.subr.mxu0 0.0
    %700 = vmatpush1.msra.mxu0 %v78
    %701 = vmatprep.subr.mxu0 0.0
    %702 = vmatpush1.msra.mxu0 %v75
    %703 = vmatprep.subr.mxu0 0.0
    %704 = vmatpush1.msra.mxu0 %v72
    %705 = vmatprep.subr.mxu0 0.0
    %706 = vmatpush1.msra.mxu0 %v69
    %707 = vmatprep.subr.mxu0 0.0
    %708 = vmatpush1.msra.mxu0 %v66
    %709 = vmatprep.subr.mxu0 0.0
    %710 = vmatpush1.msra.mxu0 %v63
    %711 = vmatprep.subr.mxu0 0.0
    %712 = vmatpush1.msra.mxu0 %v60
    %713 = vmatprep.subr.mxu0 0.0
    %714 = vmatpush1.msra.mxu0 %v57
    %715 = vmatprep.subr.mxu0 0.0
    %716 = vmatpush2.msra.mxu0 0.0
    %717 = vmatprep.subr.mxu0 0.0
    %718 = vmatpush2.msra.mxu0 0.0
    %719 = vmatprep.subr.mxu0 0.0
    %720 = vmatpush2.msra.mxu0 0.0
    %721 = vmatprep.subr.mxu0 0.0
    %722 = vmatpush2.msra.mxu0 0.0
    %723 = vmatprep.subr.mxu0 0.0
    %724 = vmatpush2.msra.mxu0 0.0
    %725 = vmatprep.subr.mxu0 0.0
    %726 = vmatpush2.msra.mxu0 0.0
    %727 = vmatprep.subr.mxu0 0.0
    %728 = vmatpush2.msra.mxu0 0.0
    %729 = vmatprep.subr.mxu0 0.0
    %730 = vmatpush2.msra.mxu0 0.0
    %731 = vmatprep.subr.mxu0 0.0
    %732 = vmatpush2.msra.mxu0 0.0
    %733 = vmatprep.subr.mxu0 0.0
    %734 = vmatpush2.msra.mxu0 0.0
    %735 = vmatprep.subr.mxu0 0.0
    %736 = vmatpush2.msra.mxu0 0.0
    %737 = vmatprep.subr.mxu0 0.0
    %738 = vmatpush2.msra.mxu0 0.0
    %739 = vmatprep.subr.mxu0 0.0
    %740 = vmatpush2.msra.mxu0 0.0
    %741 = vmatprep.subr.mxu0 0.0
    %742 = vmatpush2.msra.mxu0 0.0
    %743 = vmatprep.subr.mxu0 0.0
    %744 = vmatpush2.msra.mxu0 0.0
    %745 = vmatprep.subr.mxu0 0.0
    %746 = vmatpush2.msra.mxu0 0.0
    %747 = vmatprep.mubr.f32.mxu0 0.0
    %748 = vmatmul.mubr.f32.gmra.mxu0 %v607
    %v749 = vpop.f32.mrf.mxu0
    %v750 = vadd.f32 0.0, %v749
    %v751 = vpop.f32.mrf.mxu0
    %752 = vdwg.mxu0
    %v753 = vadd.f32 %v609, %v679
    %v754 = vxor.u32 %v753, 2147483648
    %v755 = vmul.f32 %v754, 1.442695
    %v756 = vpow.pop %v755
    %v757 = vadd.f32 %v756, 1.0
    %v758 = vrcp.pop %v757
    %v759 = vmul.f32 1.0, %v758
    %v760 = vadd.f32 %v610, %v681
    %v761 = vxor.u32 %v760, 2147483648
    %v762 = vmul.f32 %v761, 1.442695
    %v763 = vpow.pop %v762
    %v764 = vadd.f32 %v763, 1.0
    %v765 = vrcp.pop %v764
    %v766 = vmul.f32 1.0, %v765
    %v767 = vadd.f32 %v750, %v108
    %v768 = vmul.f32 %v759, %v767
    %v769 = vadd.f32 %v611, %v768
    %v770 = vtanh.pop %v769
    %v771 = vsub.f32 %v607, %v770
    %v772 = vmul.f32 %v766, %v771
    %v773 = vadd.f32 %v770, %v772
    %s774 = scalar_lea.vmem [#allocation2], 96
    %v775 = vld [vmem:[%s774] sm:$0xff]
    %v776 = vld [vmem:[%s774 + $0x8] sm:$0xff]
    %v777 = vld [vmem:[%s774 + $0x10] sm:$0xff]
    %778 = vmatprep.subr.mxu0 %v101
    %779 = vmatpush1.msra.mxu0 %v100
    %780 = vmatprep.subr.mxu0 %v98
    %781 = vmatpush1.msra.mxu0 %v97
    %782 = vmatprep.subr.mxu0 %v95
    %783 = vmatpush1.msra.mxu0 %v94
    %784 = vmatprep.subr.mxu0 %v92
    %785 = vmatpush1.msra.mxu0 %v91
    %786 = vmatprep.subr.mxu0 %v89
    %787 = vmatpush1.msra.mxu0 %v88
    %788 = vmatprep.subr.mxu0 %v86
    %789 = vmatpush1.msra.mxu0 %v85
    %790 = vmatprep.subr.mxu0 %v83
    %791 = vmatpush1.msra.mxu0 %v82
    %792 = vmatprep.subr.mxu0 %v80
    %793 = vmatpush1.msra.mxu0 %v79
    %794 = vmatprep.subr.mxu0 %v77
    %795 = vmatpush1.msra.mxu0 %v76
    %796 = vmatprep.subr.mxu0 %v74
    %797 = vmatpush1.msra.mxu0 %v73
    %798 = vmatprep.subr.mxu0 %v71
    %799 = vmatpush1.msra.mxu0 %v70
    %800 = vmatprep.subr.mxu0 %v68
    %801 = vmatpush1.msra.mxu0 %v67
    %802 = vmatprep.subr.mxu0 %v65
    %803 = vmatpush1.msra.mxu0 %v64
    %804 = vmatprep.subr.mxu0 %v62
    %805 = vmatpush1.msra.mxu0 %v61
    %806 = vmatprep.subr.mxu0 %v59
    %807 = vmatpush1.msra.mxu0 %v58
    %808 = vmatprep.subr.mxu0 %v56
    %809 = vmatpush1.msra.mxu0 %v55
    %810 = vmatprep.subr.mxu0 0.0
    %811 = vmatpush2.msra.mxu0 0.0
    %812 = vmatprep.subr.mxu0 0.0
    %813 = vmatpush2.msra.mxu0 0.0
    %814 = vmatprep.subr.mxu0 0.0
    %815 = vmatpush2.msra.mxu0 0.0
    %816 = vmatprep.subr.mxu0 0.0
    %817 = vmatpush2.msra.mxu0 0.0
    %818 = vmatprep.subr.mxu0 0.0
    %819 = vmatpush2.msra.mxu0 0.0
    %820 = vmatprep.subr.mxu0 0.0
    %821 = vmatpush2.msra.mxu0 0.0
    %822 = vmatprep.subr.mxu0 0.0
    %823 = vmatpush2.msra.mxu0 0.0
    %824 = vmatprep.subr.mxu0 0.0
    %825 = vmatpush2.msra.mxu0 0.0
    %826 = vmatprep.subr.mxu0 0.0
    %827 = vmatpush2.msra.mxu0 0.0
    %828 = vmatprep.subr.mxu0 0.0
    %829 = vmatpush2.msra.mxu0 0.0
    %830 = vmatprep.subr.mxu0 0.0
    %831 = vmatpush2.msra.mxu0 0.0
    %832 = vmatprep.subr.mxu0 0.0
    %833 = vmatpush2.msra.mxu0 0.0
    %834 = vmatprep.subr.mxu0 0.0
    %835 = vmatpush2.msra.mxu0 0.0
    %836 = vmatprep.subr.mxu0 0.0
    %837 = vmatpush2.msra.mxu0 0.0
    %838 = vmatprep.subr.mxu0 0.0
    %839 = vmatpush2.msra.mxu0 0.0
    %840 = vmatprep.subr.mxu0 0.0
    %841 = vmatpush2.msra.mxu0 0.0
    %842 = vmatprep.mubr.f32.mxu0 0.0
    %843 = vmatmul.mubr.f32.gmra.mxu0 %v773
    %v844 = vpop.f32.mrf.mxu0
    %v845 = vadd.f32 0.0, %v844
    %v846 = vpop.f32.mrf.mxu0
    %v847 = vadd.f32 0.0, %v846
    %848 = vdwg.mxu0
    %849 = vmatprep.subr.mxu0 0.0
    %850 = vmatpush1.msra.mxu0 %v102
    %851 = vmatprep.subr.mxu0 0.0
    %852 = vmatpush1.msra.mxu0 %v99
    %853 = vmatprep.subr.mxu0 0.0
    %854 = vmatpush1.msra.mxu0 %v96
    %855 = vmatprep.subr.mxu0 0.0
    %856 = vmatpush1.msra.mxu0 %v93
    %857 = vmatprep.subr.mxu0 0.0
    %858 = vmatpush1.msra.mxu0 %v90
    %859 = vmatprep.subr.mxu0 0.0
    %860 = vmatpush1.msra.mxu0 %v87
    %861 = vmatprep.subr.mxu0 0.0
    %862 = vmatpush1.msra.mxu0 %v84
    %863 = vmatprep.subr.mxu0 0.0
    %864 = vmatpush1.msra.mxu0 %v81
    %865 = vmatprep.subr.mxu0 0.0
    %866 = vmatpush1.msra.mxu0 %v78
    %867 = vmatprep.subr.mxu0 0.0
    %868 = vmatpush1.msra.mxu0 %v75
    %869 = vmatprep.subr.mxu0 0.0
    %870 = vmatpush1.msra.mxu0 %v72
    %871 = vmatprep.subr.mxu0 0.0
    %872 = vmatpush1.msra.mxu0 %v69
    %873 = vmatprep.subr.mxu0 0.0
    %874 = vmatpush1.msra.mxu0 %v66
    %875 = vmatprep.subr.mxu0 0.0
    %876 = vmatpush1.msra.mxu0 %v63
    %877 = vmatprep.subr.mxu0 0.0
    %878 = vmatpush1.msra.mxu0 %v60
    %879 = vmatprep.subr.mxu0 0.0
    %880 = vmatpush1.msra.mxu0 %v57
    %881 = vmatprep.subr.mxu0 0.0
    %882 = vmatpush2.msra.mxu0 0.0
    %883 = vmatprep.subr.mxu0 0.0
    %884 = vmatpush2.msra.mxu0 0.0
    %885 = vmatprep.subr.mxu0 0.0
    %886 = vmatpush2.msra.mxu0 0.0
    %887 = vmatprep.subr.mxu0 0.0
    %888 = vmatpush2.msra.mxu0 0.0
    %889 = vmatprep.subr.mxu0 0.0
    %890 = vmatpush2.msra.mxu0 0.0
    %891 = vmatprep.subr.mxu0 0.0
    %892 = vmatpush2.msra.mxu0 0.0
    %893 = vmatprep.subr.mxu0 0.0
    %894 = vmatpush2.msra.mxu0 0.0
    %895 = vmatprep.subr.mxu0 0.0
    %896 = vmatpush2.msra.mxu0 0.0
    %897 = vmatprep.subr.mxu0 0.0
    %898 = vmatpush2.msra.mxu0 0.0
    %899 = vmatprep.subr.mxu0 0.0
    %900 = vmatpush2.msra.mxu0 0.0
    %901 = vmatprep.subr.mxu0 0.0
    %902 = vmatpush2.msra.mxu0 0.0
    %903 = vmatprep.subr.mxu0 0.0
    %904 = vmatpush2.msra.mxu0 0.0
    %905 = vmatprep.subr.mxu0 0.0
    %906 = vmatpush2.msra.mxu0 0.0
    %907 = vmatprep.subr.mxu0 0.0
    %908 = vmatpush2.msra.mxu0 0.0
    %909 = vmatprep.subr.mxu0 0.0
    %910 = vmatpush2.msra.mxu0 0.0
    %911 = vmatprep.subr.mxu0 0.0
    %912 = vmatpush2.msra.mxu0 0.0
    %913 = vmatprep.mubr.f32.mxu0 0.0
    %914 = vmatmul.mubr.f32.gmra.mxu0 %v773
    %v915 = vpop.f32.mrf.mxu0
    %v916 = vadd.f32 0.0, %v915
    %v917 = vpop.f32.mrf.mxu0
    %918 = vdwg.mxu0
    %v919 = vadd.f32 %v775, %v845
    %v920 = vxor.u32 %v919, 2147483648
    %v921 = vmul.f32 %v920, 1.442695
    %v922 = vpow.pop %v921
    %v923 = vadd.f32 %v922, 1.0
    %v924 = vrcp.pop %v923
    %v925 = vmul.f32 1.0, %v924
    %v926 = vadd.f32 %v776, %v847
    %v927 = vxor.u32 %v926, 2147483648
    %v928 = vmul.f32 %v927, 1.442695
    %v929 = vpow.pop %v928
    %v930 = vadd.f32 %v929, 1.0
    %v931 = vrcp.pop %v930
    %v932 = vmul.f32 1.0, %v931
    %v933 = vadd.f32 %v916, %v108
    %v934 = vmul.f32 %v925, %v933
    %v935 = vadd.f32 %v777, %v934
    %v936 = vtanh.pop %v935
    %v937 = vsub.f32 %v773, %v936
    %v938 = vmul.f32 %v932, %v937
    %v939 = vadd.f32 %v936, %v938
    %s940 = scalar_lea.vmem [#allocation2], 120
    %v941 = vld [vmem:[%s940] sm:$0xff]
    %v942 = vld [vmem:[%s940 + $0x8] sm:$0xff]
    %v943 = vld [vmem:[%s940 + $0x10] sm:$0xff]
    %944 = vmatprep.subr.mxu0 %v101
    %945 = vmatpush1.msra.mxu0 %v100
    %946 = vmatprep.subr.mxu0 %v98
    %947 = vmatpush1.msra.mxu0 %v97
    %948 = vmatprep.subr.mxu0 %v95
    %949 = vmatpush1.msra.mxu0 %v94
    %950 = vmatprep.subr.mxu0 %v92
    %951 = vmatpush1.msra.mxu0 %v91
    %952 = vmatprep.subr.mxu0 %v89
    %953 = vmatpush1.msra.mxu0 %v88
    %954 = vmatprep.subr.mxu0 %v86
    %955 = vmatpush1.msra.mxu0 %v85
    %956 = vmatprep.subr.mxu0 %v83
    %957 = vmatpush1.msra.mxu0 %v82
    %958 = vmatprep.subr.mxu0 %v80
    %959 = vmatpush1.msra.mxu0 %v79
    %960 = vmatprep.subr.mxu0 %v77
    %961 = vmatpush1.msra.mxu0 %v76
    %962 = vmatprep.subr.mxu0 %v74
    %963 = vmatpush1.msra.mxu0 %v73
    %964 = vmatprep.subr.mxu0 %v71
    %965 = vmatpush1.msra.mxu0 %v70
    %966 = vmatprep.subr.mxu0 %v68
    %967 = vmatpush1.msra.mxu0 %v67
    %968 = vmatprep.subr.mxu0 %v65
    %969 = vmatpush1.msra.mxu0 %v64
    %970 = vmatprep.subr.mxu0 %v62
    %971 = vmatpush1.msra.mxu0 %v61
    %972 = vmatprep.subr.mxu0 %v59
    %973 = vmatpush1.msra.mxu0 %v58
    %974 = vmatprep.subr.mxu0 %v56
    %975 = vmatpush1.msra.mxu0 %v55
    %976 = vmatprep.subr.mxu0 0.0
    %977 = vmatpush2.msra.mxu0 0.0
    %978 = vmatprep.subr.mxu0 0.0
    %979 = vmatpush2.msra.mxu0 0.0
    %980 = vmatprep.subr.mxu0 0.0
    %981 = vmatpush2.msra.mxu0 0.0
    %982 = vmatprep.subr.mxu0 0.0
    %983 = vmatpush2.msra.mxu0 0.0
    %984 = vmatprep.subr.mxu0 0.0
    %985 = vmatpush2.msra.mxu0 0.0
    %986 = vmatprep.subr.mxu0 0.0
    %987 = vmatpush2.msra.mxu0 0.0
    %988 = vmatprep.subr.mxu0 0.0
    %989 = vmatpush2.msra.mxu0 0.0
    %990 = vmatprep.subr.mxu0 0.0
    %991 = vmatpush2.msra.mxu0 0.0
    %992 = vmatprep.subr.mxu0 0.0
    %993 = vmatpush2.msra.mxu0 0.0
    %994 = vmatprep.subr.mxu0 0.0
    %995 = vmatpush2.msra.mxu0 0.0
    %996 = vmatprep.subr.mxu0 0.0
    %997 = vmatpush2.msra.mxu0 0.0
    %998 = vmatprep.subr.mxu0 0.0
    %999 = vmatpush2.msra.mxu0 0.0
    %1000 = vmatprep.subr.mxu0 0.0
    %1001 = vmatpush2.msra.mxu0 0.0
    %1002 = vmatprep.subr.mxu0 0.0
    %1003 = vmatpush2.msra.mxu0 0.0
    %1004 = vmatprep.subr.mxu0 0.0
    %1005 = vmatpush2.msra.mxu0 0.0
    %1006 = vmatprep.subr.mxu0 0.0
    %1007 = vmatpush2.msra.mxu0 0.0
    %1008 = vmatprep.mubr.f32.mxu0 0.0
    %1009 = vmatmul.mubr.f32.gmra.mxu0 %v939
    %v1010 = vpop.f32.mrf.mxu0
    %v1011 = vadd.f32 0.0, %v1010
    %v1012 = vpop.f32.mrf.mxu0
    %v1013 = vadd.f32 0.0, %v1012
    %1014 = vdwg.mxu0
    %1015 = vmatprep.subr.mxu0 0.0
    %1016 = vmatpush1.msra.mxu0 %v102
    %1017 = vmatprep.subr.mxu0 0.0
    %1018 = vmatpush1.msra.mxu0 %v99
    %1019 = vmatprep.subr.mxu0 0.0
    %1020 = vmatpush1.msra.mxu0 %v96
    %1021 = vmatprep.subr.mxu0 0.0
    %1022 = vmatpush1.msra.mxu0 %v93
    %1023 = vmatprep.subr.mxu0 0.0
    %1024 = vmatpush1.msra.mxu0 %v90
    %1025 = vmatprep.subr.mxu0 0.0
    %1026 = vmatpush1.msra.mxu0 %v87
    %1027 = vmatprep.subr.mxu0 0.0
    %1028 = vmatpush1.msra.mxu0 %v84
    %1029 = vmatprep.subr.mxu0 0.0
    %1030 = vmatpush1.msra.mxu0 %v81
    %1031 = vmatprep.subr.mxu0 0.0
    %1032 = vmatpush1.msra.mxu0 %v78
    %1033 = vmatprep.subr.mxu0 0.0
    %1034 = vmatpush1.msra.mxu0 %v75
    %1035 = vmatprep.subr.mxu0 0.0
    %1036 = vmatpush1.msra.mxu0 %v72
    %1037 = vmatprep.subr.mxu0 0.0
    %1038 = vmatpush1.msra.mxu0 %v69
    %1039 = vmatprep.subr.mxu0 0.0
    %1040 = vmatpush1.msra.mxu0 %v66
    %1041 = vmatprep.subr.mxu0 0.0
    %1042 = vmatpush1.msra.mxu0 %v63
    %1043 = vmatprep.subr.mxu0 0.0
    %1044 = vmatpush1.msra.mxu0 %v60
    %1045 = vmatprep.subr.mxu0 0.0
    %1046 = vmatpush1.msra.mxu0 %v57
    %1047 = vmatprep.subr.mxu0 0.0
    %1048 = vmatpush2.msra.mxu0 0.0
    %1049 = vmatprep.subr.mxu0 0.0
    %1050 = vmatpush2.msra.mxu0 0.0
    %1051 = vmatprep.subr.mxu0 0.0
    %1052 = vmatpush2.msra.mxu0 0.0
    %1053 = vmatprep.subr.mxu0 0.0
    %1054 = vmatpush2.msra.mxu0 0.0
    %1055 = vmatprep.subr.mxu0 0.0
    %1056 = vmatpush2.msra.mxu0 0.0
    %1057 = vmatprep.subr.mxu0 0.0
    %1058 = vmatpush2.msra.mxu0 0.0
    %1059 = vmatprep.subr.mxu0 0.0
    %1060 = vmatpush2.msra.mxu0 0.0
    %1061 = vmatprep.subr.mxu0 0.0
    %1062 = vmatpush2.msra.mxu0 0.0
    %1063 = vmatprep.subr.mxu0 0.0
    %1064 = vmatpush2.msra.mxu0 0.0
    %1065 = vmatprep.subr.mxu0 0.0
    %1066 = vmatpush2.msra.mxu0 0.0
    %1067 = vmatprep.subr.mxu0 0.0
    %1068 = vmatpush2.msra.mxu0 0.0
    %1069 = vmatprep.subr.mxu0 0.0
    %1070 = vmatpush2.msra.mxu0 0.0
    %1071 = vmatprep.subr.mxu0 0.0
    %1072 = vmatpush2.msra.mxu0 0.0
    %1073 = vmatprep.subr.mxu0 0.0
    %1074 = vmatpush2.msra.mxu0 0.0
    %1075 = vmatprep.subr.mxu0 0.0
    %1076 = vmatpush2.msra.mxu0 0.0
    %1077 = vmatprep.subr.mxu0 0.0
    %1078 = vmatpush2.msra.mxu0 0.0
    %1079 = vmatprep.mubr.f32.mxu0 0.0
    %1080 = vmatmul.mubr.f32.gmra.mxu0 %v939
    %v1081 = vpop.f32.mrf.mxu0
    %v1082 = vadd.f32 0.0, %v1081
    %v1083 = vpop.f32.mrf.mxu0
    %1084 = vdwg.mxu0
    %v1085 = vadd.f32 %v941, %v1011
    %v1086 = vxor.u32 %v1085, 2147483648
    %v1087 = vmul.f32 %v1086, 1.442695
    %v1088 = vpow.pop %v1087
    %v1089 = vadd.f32 %v1088, 1.0
    %v1090 = vrcp.pop %v1089
    %v1091 = vmul.f32 1.0, %v1090
    %v1092 = vadd.f32 %v942, %v1013
    %v1093 = vxor.u32 %v1092, 2147483648
    %v1094 = vmul.f32 %v1093, 1.442695
    %v1095 = vpow.pop %v1094
    %v1096 = vadd.f32 %v1095, 1.0
    %v1097 = vrcp.pop %v1096
    %v1098 = vmul.f32 1.0, %v1097
    %v1099 = vadd.f32 %v1082, %v108
    %v1100 = vmul.f32 %v1091, %v1099
    %v1101 = vadd.f32 %v943, %v1100
    %v1102 = vtanh.pop %v1101
    %v1103 = vsub.f32 %v939, %v1102
    %v1104 = vmul.f32 %v1098, %v1103
    %v1105 = vadd.f32 %v1102, %v1104
    %s1106 = scalar_lea.vmem [#allocation2], 144
    %v1107 = vld [vmem:[%s1106] sm:$0xff]
    %v1108 = vld [vmem:[%s1106 + $0x8] sm:$0xff]
    %v1109 = vld [vmem:[%s1106 + $0x10] sm:$0xff]
    %1110 = vmatprep.subr.mxu0 %v101
    %1111 = vmatpush1.msra.mxu0 %v100
    %1112 = vmatprep.subr.mxu0 %v98
    %1113 = vmatpush1.msra.mxu0 %v97
    %1114 = vmatprep.subr.mxu0 %v95
    %1115 = vmatpush1.msra.mxu0 %v94
    %1116 = vmatprep.subr.mxu0 %v92
    %1117 = vmatpush1.msra.mxu0 %v91
    %1118 = vmatprep.subr.mxu0 %v89
    %1119 = vmatpush1.msra.mxu0 %v88
    %1120 = vmatprep.subr.mxu0 %v86
    %1121 = vmatpush1.msra.mxu0 %v85
    %1122 = vmatprep.subr.mxu0 %v83
    %1123 = vmatpush1.msra.mxu0 %v82
    %1124 = vmatprep.subr.mxu0 %v80
    %1125 = vmatpush1.msra.mxu0 %v79
    %1126 = vmatprep.subr.mxu0 %v77
    %1127 = vmatpush1.msra.mxu0 %v76
    %1128 = vmatprep.subr.mxu0 %v74
    %1129 = vmatpush1.msra.mxu0 %v73
    %1130 = vmatprep.subr.mxu0 %v71
    %1131 = vmatpush1.msra.mxu0 %v70
    %1132 = vmatprep.subr.mxu0 %v68
    %1133 = vmatpush1.msra.mxu0 %v67
    %1134 = vmatprep.subr.mxu0 %v65
    %1135 = vmatpush1.msra.mxu0 %v64
    %1136 = vmatprep.subr.mxu0 %v62
    %1137 = vmatpush1.msra.mxu0 %v61
    %1138 = vmatprep.subr.mxu0 %v59
    %1139 = vmatpush1.msra.mxu0 %v58
    %1140 = vmatprep.subr.mxu0 %v56
    %1141 = vmatpush1.msra.mxu0 %v55
    %1142 = vmatprep.subr.mxu0 0.0
    %1143 = vmatpush2.msra.mxu0 0.0
    %1144 = vmatprep.subr.mxu0 0.0
    %1145 = vmatpush2.msra.mxu0 0.0
    %1146 = vmatprep.subr.mxu0 0.0
    %1147 = vmatpush2.msra.mxu0 0.0
    %1148 = vmatprep.subr.mxu0 0.0
    %1149 = vmatpush2.msra.mxu0 0.0
    %1150 = vmatprep.subr.mxu0 0.0
    %1151 = vmatpush2.msra.mxu0 0.0
    %1152 = vmatprep.subr.mxu0 0.0
    %1153 = vmatpush2.msra.mxu0 0.0
    %1154 = vmatprep.subr.mxu0 0.0
    %1155 = vmatpush2.msra.mxu0 0.0
    %1156 = vmatprep.subr.mxu0 0.0
    %1157 = vmatpush2.msra.mxu0 0.0
    %1158 = vmatprep.subr.mxu0 0.0
    %1159 = vmatpush2.msra.mxu0 0.0
    %1160 = vmatprep.subr.mxu0 0.0
    %1161 = vmatpush2.msra.mxu0 0.0
    %1162 = vmatprep.subr.mxu0 0.0
    %1163 = vmatpush2.msra.mxu0 0.0
    %1164 = vmatprep.subr.mxu0 0.0
    %1165 = vmatpush2.msra.mxu0 0.0
    %1166 = vmatprep.subr.mxu0 0.0
    %1167 = vmatpush2.msra.mxu0 0.0
    %1168 = vmatprep.subr.mxu0 0.0
    %1169 = vmatpush2.msra.mxu0 0.0
    %1170 = vmatprep.subr.mxu0 0.0
    %1171 = vmatpush2.msra.mxu0 0.0
    %1172 = vmatprep.subr.mxu0 0.0
    %1173 = vmatpush2.msra.mxu0 0.0
    %1174 = vmatprep.mubr.f32.mxu0 0.0
    %1175 = vmatmul.mubr.f32.gmra.mxu0 %v1105
    %v1176 = vpop.f32.mrf.mxu0
    %v1177 = vadd.f32 0.0, %v1176
    %v1178 = vpop.f32.mrf.mxu0
    %v1179 = vadd.f32 0.0, %v1178
    %1180 = vdwg.mxu0
    %1181 = vmatprep.subr.mxu0 0.0
    %1182 = vmatpush1.msra.mxu0 %v102
    %1183 = vmatprep.subr.mxu0 0.0
    %1184 = vmatpush1.msra.mxu0 %v99
    %1185 = vmatprep.subr.mxu0 0.0
    %1186 = vmatpush1.msra.mxu0 %v96
    %1187 = vmatprep.subr.mxu0 0.0
    %1188 = vmatpush1.msra.mxu0 %v93
    %1189 = vmatprep.subr.mxu0 0.0
    %1190 = vmatpush1.msra.mxu0 %v90
    %1191 = vmatprep.subr.mxu0 0.0
    %1192 = vmatpush1.msra.mxu0 %v87
    %1193 = vmatprep.subr.mxu0 0.0
    %1194 = vmatpush1.msra.mxu0 %v84
    %1195 = vmatprep.subr.mxu0 0.0
    %1196 = vmatpush1.msra.mxu0 %v81
    %1197 = vmatprep.subr.mxu0 0.0
    %1198 = vmatpush1.msra.mxu0 %v78
    %1199 = vmatprep.subr.mxu0 0.0
    %1200 = vmatpush1.msra.mxu0 %v75
    %1201 = vmatprep.subr.mxu0 0.0
    %1202 = vmatpush1.msra.mxu0 %v72
    %1203 = vmatprep.subr.mxu0 0.0
    %1204 = vmatpush1.msra.mxu0 %v69
    %1205 = vmatprep.subr.mxu0 0.0
    %1206 = vmatpush1.msra.mxu0 %v66
    %1207 = vmatprep.subr.mxu0 0.0
    %1208 = vmatpush1.msra.mxu0 %v63
    %1209 = vmatprep.subr.mxu0 0.0
    %1210 = vmatpush1.msra.mxu0 %v60
    %1211 = vmatprep.subr.mxu0 0.0
    %1212 = vmatpush1.msra.mxu0 %v57
    %1213 = vmatprep.subr.mxu0 0.0
    %1214 = vmatpush2.msra.mxu0 0.0
    %1215 = vmatprep.subr.mxu0 0.0
    %1216 = vmatpush2.msra.mxu0 0.0
    %1217 = vmatprep.subr.mxu0 0.0
    %1218 = vmatpush2.msra.mxu0 0.0
    %1219 = vmatprep.subr.mxu0 0.0
    %1220 = vmatpush2.msra.mxu0 0.0
    %1221 = vmatprep.subr.mxu0 0.0
    %1222 = vmatpush2.msra.mxu0 0.0
    %1223 = vmatprep.subr.mxu0 0.0
    %1224 = vmatpush2.msra.mxu0 0.0
    %1225 = vmatprep.subr.mxu0 0.0
    %1226 = vmatpush2.msra.mxu0 0.0
    %1227 = vmatprep.subr.mxu0 0.0
    %1228 = vmatpush2.msra.mxu0 0.0
    %1229 = vmatprep.subr.mxu0 0.0
    %1230 = vmatpush2.msra.mxu0 0.0
    %1231 = vmatprep.subr.mxu0 0.0
    %1232 = vmatpush2.msra.mxu0 0.0
    %1233 = vmatprep.subr.mxu0 0.0
    %1234 = vmatpush2.msra.mxu0 0.0
    %1235 = vmatprep.subr.mxu0 0.0
    %1236 = vmatpush2.msra.mxu0 0.0
    %1237 = vmatprep.subr.mxu0 0.0
    %1238 = vmatpush2.msra.mxu0 0.0
    %1239 = vmatprep.subr.mxu0 0.0
    %1240 = vmatpush2.msra.mxu0 0.0
    %1241 = vmatprep.subr.mxu0 0.0
    %1242 = vmatpush2.msra.mxu0 0.0
    %1243 = vmatprep.subr.mxu0 0.0
    %1244 = vmatpush2.msra.mxu0 0.0
    %1245 = vmatprep.mubr.f32.mxu0 0.0
    %1246 = vmatmul.mubr.f32.gmra.mxu0 %v1105
    %v1247 = vpop.f32.mrf.mxu0
    %v1248 = vadd.f32 0.0, %v1247
    %v1249 = vpop.f32.mrf.mxu0
    %1250 = vdwg.mxu0
    %v1251 = vadd.f32 %v1107, %v1177
    %v1252 = vxor.u32 %v1251, 2147483648
    %v1253 = vmul.f32 %v1252, 1.442695
    %v1254 = vpow.pop %v1253
    %v1255 = vadd.f32 %v1254, 1.0
    %v1256 = vrcp.pop %v1255
    %v1257 = vmul.f32 1.0, %v1256
    %v1258 = vadd.f32 %v1108, %v1179
    %v1259 = vxor.u32 %v1258, 2147483648
    %v1260 = vmul.f32 %v1259, 1.442695
    %v1261 = vpow.pop %v1260
    %v1262 = vadd.f32 %v1261, 1.0
    %v1263 = vrcp.pop %v1262
    %v1264 = vmul.f32 1.0, %v1263
    %v1265 = vadd.f32 %v1248, %v108
    %v1266 = vmul.f32 %v1257, %v1265
    %v1267 = vadd.f32 %v1109, %v1266
    %v1268 = vtanh.pop %v1267
    %v1269 = vsub.f32 %v1105, %v1268
    %v1270 = vmul.f32 %v1264, %v1269
    %v1271 = vadd.f32 %v1268, %v1270
    %s1272 = scalar_lea.vmem [#allocation2], 168
    %v1273 = vld [vmem:[%s1272] sm:$0xff]
    %v1274 = vld [vmem:[%s1272 + $0x8] sm:$0xff]
    %v1275 = vld [vmem:[%s1272 + $0x10] sm:$0xff]
    %1276 = vmatprep.subr.mxu0 %v101
    %1277 = vmatpush1.msra.mxu0 %v100
    %1278 = vmatprep.subr.mxu0 %v98
    %1279 = vmatpush1.msra.mxu0 %v97
    %1280 = vmatprep.subr.mxu0 %v95
    %1281 = vmatpush1.msra.mxu0 %v94
    %1282 = vmatprep.subr.mxu0 %v92
    %1283 = vmatpush1.msra.mxu0 %v91
    %1284 = vmatprep.subr.mxu0 %v89
    %1285 = vmatpush1.msra.mxu0 %v88
    %1286 = vmatprep.subr.mxu0 %v86
    %1287 = vmatpush1.msra.mxu0 %v85
    %1288 = vmatprep.subr.mxu0 %v83
    %1289 = vmatpush1.msra.mxu0 %v82
    %1290 = vmatprep.subr.mxu0 %v80
    %1291 = vmatpush1.msra.mxu0 %v79
    %1292 = vmatprep.subr.mxu0 %v77
    %1293 = vmatpush1.msra.mxu0 %v76
    %1294 = vmatprep.subr.mxu0 %v74
    %1295 = vmatpush1.msra.mxu0 %v73
    %1296 = vmatprep.subr.mxu0 %v71
    %1297 = vmatpush1.msra.mxu0 %v70
    %1298 = vmatprep.subr.mxu0 %v68
    %1299 = vmatpush1.msra.mxu0 %v67
    %1300 = vmatprep.subr.mxu0 %v65
    %1301 = vmatpush1.msra.mxu0 %v64
    %1302 = vmatprep.subr.mxu0 %v62
    %1303 = vmatpush1.msra.mxu0 %v61
    %1304 = vmatprep.subr.mxu0 %v59
    %1305 = vmatpush1.msra.mxu0 %v58
    %1306 = vmatprep.subr.mxu0 %v56
    %1307 = vmatpush1.msra.mxu0 %v55
    %1308 = vmatprep.subr.mxu0 0.0
    %1309 = vmatpush2.msra.mxu0 0.0
    %1310 = vmatprep.subr.mxu0 0.0
    %1311 = vmatpush2.msra.mxu0 0.0
    %1312 = vmatprep.subr.mxu0 0.0
    %1313 = vmatpush2.msra.mxu0 0.0
    %1314 = vmatprep.subr.mxu0 0.0
    %1315 = vmatpush2.msra.mxu0 0.0
    %1316 = vmatprep.subr.mxu0 0.0
    %1317 = vmatpush2.msra.mxu0 0.0
    %1318 = vmatprep.subr.mxu0 0.0
    %1319 = vmatpush2.msra.mxu0 0.0
    %1320 = vmatprep.subr.mxu0 0.0
    %1321 = vmatpush2.msra.mxu0 0.0
    %1322 = vmatprep.subr.mxu0 0.0
    %1323 = vmatpush2.msra.mxu0 0.0
    %1324 = vmatprep.subr.mxu0 0.0
    %1325 = vmatpush2.msra.mxu0 0.0
    %1326 = vmatprep.subr.mxu0 0.0
    %1327 = vmatpush2.msra.mxu0 0.0
    %1328 = vmatprep.subr.mxu0 0.0
    %1329 = vmatpush2.msra.mxu0 0.0
    %1330 = vmatprep.subr.mxu0 0.0
    %1331 = vmatpush2.msra.mxu0 0.0
    %1332 = vmatprep.subr.mxu0 0.0
    %1333 = vmatpush2.msra.mxu0 0.0
    %1334 = vmatprep.subr.mxu0 0.0
    %1335 = vmatpush2.msra.mxu0 0.0
    %1336 = vmatprep.subr.mxu0 0.0
    %1337 = vmatpush2.msra.mxu0 0.0
    %1338 = vmatprep.subr.mxu0 0.0
    %1339 = vmatpush2.msra.mxu0 0.0
    %1340 = vmatprep.mubr.f32.mxu0 0.0
    %1341 = vmatmul.mubr.f32.gmra.mxu0 %v1271
    %v1342 = vpop.f32.mrf.mxu0
    %v1343 = vadd.f32 0.0, %v1342
    %v1344 = vpop.f32.mrf.mxu0
    %v1345 = vadd.f32 0.0, %v1344
    %1346 = vdwg.mxu0
    %1347 = vmatprep.subr.mxu0 0.0
    %1348 = vmatpush1.msra.mxu0 %v102
    %1349 = vmatprep.subr.mxu0 0.0
    %1350 = vmatpush1.msra.mxu0 %v99
    %1351 = vmatprep.subr.mxu0 0.0
    %1352 = vmatpush1.msra.mxu0 %v96
    %1353 = vmatprep.subr.mxu0 0.0
    %1354 = vmatpush1.msra.mxu0 %v93
    %1355 = vmatprep.subr.mxu0 0.0
    %1356 = vmatpush1.msra.mxu0 %v90
    %1357 = vmatprep.subr.mxu0 0.0
    %1358 = vmatpush1.msra.mxu0 %v87
    %1359 = vmatprep.subr.mxu0 0.0
    %1360 = vmatpush1.msra.mxu0 %v84
    %1361 = vmatprep.subr.mxu0 0.0
    %1362 = vmatpush1.msra.mxu0 %v81
    %1363 = vmatprep.subr.mxu0 0.0
    %1364 = vmatpush1.msra.mxu0 %v78
    %1365 = vmatprep.subr.mxu0 0.0
    %1366 = vmatpush1.msra.mxu0 %v75
    %1367 = vmatprep.subr.mxu0 0.0
    %1368 = vmatpush1.msra.mxu0 %v72
    %1369 = vmatprep.subr.mxu0 0.0
    %1370 = vmatpush1.msra.mxu0 %v69
    %1371 = vmatprep.subr.mxu0 0.0
    %1372 = vmatpush1.msra.mxu0 %v66
    %1373 = vmatprep.subr.mxu0 0.0
    %1374 = vmatpush1.msra.mxu0 %v63
    %1375 = vmatprep.subr.mxu0 0.0
    %1376 = vmatpush1.msra.mxu0 %v60
    %1377 = vmatprep.subr.mxu0 0.0
    %1378 = vmatpush1.msra.mxu0 %v57
    %1379 = vmatprep.subr.mxu0 0.0
    %1380 = vmatpush2.msra.mxu0 0.0
    %1381 = vmatprep.subr.mxu0 0.0
    %1382 = vmatpush2.msra.mxu0 0.0
    %1383 = vmatprep.subr.mxu0 0.0
    %1384 = vmatpush2.msra.mxu0 0.0
    %1385 = vmatprep.subr.mxu0 0.0
    %1386 = vmatpush2.msra.mxu0 0.0
    %1387 = vmatprep.subr.mxu0 0.0
    %1388 = vmatpush2.msra.mxu0 0.0
    %1389 = vmatprep.subr.mxu0 0.0
    %1390 = vmatpush2.msra.mxu0 0.0
    %1391 = vmatprep.subr.mxu0 0.0
    %1392 = vmatpush2.msra.mxu0 0.0
    %1393 = vmatprep.subr.mxu0 0.0
    %1394 = vmatpush2.msra.mxu0 0.0
    %1395 = vmatprep.subr.mxu0 0.0
    %1396 = vmatpush2.msra.mxu0 0.0
    %1397 = vmatprep.subr.mxu0 0.0
    %1398 = vmatpush2.msra.mxu0 0.0
    %1399 = vmatprep.subr.mxu0 0.0
    %1400 = vmatpush2.msra.mxu0 0.0
    %1401 = vmatprep.subr.mxu0 0.0
    %1402 = vmatpush2.msra.mxu0 0.0
    %1403 = vmatprep.subr.mxu0 0.0
    %1404 = vmatpush2.msra.mxu0 0.0
    %1405 = vmatprep.subr.mxu0 0.0
    %1406 = vmatpush2.msra.mxu0 0.0
    %1407 = vmatprep.subr.mxu0 0.0
    %1408 = vmatpush2.msra.mxu0 0.0
    %1409 = vmatprep.subr.mxu0 0.0
    %1410 = vmatpush2.msra.mxu0 0.0
    %1411 = vmatprep.mubr.f32.mxu0 0.0
    %1412 = vmatmul.mubr.f32.gmra.mxu0 %v1271
    %v1413 = vpop.f32.mrf.mxu0
    %v1414 = vadd.f32 0.0, %v1413
    %v1415 = vpop.f32.mrf.mxu0
    %1416 = vdwg.mxu0
    %v1417 = vadd.f32 %v1273, %v1343
    %v1418 = vxor.u32 %v1417, 2147483648
    %v1419 = vmul.f32 %v1418, 1.442695
    %v1420 = vpow.pop %v1419
    %v1421 = vadd.f32 %v1420, 1.0
    %v1422 = vrcp.pop %v1421
    %v1423 = vmul.f32 1.0, %v1422
    %v1424 = vadd.f32 %v1274, %v1345
    %v1425 = vxor.u32 %v1424, 2147483648
    %v1426 = vmul.f32 %v1425, 1.442695
    %v1427 = vpow.pop %v1426
    %v1428 = vadd.f32 %v1427, 1.0
    %v1429 = vrcp.pop %v1428
    %v1430 = vmul.f32 1.0, %v1429
    %v1431 = vadd.f32 %v1414, %v108
    %v1432 = vmul.f32 %v1423, %v1431
    %v1433 = vadd.f32 %v1275, %v1432
    %v1434 = vtanh.pop %v1433
    %v1435 = vsub.f32 %v1271, %v1434
    %v1436 = vmul.f32 %v1430, %v1435
    %v1437 = vadd.f32 %v1434, %v1436
    %1438 = vst [vmem:[#allocation7] sm:$0xff] %v1437
    // Predicated region
    $region26: #{tpu_custom_call.1} parent=1 // pred_check
      _
    $region27: #{tpu_custom_call.1} parent=1 // pred_check_branch
      %1440 = sbr.rel (0) target = $region29
    $region28: #{tpu_custom_call.1} parent=1 // pred_region
      %s1442 = ssub.s32 128, 128
      %1443 = vsyncadd [#allocation4], %s1442
      %s1445 = sshll.u32 [#allocation7], 4
      %s1446 = int_to_ptr.vmem [resolvable:$true] %s1445
      %1448 = dma.vmem_to_hbm [thread:$0]  %s1446, 128, %s3, [#allocation4]
    $region29: #{tpu_custom_call.1} parent=1 // pred_fallthru
      _
    // Predicated region
    $region30: #{tpu_custom_call.1} parent=1 // pred_check
      _
    $region31: #{tpu_custom_call.1} parent=1 // pred_check_branch
      %1450 = sbr.rel (0) target = $region33
    $region32: #{tpu_custom_call.1} parent=1 // pred_region
      %1451 = dma.done [#allocation4], 128
    $region33: #{tpu_custom_call.1} parent=1 // pred_fallthru
      _
    %1452 = vsyncpa [#allocation3], 1
    %1453 = vsyncpa [#allocation6], 1
    %1454 = vsyncpa [#allocation4], 1

</llo_original>
